<compile_context>
chip_gen: v7x
topology: tpu7x:2x2x1
jax: 0.10.0
libtpu: 0.0.40
codegen_flags: <defaults>
</compile_context>

<pallas_src>
import functools
import math

import numpy as np
import jax
import jax.numpy as jnp
from jax import lax
from jax.experimental import pallas as pl
from jax.experimental.pallas import tpu as pltpu

_EPS = 1e-7          # float32 eps used by the hyperboloid math
_MIN_NORM = 1e-15
_MAX_NORM = 1e6
_EXP_CLAMP = 85.0    # overflow guard for exp() inside cosh/sinh (float32)
_PREC = jax.lax.Precision.HIGHEST


# ----------------------------- shared scalar helpers ---------------------------------------
def _coshsinh(x):
    """cosh(x), sinh(x) from a single clamped exp (one EUP op instead of two, no overflow)."""
    xc = jnp.clip(x, -_EXP_CLAMP, _EXP_CLAMP)
    e = jnp.exp(xc)
    ei = 1.0 / e
    return 0.5 * (e + ei), 0.5 * (e - ei)


def _arcosh(x):
    x = jnp.maximum(x, 1.0 + _EPS)
    return jnp.log(x + jnp.sqrt(x * x - 1.0))


def _sigmoid(x):
    return 0.5 * (jnp.tanh(0.5 * x) + 1.0)   # == logistic, single EUP transcendental


def _sqnorm(x):
    return jnp.sum(x * x, axis=-1, keepdims=True)


# ----------------------- Lorentz (hyperboloid) math — full layout --------------------------
# Used by the pure-JAX reference and the one-time input/bias preprocessing.
def proj(x, c):
    K = 1.0 / c
    y = x[..., 1:]
    x0 = jnp.sqrt(jnp.maximum(K + _sqnorm(y), _EPS))
    return jnp.concatenate([x0, y], axis=-1)


def proj_tan(u, x, c):
    ux = jnp.sum(x[..., 1:] * u[..., 1:], axis=-1, keepdims=True)
    v0 = ux / jnp.maximum(x[..., 0:1], _EPS)
    return jnp.concatenate([v0, u[..., 1:]], axis=-1)


def expmap0(u, c):
    sqrtK = math.sqrt(1.0 / c)
    usp = u[..., 1:]
    r = jnp.maximum(jnp.sqrt(_sqnorm(usp)), _MIN_NORM)
    ch, sh = _coshsinh(r / sqrtK)
    x0 = sqrtK * ch
    xs = sqrtK * sh * usp / r
    return proj(jnp.concatenate([x0, xs], axis=-1), c)


def logmap0(x, c):
    sqrtK = math.sqrt(1.0 / c)
    y = x[..., 1:]
    r = jnp.maximum(jnp.sqrt(_sqnorm(y)), _MIN_NORM)
    theta = jnp.maximum(x[..., 0:1] / sqrtK, 1.0 + _EPS)
    res_sp = sqrtK * _arcosh(theta) * y / r
    return jnp.concatenate([jnp.zeros_like(x[..., 0:1]), res_sp], axis=-1)


def _minkowski_dot(x, y):
    return jnp.sum(x * y, axis=-1, keepdims=True) - 2.0 * x[..., 0:1] * y[..., 0:1]


def expmap(u, x, c):
    sqrtK = math.sqrt(1.0 / c)
    normu = jnp.minimum(jnp.sqrt(jnp.maximum(_minkowski_dot(u, u), _EPS)), _MAX_NORM)
    theta = jnp.maximum(normu / sqrtK, _MIN_NORM)
    ch, sh = _coshsinh(theta)
    return proj(ch * x + sh * u / theta, c)


def ptransp0(x, u, c):
    sqrtK = math.sqrt(1.0 / c)
    x0 = x[..., 0:1]
    y = x[..., 1:]
    y_norm = jnp.maximum(jnp.sqrt(_sqnorm(y)), _MIN_NORM)
    y_unit = y / y_norm
    v = jnp.concatenate([-y_norm, (sqrtK - x0) * y_unit], axis=-1)
    alpha = jnp.sum(y_unit * u[..., 1:], axis=-1, keepdims=True) / sqrtK
    res = u - alpha * v
    return proj_tan(res, x, c)


def mobius_matvec(m, x, c):
    u = logmap0(x, c)
    mu = jax.lax.dot_general(u, m, (((u.ndim - 1,), (1,)), ((), ())),
                             preferred_element_type=jnp.float32, precision=_PREC)
    return expmap0(mu, c)


def mobius_add(x, y, c):
    u = logmap0(y, c)
    v = ptransp0(x, u, c)
    return expmap(v, x, c)


# --------------------- Lorentz math — split (time, spatial) layout -------------------------
# Used inside the Pallas kernel and by the hoisted precompute.  No lane-axis slices/concats.
def proj_s(xsp, c):
    K = 1.0 / c
    return jnp.sqrt(jnp.maximum(K + _sqnorm(xsp), _EPS)), xsp


def expmap0_s(usp, c):
    # expmap0 restricted to zero-time-coordinate tangents; the reference's cosh-computed time
    # coordinate is discarded by the trailing proj(), so it is not computed here.
    sqrtK = math.sqrt(1.0 / c)
    r = jnp.maximum(jnp.sqrt(_sqnorm(usp)), _MIN_NORM)
    _, sh = _coshsinh(r / sqrtK)
    return proj_s(sqrtK * sh * usp / r, c)


def logmap0_s(x0, xsp, c):
    # spatial part only — the time coordinate of logmap0 is identically zero.
    sqrtK = math.sqrt(1.0 / c)
    r = jnp.maximum(jnp.sqrt(_sqnorm(xsp)), _MIN_NORM)
    theta = jnp.maximum(x0 / sqrtK, 1.0 + _EPS)
    return sqrtK * _arcosh(theta) * xsp / r


def ptransp0_s(x0, xsp, usp, c):
    # The tangent's time coordinate is irrelevant (proj_tan overwrites it) — not taken / computed.
    sqrtK = math.sqrt(1.0 / c)
    ynorm = jnp.maximum(jnp.sqrt(_sqnorm(xsp)), _MIN_NORM)
    yunit = xsp / ynorm
    alpha = jnp.sum(yunit * usp, axis=-1, keepdims=True) / sqrtK
    ressp = usp - alpha * (sqrtK - x0) * yunit
    w0 = jnp.sum(xsp * ressp, axis=-1, keepdims=True) / jnp.maximum(x0, _EPS)
    return w0, ressp


def expmap_s(u0, usp, x0, xsp, c):
    sqrtK = math.sqrt(1.0 / c)
    mdot = jnp.maximum(_sqnorm(usp) - u0 * u0, _EPS)          # Minkowski <u, u>
    normu = jnp.minimum(jnp.sqrt(mdot), _MAX_NORM)
    theta = jnp.maximum(normu / sqrtK, _MIN_NORM)
    ch, sh = _coshsinh(theta)
    ressp = ch * xsp + (sh / theta) * usp                     # time coord discarded by proj()
    return proj_s(ressp, c)


def mobius_add_s(x, y, c):
    x0, xsp = x
    y0, ysp = y
    usp = logmap0_s(y0, ysp, c)
    w0, wsp = ptransp0_s(x0, xsp, usp, c)
    return expmap_s(w0, wsp, x0, xsp, c)


# ------------------- hoisted input transform (batched over all timesteps) ------------------
def precompute_input_transform(x_hyp, weight_ih, num_block, c):
    """mobius_add_chunk(U_g, x_t) for all 3 gates and all T_eff timesteps at once.

    x_hyp: (T_eff, D_in) hyperbolic input; weight_ih: (3H, D_in).
    Returns the per-gate points as ((T_eff, 3, 1), (T_eff, 3, H-1))."""
    T_eff, D_in = x_hyp.shape
    blk_in = D_in // num_block
    H = weight_ih.shape[0] // 3
    Hm1 = H - 1
    W = weight_ih.reshape(3, H, num_block, blk_in)
    acc = None
    for b in range(num_block):
        xb = x_hyp[:, b * blk_in:(b + 1) * blk_in]
        ub = logmap0_s(xb[:, :1], xb[:, 1:], c)                         # (T_eff, blk_in-1)
        Wb = W[:, 1:, b, 1:].reshape(3 * Hm1, blk_in - 1)               # dead time row/col dropped
        mu = jnp.dot(ub, Wb.T, preferred_element_type=jnp.float32, precision=_PREC)
        mv = expmap0_s(mu.reshape(T_eff, 3, Hm1), c)                    # per-gate point
        acc = mv if acc is None else mobius_add_s(acc, mv, c)
    return acc


# ------------------------------- GRU cell (split layout) -----------------------------------
def _gru_cell_split(hx0, hxsp, ux0, uxsp, w_zr, w_h, b0, bsp, c):
    """One Mobius GRU step.  hx = (hx0 (B,1), hxsp (B,Hm1)); ux/b per-gate (3,1)/(3,Hm1),
    gate order along the leading axis: 0=r, 1=h, 2=z (torch chunk order)."""
    Hm1 = hxsp.shape[-1]
    log_hsp = logmap0_s(hx0, hxsp, c)                                   # CSE: z, r and rh paths

    # fused z/r hidden-state matvec: logmap0(hx) @ [W_hz^T | W_hr^T]
    mu_zr = jnp.dot(log_hsp, w_zr, preferred_element_type=jnp.float32, precision=_PREC)
    mu_z, mu_r = mu_zr[:, :Hm1], mu_zr[:, Hm1:]

    def gate(mu_sp, g):        # one_rnn_transform with the x-dependent term precomputed
        p = expmap0_s(mu_sp, c)                                         # W ⊗ h
        p = mobius_add_s(p, (ux0[g:g + 1], uxsp[g:g + 1]), c)           # ⊕ (U ⊗ x)  [precomputed]
        return mobius_add_s(p, (b0[g:g + 1], bsp[g:g + 1]), c)          # ⊕ b

    z_sp = _sigmoid(logmap0_s(*gate(mu_z, 2), c=c))
    r_sp = _sigmoid(logmap0_s(*gate(mu_r, 0), c=c))

    # h_tilde path: logmap0(expmap0(v)) == v on the tangent space, so the round trip is skipped.
    mu_h = jnp.dot(r_sp * log_hsp, w_h, preferred_element_type=jnp.float32, precision=_PREC)
    h_til = gate(mu_h, 1)

    delta = mobius_add_s(proj_s(-hxsp, c), h_til, c)                    # mobius_add(proj(-hx), h~)
    logd = logmap0_s(*delta, c=c)
    hi0, hisp = ptransp0_s(hx0, hxsp, z_sp * logd, c)
    return expmap_s(hi0, hisp, hx0, hxsp, c)


# ----------------------------------- Pallas kernel -----------------------------------------
def _mobius_gru_kernel(ux0_ref, uxsp_ref, wzr_ref, wh_ref, b0_ref, bsp_ref,
                       h00_ref, h0sp_ref, out0_ref, outsp_ref, hx0_ref, hxsp_ref,
                       *, chunk, c):
    @pl.when(pl.program_id(0) == 0)
    def _():
        hx0_ref[...] = h00_ref[...]
        hxsp_ref[...] = h0sp_ref[...]

    w_zr = wzr_ref[...]         # (Hm1, 2*Hm1)   [W_hz | W_hr], time row/col dropped host-side
    w_h = wh_ref[...]           # (Hm1, Hm1)
    b0 = b0_ref[...]            # (3, 1)
    bsp = bsp_ref[...]          # (3, Hm1)

    def step(j, carry):
        hx0, hxsp = carry
        h_out0, h_outsp = _gru_cell_split(hx0, hxsp, ux0_ref[j], uxsp_ref[j],
                                          w_zr, w_h, b0, bsp, c)
        out0_ref[j] = h_out0                     # stores hit the VMEM output block only;
        outsp_ref[j] = h_outsp                   # HBM writeback happens once per chunk
        return h_out0, h_outsp

    hx0, hxsp = lax.fori_loop(0, chunk, step, (hx0_ref[...], hxsp_ref[...]))
    hx0_ref[...] = hx0
    hxsp_ref[...] = hxsp


def _largest_divisor_leq(n, cap):
    best = 1
    for d in range(1, min(n, cap) + 1):
        if n % d == 0:
            best = d
    return best


def mobius_gru_recurrence_pallas(ux0, uxsp, w_zr, w_h, b0, bsp, h00, h0sp, c):
    T_eff = ux0.shape[0]
    B = h00.shape[0]
    Hm1 = h0sp.shape[-1]
    # Chunk the sequential grid: amortize the ~0.35us per-grid-step overhead over CHUNK cell
    # steps.  256 steps keep the double-buffered (CHUNK,3,Hm1)/(CHUNK,B,Hm1) tiles in the
    # 100 KiB range — far below even v7x's 64 MiB VMEM.
    chunk = _largest_divisor_leq(T_eff, 256)
    n_chunks = T_eff // chunk
    kernel = functools.partial(_mobius_gru_kernel, chunk=chunk, c=float(c))
    out0, outsp = pl.pallas_call(
        kernel,
        out_shape=(jax.ShapeDtypeStruct((T_eff, B, 1), jnp.float32),
                   jax.ShapeDtypeStruct((T_eff, B, Hm1), jnp.float32)),
        grid_spec=pltpu.PrefetchScalarGridSpec(
            num_scalar_prefetch=0,
            grid=(n_chunks,),
            in_specs=[
                pl.BlockSpec((chunk, 3, 1), lambda i: (i, 0, 0)),     # (U⊗x) time coords
                pl.BlockSpec((chunk, 3, Hm1), lambda i: (i, 0, 0)),   # (U⊗x) spatial parts
                pl.BlockSpec(w_zr.shape, lambda i: (0, 0)),           # [W_hz | W_hr]
                pl.BlockSpec(w_h.shape, lambda i: (0, 0)),            # W_hh
                pl.BlockSpec(b0.shape, lambda i: (0, 0)),             # bias time coords
                pl.BlockSpec(bsp.shape, lambda i: (0, 0)),            # bias spatial parts
                pl.BlockSpec(h00.shape, lambda i: (0, 0)),            # h0 time coord
                pl.BlockSpec(h0sp.shape, lambda i: (0, 0)),           # h0 spatial part
            ],
            out_specs=[
                pl.BlockSpec((chunk, B, 1), lambda i: (i, 0, 0)),
                pl.BlockSpec((chunk, B, Hm1), lambda i: (i, 0, 0)),
            ],
            scratch_shapes=[pltpu.VMEM((B, 1), jnp.float32),          # carried hidden state
                            pltpu.VMEM((B, Hm1), jnp.float32)],
        ),
        compiler_params=pltpu.CompilerParams(dimension_semantics=("arbitrary",)),
    )(ux0, uxsp, w_zr, w_h, b0, bsp, h00, h0sp)
    return out0, outsp


# ------------------------- MobiusGRU_c.forward (default config) ----------------------------
def mobius_gru_c_forward(x, k, weight_ih, weight_hh, bias, num_block):
    """Defaults of MobiusGRU_c: num_layers=1, bias=True, nonlin=None, hyperbolic_input=False,
    hyperbolic_hidden_state0=True, hyperbolic_output=False, not packed, h0=None."""
    c = float(k)
    T, B, D = x.shape
    H = weight_hh.shape[-1]                          # hidden_size + 1

    bias_h = expmap0(bias, c)                        # bias -> expmap0, (3, H)
    h0 = jnp.zeros((B, H), jnp.float32)              # h0=zeros used directly (hyperbolic h0)

    # Faithful hyperbolic preprocessing (incl. the (1, -1, ...) reshape of the reference code).
    blk_raw = D // num_block
    xi = x.reshape(1, -1, num_block, blk_raw)
    xi = jnp.concatenate([jnp.zeros_like(xi[..., :1]), xi], axis=-1)
    xi = expmap0(xi, c)
    x_hyp = xi.reshape(-1, num_block * (blk_raw + 1))                  # (T_eff = T*B, D_in)

    # (1) hoist the x-dependent gate transform out of the serial recurrence (batched over T_eff).
    ux0, uxsp = precompute_input_transform(x_hyp, weight_ih, num_block, c)

    # (6) host-side weight/bias/h0 splits; drop the dead Lorentz time row/column of weight_hh.
    w_zr = jnp.concatenate([weight_hh[2 * H + 1:3 * H, 1:].T,          # W_hz
                            weight_hh[1:H, 1:].T], axis=1)             # W_hr
    w_h = weight_hh[H + 1:2 * H, 1:].T
    b0, bsp = bias_h[:, :1], bias_h[:, 1:]
    h00, h0sp = h0[:, :1], h0[:, 1:]

    out0, outsp = mobius_gru_recurrence_pallas(ux0, uxsp, w_zr, w_h, b0, bsp, h00, h0sp, c)

    outs = jnp.concatenate([out0, outsp], axis=-1)                     # (T_eff, B, H)
    h_last = logmap0_s(out0[-1], outsp[-1], c)                         # == logmap0(.)[..., 1:]
    return outs, h_last[None]                                          # stack over num_layers=1


# ------------------------------- Pure-JAX reference -----------------------------------------
def mobius_add_chunk(U, x, num_block, c):
    blk = U.shape[-1] // num_block
    out = None
    for b in range(num_block):
        Ub = U[:, b * blk:(b + 1) * blk]
        xb = x[..., b * blk:(b + 1) * blk]
        mv = mobius_matvec(Ub, xb, c)
        out = mv if out is None else mobius_add(out, mv, c)
    return out


def one_rnn_transform(W, h, U, x, nb, b, c):
    W_otimes_h = mobius_matvec(W, h, c)
    U_otimes_x = mobius_add_chunk(U, x, nb, c)
    Wh_plus_Ux = mobius_add(W_otimes_h, U_otimes_x, c)
    return mobius_add(Wh_plus_Ux, b, c)


def mobius_gru_cell_ref(x_t, hx, weight_ih, weight_hh, bias_h, num_block, c):
    H = weight_hh.shape[-1]
    W_ir, W_ih_, W_iz = weight_ih[0:H], weight_ih[H:2 * H], weight_ih[2 * H:3 * H]
    b_r, b_h, b_z = bias_h[0:1], bias_h[1:2], bias_h[2:3]
    W_hr, W_hh_, W_hz = weight_hh[0:H], weight_hh[H:2 * H], weight_hh[2 * H:3 * H]
    z_t = _sigmoid(logmap0(one_rnn_transform(W_hz, hx, W_iz, x_t, num_block, b_z, c), c))
    r_t = _sigmoid(logmap0(one_rnn_transform(W_hr, hx, W_ir, x_t, num_block, b_r, c), c))
    rh_t = expmap0(r_t * logmap0(hx, c), c)
    h_tilde = one_rnn_transform(W_hh_, rh_t, W_ih_, x_t, num_block, b_h, c)
    # nonlin is None in the default configuration
    delta_h = mobius_add(proj(-hx, c), h_tilde, c)
    h_int = ptransp0(hx, z_t * logmap0(delta_h, c), c)
    return expmap(h_int, hx, c)


def mobius_gru_c_forward_ref(x, k, weight_ih, weight_hh, bias, num_block):
    c = float(k)
    T, B, D = x.shape
    H = weight_hh.shape[-1]
    hx = jnp.zeros((B, H), jnp.float32)
    bias_h = expmap0(bias, c)
    blk_raw = D // num_block
    xi = x.reshape(1, -1, num_block, blk_raw)
    xi = jnp.concatenate([jnp.zeros_like(xi[..., :1]), xi], axis=-1)
    xi = expmap0(xi, c)
    xi = xi.reshape(1, -1, num_block * (blk_raw + 1))
    outs = []
    for t in range(xi.shape[1]):
        hx = mobius_gru_cell_ref(xi[:, t], hx, weight_ih, weight_hh, bias_h, num_block, c)
        outs.append(hx)
    outs = jnp.stack(outs)
    h_last = logmap0(hx, c)[..., 1:]
    return outs, h_last[None]


if __name__ == "__main__":
    T, B = 8, 2
    input_size, hidden_size, num_block = 16, 32, 2
    Hp1 = hidden_size + 1                  # module hidden_size + 1 (Lorentz time coordinate)
    Din = input_size + num_block           # module input_size + num_block
    k = 1.0

    key = jax.random.PRNGKey(0)
    k1, k2, k3, kx = jax.random.split(key, 4)
    stdv = 1.0 / math.sqrt(Hp1)
    weight_ih = jax.random.uniform(k1, (3 * Hp1, Din), jnp.float32, -stdv, stdv)
    weight_hh = jax.random.uniform(k2, (3 * Hp1, Hp1), jnp.float32, -stdv, stdv)
    bias = jnp.concatenate(
        [jnp.zeros((3, 1), jnp.float32),
         1e-5 * jax.random.normal(k3, (3, hidden_size), jnp.float32)], axis=-1)
    x = jax.random.normal(kx, (T, B, input_size), jnp.float32)

    fwd = jax.jit(lambda xx: mobius_gru_c_forward(xx, k, weight_ih, weight_hh, bias, num_block))
    out, ht = fwd(x)
    out = jax.block_until_ready(out)
    ht = jax.block_until_ready(ht)

    assert out.shape == (T * B, B, Hp1), out.shape
    assert ht.shape == (1, B, hidden_size), ht.shape
    assert bool(jnp.isfinite(out).all()) and bool(jnp.isfinite(ht).all())

    ref_fn = jax.jit(lambda xx: mobius_gru_c_forward_ref(xx, k, weight_ih, weight_hh, bias, num_block))
    out_ref, ht_ref = ref_fn(x)
    np.testing.assert_allclose(np.asarray(out), np.asarray(out_ref), rtol=2e-2, atol=2e-2)
    np.testing.assert_allclose(np.asarray(ht), np.asarray(ht_ref), rtol=2e-2, atol=2e-2)

    print("KERNEL_OK")
</pallas_src>

<mosaic_0001>
module attributes {stable_mosaic.version = 11 : i64} {
  func.func @_mobius_gru_kernel(%arg0: i32, %arg1: memref<16x3x1xf32, #tpu.memory_space<vmem>>, %arg2: memref<16x3x32xf32, #tpu.memory_space<vmem>>, %arg3: memref<32x64xf32, #tpu.memory_space<vmem>>, %arg4: memref<32x32xf32, #tpu.memory_space<vmem>>, %arg5: memref<3x1xf32, #tpu.memory_space<vmem>>, %arg6: memref<3x32xf32, #tpu.memory_space<vmem>>, %arg7: memref<2x1xf32, #tpu.memory_space<vmem>>, %arg8: memref<2x32xf32, #tpu.memory_space<vmem>>, %arg9: memref<16x2x1xf32, #tpu.memory_space<vmem>>, %arg10: memref<16x2x32xf32, #tpu.memory_space<vmem>>, %arg11: memref<2x1xf32, #tpu.memory_space<vmem>>, %arg12: memref<2x32xf32, #tpu.memory_space<vmem>>) attributes {dimension_semantics = [#tpu.dimension_semantics<arbitrary>], iteration_bounds = array<i64: 1>, scalar_prefetch = 0 : i64, scratch_operands = 2 : i64, tpu.core_type = #tpu.core_type<tc>, window_params = [{transform_indices = @transform_0, window_bounds = array<i64: 16, 3, 1>}, {transform_indices = @transform_1, window_bounds = array<i64: 16, 3, 32>}, {pipeline_mode = #tpu.pipeline_mode<synchronous>, transform_indices = @transform_2, window_bounds = array<i64: 32, 64>}, {pipeline_mode = #tpu.pipeline_mode<synchronous>, transform_indices = @transform_3, window_bounds = array<i64: 32, 32>}, {pipeline_mode = #tpu.pipeline_mode<synchronous>, transform_indices = @transform_4, window_bounds = array<i64: 3, 1>}, {pipeline_mode = #tpu.pipeline_mode<synchronous>, transform_indices = @transform_5, window_bounds = array<i64: 3, 32>}, {pipeline_mode = #tpu.pipeline_mode<synchronous>, transform_indices = @transform_6, window_bounds = array<i64: 2, 1>}, {pipeline_mode = #tpu.pipeline_mode<synchronous>, transform_indices = @transform_7, window_bounds = array<i64: 2, 32>}, {transform_indices = @transform_8, window_bounds = array<i64: 16, 2, 1>}, {transform_indices = @transform_9, window_bounds = array<i64: 16, 2, 32>}]} {
    %c0_i32 = arith.constant 0 : i32
    %0 = arith.cmpi eq, %arg0, %c0_i32 : i32
    %1 = arith.extui %0 : i1 to i32
    %c0_i32_0 = arith.constant 0 : i32
    %2 = arith.cmpi ne, %1, %c0_i32_0 : i32
    scf.if %2 {
      %c0_18 = arith.constant 0 : index
      %c0_19 = arith.constant 0 : index
      %13 = vector.load %arg7[%c0_18, %c0_19] : memref<2x1xf32, #tpu.memory_space<vmem>>, vector<2x1xf32>
      %c0_20 = arith.constant 0 : index
      %c0_21 = arith.constant 0 : index
      %14 = vector.load %arg11[%c0_20, %c0_21] : memref<2x1xf32, #tpu.memory_space<vmem>>, vector<2x1xf32>
      tpu.vector_store %arg11[%c0_20, %c0_21], %13 {strides = array<i32>} : memref<2x1xf32, #tpu.memory_space<vmem>>, vector<2x1xf32>,
      %c0_22 = arith.constant 0 : index
      %c0_23 = arith.constant 0 : index
      %15 = vector.load %arg8[%c0_22, %c0_23] : memref<2x32xf32, #tpu.memory_space<vmem>>, vector<2x32xf32>
      %c0_24 = arith.constant 0 : index
      %c0_25 = arith.constant 0 : index
      %16 = vector.load %arg12[%c0_24, %c0_25] : memref<2x32xf32, #tpu.memory_space<vmem>>, vector<2x32xf32>
      tpu.vector_store %arg12[%c0_24, %c0_25], %15 {strides = array<i32>} : memref<2x32xf32, #tpu.memory_space<vmem>>, vector<2x32xf32>,
    } else {
    }
    %c0 = arith.constant 0 : index
    %c0_1 = arith.constant 0 : index
    %3 = vector.load %arg3[%c0, %c0_1] : memref<32x64xf32, #tpu.memory_space<vmem>>, vector<32x64xf32>
    %c0_2 = arith.constant 0 : index
    %c0_3 = arith.constant 0 : index
    %4 = vector.load %arg4[%c0_2, %c0_3] : memref<32x32xf32, #tpu.memory_space<vmem>>, vector<32x32xf32>
    %c0_4 = arith.constant 0 : index
    %c0_5 = arith.constant 0 : index
    %5 = vector.load %arg5[%c0_4, %c0_5] : memref<3x1xf32, #tpu.memory_space<vmem>>, vector<3x1xf32>
    %c0_6 = arith.constant 0 : index
    %c0_7 = arith.constant 0 : index
    %6 = vector.load %arg6[%c0_6, %c0_7] : memref<3x32xf32, #tpu.memory_space<vmem>>, vector<3x32xf32>
    %c0_8 = arith.constant 0 : index
    %c0_9 = arith.constant 0 : index
    %7 = vector.load %arg11[%c0_8, %c0_9] : memref<2x1xf32, #tpu.memory_space<vmem>>, vector<2x1xf32>
    %c0_10 = arith.constant 0 : index
    %c0_11 = arith.constant 0 : index
    %8 = vector.load %arg12[%c0_10, %c0_11] : memref<2x32xf32, #tpu.memory_space<vmem>>, vector<2x32xf32>
    %c0_i32_12 = arith.constant 0 : i32
    %c16_i32 = arith.constant 16 : i32
    %9 = arith.addi %c0_i32_12, %c16_i32 : i32
    %c1_i32 = arith.constant 1 : i32
    %10:2 = scf.for %arg13 = %c0_i32_12 to %9 step %c1_i32 iter_args(%arg14 = %7, %arg15 = %8) -> (vector<2x1xf32>, vector<2x32xf32>)  : i32 {
      %13 = arith.index_cast %arg13 : i32 to index
      %c0_18 = arith.constant 0 : index
      %c0_19 = arith.constant 0 : index
      %14 = vector.load %arg1[%13, %c0_18, %c0_19] : memref<16x3x1xf32, #tpu.memory_space<vmem>>, vector<1x3x1xf32>
      %15 = vector.shape_cast %14 : vector<1x3x1xf32> to vector<3x1xf32>
      %16 = arith.index_cast %arg13 : i32 to index
      %c0_20 = arith.constant 0 : index
      %c0_21 = arith.constant 0 : index
      %17 = vector.load %arg2[%16, %c0_20, %c0_21] : memref<16x3x32xf32, #tpu.memory_space<vmem>>, vector<1x3x32xf32>
      %18 = vector.shape_cast %17 : vector<1x3x32xf32> to vector<3x32xf32>
      %19 = arith.mulf %arg15, %arg15 : vector<2x32xf32>
      %cst = arith.constant dense<0.000000e+00> : vector<2xf32>
      %20 = vector.multi_reduction <add>, %19, %cst [1] : vector<2x32xf32> to vector<2xf32>
      %21 = vector.shape_cast %20 : vector<2xf32> to vector<2x1xf32>
      %22 = math.sqrt %21 : vector<2x1xf32>
      %cst_22 = arith.constant 1.000000e-15 : f32
      %23 = vector.broadcast %cst_22 : f32 to vector<2x1xf32>
      %24 = arith.maximumf %22, %23 : vector<2x1xf32>
      %cst_23 = arith.constant 1.000000e+00 : f32
      %25 = vector.broadcast %cst_23 : f32 to vector<2x1xf32>
      %26 = arith.divf %arg14, %25 : vector<2x1xf32>
      %cst_24 = arith.constant 1.00000012 : f32
      %27 = vector.broadcast %cst_24 : f32 to vector<2x1xf32>
      %28 = arith.maximumf %26, %27 : vector<2x1xf32>
      %cst_25 = arith.constant 1.00000012 : f32
      %29 = vector.broadcast %cst_25 : f32 to vector<2x1xf32>
      %30 = arith.maximumf %28, %29 : vector<2x1xf32>
      %31 = arith.mulf %30, %30 : vector<2x1xf32>
      %cst_26 = arith.constant 1.000000e+00 : f32
      %32 = vector.broadcast %cst_26 : f32 to vector<2x1xf32>
      %33 = arith.subf %31, %32 : vector<2x1xf32>
      %34 = math.sqrt %33 : vector<2x1xf32>
      %35 = arith.addf %30, %34 : vector<2x1xf32>
      %36 = math.log %35 : vector<2x1xf32>
      %cst_27 = arith.constant 1.000000e+00 : f32
      %37 = vector.broadcast %cst_27 : f32 to vector<2x1xf32>
      %38 = arith.mulf %37, %36 : vector<2x1xf32>
      %39 = vector.broadcast %38 : vector<2x1xf32> to vector<2x32xf32>
      %40 = arith.mulf %39, %arg15 : vector<2x32xf32>
      %41 = vector.broadcast %24 : vector<2x1xf32> to vector<2x32xf32>
      %42 = arith.divf %40, %41 : vector<2x32xf32>
      %cst_28 = arith.constant dense<0.000000e+00> : vector<2x64xf32>
      %43 = tpu.matmul %42, %3, %cst_28 {dimension_numbers = #tpu.dot_dimension_numbers<[1], [0], [0], [1], [0, 0, 1, 1], [], []>, precision = #tpu.contract_precision<fp32>} : vector<2x32xf32>, vector<32x64xf32>, vector<2x64xf32> -> vector<2x64xf32>
      %44 = vector.extract_strided_slice %43 {offsets = [0, 0], sizes = [2, 32], strides = [1, 1]} : vector<2x64xf32> to vector<2x32xf32>
      %45 = vector.extract_strided_slice %43 {offsets = [0, 32], sizes = [2, 32], strides = [1, 1]} : vector<2x64xf32> to vector<2x32xf32>
      %46 = arith.mulf %44, %44 : vector<2x32xf32>
      %cst_29 = arith.constant dense<0.000000e+00> : vector<2xf32>
      %47 = vector.multi_reduction <add>, %46, %cst_29 [1] : vector<2x32xf32> to vector<2xf32>
      %48 = vector.shape_cast %47 : vector<2xf32> to vector<2x1xf32>
      %49 = math.sqrt %48 : vector<2x1xf32>
      %cst_30 = arith.constant 1.000000e-15 : f32
      %50 = vector.broadcast %cst_30 : f32 to vector<2x1xf32>
      %51 = arith.maximumf %49, %50 : vector<2x1xf32>
      %cst_31 = arith.constant 1.000000e+00 : f32
      %52 = vector.broadcast %cst_31 : f32 to vector<2x1xf32>
      %53 = arith.divf %51, %52 : vector<2x1xf32>
      %cst_32 = arith.constant -8.500000e+01 : f32
      %cst_33 = arith.constant 8.500000e+01 : f32
      %54 = vector.broadcast %cst_32 : f32 to vector<2x1xf32>
      %55 = arith.maximumf %54, %53 : vector<2x1xf32>
      %56 = vector.broadcast %cst_33 : f32 to vector<2x1xf32>
      %57 = arith.minimumf %56, %55 : vector<2x1xf32>
      %58 = math.exp %57 : vector<2x1xf32>
      %cst_34 = arith.constant 1.000000e+00 : f32
      %59 = vector.broadcast %cst_34 : f32 to vector<2x1xf32>
      %60 = arith.divf %59, %58 : vector<2x1xf32>
      %61 = arith.subf %58, %60 : vector<2x1xf32>
      %cst_35 = arith.constant 5.000000e-01 : f32
      %62 = vector.broadcast %cst_35 : f32 to vector<2x1xf32>
      %63 = arith.mulf %62, %61 : vector<2x1xf32>
      %cst_36 = arith.constant 1.000000e+00 : f32
      %64 = vector.broadcast %cst_36 : f32 to vector<2x1xf32>
      %65 = arith.mulf %64, %63 : vector<2x1xf32>
      %66 = vector.broadcast %65 : vector<2x1xf32> to vector<2x32xf32>
      %67 = arith.mulf %66, %44 : vector<2x32xf32>
      %68 = vector.broadcast %51 : vector<2x1xf32> to vector<2x32xf32>
      %69 = arith.divf %67, %68 : vector<2x32xf32>
      %70 = arith.mulf %69, %69 : vector<2x32xf32>
      %cst_37 = arith.constant dense<0.000000e+00> : vector<2xf32>
      %71 = vector.multi_reduction <add>, %70, %cst_37 [1] : vector<2x32xf32> to vector<2xf32>
      %72 = vector.shape_cast %71 : vector<2xf32> to vector<2x1xf32>
      %cst_38 = arith.constant 1.000000e+00 : f32
      %73 = vector.broadcast %cst_38 : f32 to vector<2x1xf32>
      %74 = arith.addf %73, %72 : vector<2x1xf32>
      %cst_39 = arith.constant 1.000000e-07 : f32
      %75 = vector.broadcast %cst_39 : f32 to vector<2x1xf32>
      %76 = arith.maximumf %74, %75 : vector<2x1xf32>
      %77 = math.sqrt %76 : vector<2x1xf32>
      %78 = vector.extract_strided_slice %15 {offsets = [2, 0], sizes = [1, 1], strides = [1, 1]} : vector<3x1xf32> to vector<1x1xf32>
      %79 = vector.extract_strided_slice %18 {offsets = [2, 0], sizes = [1, 32], strides = [1, 1]} : vector<3x32xf32> to vector<1x32xf32>
      %80 = arith.mulf %79, %79 : vector<1x32xf32>
      %cst_40 = arith.constant dense<0.000000e+00> : vector<1xf32>
      %81 = vector.multi_reduction <add>, %80, %cst_40 [1] : vector<1x32xf32> to vector<1xf32>
      %82 = vector.shape_cast %81 : vector<1xf32> to vector<1x1xf32>
      %83 = math.sqrt %82 : vector<1x1xf32>
      %cst_41 = arith.constant 1.000000e-15 : f32
      %84 = vector.broadcast %cst_41 : f32 to vector<1x1xf32>
      %85 = arith.maximumf %83, %84 : vector<1x1xf32>
      %cst_42 = arith.constant 1.000000e+00 : f32
      %86 = vector.broadcast %cst_42 : f32 to vector<1x1xf32>
      %87 = arith.divf %78, %86 : vector<1x1xf32>
      %cst_43 = arith.constant 1.00000012 : f32
      %88 = vector.broadcast %cst_43 : f32 to vector<1x1xf32>
      %89 = arith.maximumf %87, %88 : vector<1x1xf32>
      %cst_44 = arith.constant 1.00000012 : f32
      %90 = vector.broadcast %cst_44 : f32 to vector<1x1xf32>
      %91 = arith.maximumf %89, %90 : vector<1x1xf32>
      %92 = arith.mulf %91, %91 : vector<1x1xf32>
      %cst_45 = arith.constant 1.000000e+00 : f32
      %93 = vector.broadcast %cst_45 : f32 to vector<1x1xf32>
      %94 = arith.subf %92, %93 : vector<1x1xf32>
      %95 = math.sqrt %94 : vector<1x1xf32>
      %96 = arith.addf %91, %95 : vector<1x1xf32>
      %97 = math.log %96 : vector<1x1xf32>
      %cst_46 = arith.constant 1.000000e+00 : f32
      %98 = vector.broadcast %cst_46 : f32 to vector<1x1xf32>
      %99 = arith.mulf %98, %97 : vector<1x1xf32>
      %100 = vector.broadcast %99 : vector<1x1xf32> to vector<1x32xf32>
      %101 = arith.mulf %100, %79 : vector<1x32xf32>
      %102 = vector.broadcast %85 : vector<1x1xf32> to vector<1x32xf32>
      %103 = arith.divf %101, %102 : vector<1x32xf32>
      %104 = arith.mulf %69, %69 : vector<2x32xf32>
      %cst_47 = arith.constant dense<0.000000e+00> : vector<2xf32>
      %105 = vector.multi_reduction <add>, %104, %cst_47 [1] : vector<2x32xf32> to vector<2xf32>
      %106 = vector.shape_cast %105 : vector<2xf32> to vector<2x1xf32>
      %107 = math.sqrt %106 : vector<2x1xf32>
      %cst_48 = arith.constant 1.000000e-15 : f32
      %108 = vector.broadcast %cst_48 : f32 to vector<2x1xf32>
      %109 = arith.maximumf %107, %108 : vector<2x1xf32>
      %110 = vector.broadcast %109 : vector<2x1xf32> to vector<2x32xf32>
      %111 = arith.divf %69, %110 : vector<2x32xf32>
      %112 = vector.broadcast %103 : vector<1x32xf32> to vector<2x32xf32>
      %113 = arith.mulf %111, %112 : vector<2x32xf32>
      %cst_49 = arith.constant dense<0.000000e+00> : vector<2xf32>
      %114 = vector.multi_reduction <add>, %113, %cst_49 [1] : vector<2x32xf32> to vector<2xf32>
      %115 = vector.shape_cast %114 : vector<2xf32> to vector<2x1xf32>
      %cst_50 = arith.constant 1.000000e+00 : f32
      %116 = vector.broadcast %cst_50 : f32 to vector<2x1xf32>
      %117 = arith.divf %115, %116 : vector<2x1xf32>
      %cst_51 = arith.constant 1.000000e+00 : f32
      %118 = vector.broadcast %cst_51 : f32 to vector<2x1xf32>
      %119 = arith.subf %118, %77 : vector<2x1xf32>
      %120 = arith.mulf %117, %119 : vector<2x1xf32>
      %121 = vector.broadcast %120 : vector<2x1xf32> to vector<2x32xf32>
      %122 = arith.mulf %121, %111 : vector<2x32xf32>
      %123 = vector.broadcast %103 : vector<1x32xf32> to vector<2x32xf32>
      %124 = arith.subf %123, %122 : vector<2x32xf32>
      %125 = arith.mulf %69, %124 : vector<2x32xf32>
      %cst_52 = arith.constant dense<0.000000e+00> : vector<2xf32>
      %126 = vector.multi_reduction <add>, %125, %cst_52 [1] : vector<2x32xf32> to vector<2xf32>
      %127 = vector.shape_cast %126 : vector<2xf32> to vector<2x1xf32>
      %cst_53 = arith.constant 1.000000e-07 : f32
      %128 = vector.broadcast %cst_53 : f32 to vector<2x1xf32>
      %129 = arith.maximumf %77, %128 : vector<2x1xf32>
      %130 = arith.divf %127, %129 : vector<2x1xf32>
      %131 = arith.mulf %124, %124 : vector<2x32xf32>
      %cst_54 = arith.constant dense<0.000000e+00> : vector<2xf32>
      %132 = vector.multi_reduction <add>, %131, %cst_54 [1] : vector<2x32xf32> to vector<2xf32>
      %133 = vector.shape_cast %132 : vector<2xf32> to vector<2x1xf32>
      %134 = arith.mulf %130, %130 : vector<2x1xf32>
      %135 = arith.subf %133, %134 : vector<2x1xf32>
      %cst_55 = arith.constant 1.000000e-07 : f32
      %136 = vector.broadcast %cst_55 : f32 to vector<2x1xf32>
      %137 = arith.maximumf %135, %136 : vector<2x1xf32>
      %138 = math.sqrt %137 : vector<2x1xf32>
      %cst_56 = arith.constant 1.000000e+06 : f32
      %139 = vector.broadcast %cst_56 : f32 to vector<2x1xf32>
      %140 = arith.minimumf %138, %139 : vector<2x1xf32>
      %cst_57 = arith.constant 1.000000e+00 : f32
      %141 = vector.broadcast %cst_57 : f32 to vector<2x1xf32>
      %142 = arith.divf %140, %141 : vector<2x1xf32>
      %cst_58 = arith.constant 1.000000e-15 : f32
      %143 = vector.broadcast %cst_58 : f32 to vector<2x1xf32>
      %144 = arith.maximumf %142, %143 : vector<2x1xf32>
      %cst_59 = arith.constant -8.500000e+01 : f32
      %cst_60 = arith.constant 8.500000e+01 : f32
      %145 = vector.broadcast %cst_59 : f32 to vector<2x1xf32>
      %146 = arith.maximumf %145, %144 : vector<2x1xf32>
      %147 = vector.broadcast %cst_60 : f32 to vector<2x1xf32>
      %148 = arith.minimumf %147, %146 : vector<2x1xf32>
      %149 = math.exp %148 : vector<2x1xf32>
      %cst_61 = arith.constant 1.000000e+00 : f32
      %150 = vector.broadcast %cst_61 : f32 to vector<2x1xf32>
      %151 = arith.divf %150, %149 : vector<2x1xf32>
      %152 = arith.addf %149, %151 : vector<2x1xf32>
      %cst_62 = arith.constant 5.000000e-01 : f32
      %153 = vector.broadcast %cst_62 : f32 to vector<2x1xf32>
      %154 = arith.mulf %153, %152 : vector<2x1xf32>
      %155 = arith.subf %149, %151 : vector<2x1xf32>
      %cst_63 = arith.constant 5.000000e-01 : f32
      %156 = vector.broadcast %cst_63 : f32 to vector<2x1xf32>
      %157 = arith.mulf %156, %155 : vector<2x1xf32>
      %158 = vector.broadcast %154 : vector<2x1xf32> to vector<2x32xf32>
      %159 = arith.mulf %158, %69 : vector<2x32xf32>
      %160 = arith.divf %157, %144 : vector<2x1xf32>
      %161 = vector.broadcast %160 : vector<2x1xf32> to vector<2x32xf32>
      %162 = arith.mulf %161, %124 : vector<2x32xf32>
      %163 = arith.addf %159, %162 : vector<2x32xf32>
      %164 = arith.mulf %163, %163 : vector<2x32xf32>
      %cst_64 = arith.constant dense<0.000000e+00> : vector<2xf32>
      %165 = vector.multi_reduction <add>, %164, %cst_64 [1] : vector<2x32xf32> to vector<2xf32>
      %166 = vector.shape_cast %165 : vector<2xf32> to vector<2x1xf32>
      %cst_65 = arith.constant 1.000000e+00 : f32
      %167 = vector.broadcast %cst_65 : f32 to vector<2x1xf32>
      %168 = arith.addf %167, %166 : vector<2x1xf32>
      %cst_66 = arith.constant 1.000000e-07 : f32
      %169 = vector.broadcast %cst_66 : f32 to vector<2x1xf32>
      %170 = arith.maximumf %168, %169 : vector<2x1xf32>
      %171 = math.sqrt %170 : vector<2x1xf32>
      %172 = vector.extract_strided_slice %5 {offsets = [2, 0], sizes = [1, 1], strides = [1, 1]} : vector<3x1xf32> to vector<1x1xf32>
      %173 = vector.extract_strided_slice %6 {offsets = [2, 0], sizes = [1, 32], strides = [1, 1]} : vector<3x32xf32> to vector<1x32xf32>
      %174 = arith.mulf %173, %173 : vector<1x32xf32>
      %cst_67 = arith.constant dense<0.000000e+00> : vector<1xf32>
      %175 = vector.multi_reduction <add>, %174, %cst_67 [1] : vector<1x32xf32> to vector<1xf32>
      %176 = vector.shape_cast %175 : vector<1xf32> to vector<1x1xf32>
      %177 = math.sqrt %176 : vector<1x1xf32>
      %cst_68 = arith.constant 1.000000e-15 : f32
      %178 = vector.broadcast %cst_68 : f32 to vector<1x1xf32>
      %179 = arith.maximumf %177, %178 : vector<1x1xf32>
      %cst_69 = arith.constant 1.000000e+00 : f32
      %180 = vector.broadcast %cst_69 : f32 to vector<1x1xf32>
      %181 = arith.divf %172, %180 : vector<1x1xf32>
      %cst_70 = arith.constant 1.00000012 : f32
      %182 = vector.broadcast %cst_70 : f32 to vector<1x1xf32>
      %183 = arith.maximumf %181, %182 : vector<1x1xf32>
      %cst_71 = arith.constant 1.00000012 : f32
      %184 = vector.broadcast %cst_71 : f32 to vector<1x1xf32>
      %185 = arith.maximumf %183, %184 : vector<1x1xf32>
      %186 = arith.mulf %185, %185 : vector<1x1xf32>
      %cst_72 = arith.constant 1.000000e+00 : f32
      %187 = vector.broadcast %cst_72 : f32 to vector<1x1xf32>
      %188 = arith.subf %186, %187 : vector<1x1xf32>
      %189 = math.sqrt %188 : vector<1x1xf32>
      %190 = arith.addf %185, %189 : vector<1x1xf32>
      %191 = math.log %190 : vector<1x1xf32>
      %cst_73 = arith.constant 1.000000e+00 : f32
      %192 = vector.broadcast %cst_73 : f32 to vector<1x1xf32>
      %193 = arith.mulf %192, %191 : vector<1x1xf32>
      %194 = vector.broadcast %193 : vector<1x1xf32> to vector<1x32xf32>
      %195 = arith.mulf %194, %173 : vector<1x32xf32>
      %196 = vector.broadcast %179 : vector<1x1xf32> to vector<1x32xf32>
      %197 = arith.divf %195, %196 : vector<1x32xf32>
      %198 = arith.mulf %163, %163 : vector<2x32xf32>
      %cst_74 = arith.constant dense<0.000000e+00> : vector<2xf32>
      %199 = vector.multi_reduction <add>, %198, %cst_74 [1] : vector<2x32xf32> to vector<2xf32>
      %200 = vector.shape_cast %199 : vector<2xf32> to vector<2x1xf32>
      %201 = math.sqrt %200 : vector<2x1xf32>
      %cst_75 = arith.constant 1.000000e-15 : f32
      %202 = vector.broadcast %cst_75 : f32 to vector<2x1xf32>
      %203 = arith.maximumf %201, %202 : vector<2x1xf32>
      %204 = vector.broadcast %203 : vector<2x1xf32> to vector<2x32xf32>
      %205 = arith.divf %163, %204 : vector<2x32xf32>
      %206 = vector.broadcast %197 : vector<1x32xf32> to vector<2x32xf32>
      %207 = arith.mulf %205, %206 : vector<2x32xf32>
      %cst_76 = arith.constant dense<0.000000e+00> : vector<2xf32>
      %208 = vector.multi_reduction <add>, %207, %cst_76 [1] : vector<2x32xf32> to vector<2xf32>
      %209 = vector.shape_cast %208 : vector<2xf32> to vector<2x1xf32>
      %cst_77 = arith.constant 1.000000e+00 : f32
      %210 = vector.broadcast %cst_77 : f32 to vector<2x1xf32>
      %211 = arith.divf %209, %210 : vector<2x1xf32>
      %cst_78 = arith.constant 1.000000e+00 : f32
      %212 = vector.broadcast %cst_78 : f32 to vector<2x1xf32>
      %213 = arith.subf %212, %171 : vector<2x1xf32>
      %214 = arith.mulf %211, %213 : vector<2x1xf32>
      %215 = vector.broadcast %214 : vector<2x1xf32> to vector<2x32xf32>
      %216 = arith.mulf %215, %205 : vector<2x32xf32>
      %217 = vector.broadcast %197 : vector<1x32xf32> to vector<2x32xf32>
      %218 = arith.subf %217, %216 : vector<2x32xf32>
      %219 = arith.mulf %163, %218 : vector<2x32xf32>
      %cst_79 = arith.constant dense<0.000000e+00> : vector<2xf32>
      %220 = vector.multi_reduction <add>, %219, %cst_79 [1] : vector<2x32xf32> to vector<2xf32>
      %221 = vector.shape_cast %220 : vector<2xf32> to vector<2x1xf32>
      %cst_80 = arith.constant 1.000000e-07 : f32
      %222 = vector.broadcast %cst_80 : f32 to vector<2x1xf32>
      %223 = arith.maximumf %171, %222 : vector<2x1xf32>
      %224 = arith.divf %221, %223 : vector<2x1xf32>
      %225 = arith.mulf %218, %218 : vector<2x32xf32>
      %cst_81 = arith.constant dense<0.000000e+00> : vector<2xf32>
      %226 = vector.multi_reduction <add>, %225, %cst_81 [1] : vector<2x32xf32> to vector<2xf32>
      %227 = vector.shape_cast %226 : vector<2xf32> to vector<2x1xf32>
      %228 = arith.mulf %224, %224 : vector<2x1xf32>
      %229 = arith.subf %227, %228 : vector<2x1xf32>
      %cst_82 = arith.constant 1.000000e-07 : f32
      %230 = vector.broadcast %cst_82 : f32 to vector<2x1xf32>
      %231 = arith.maximumf %229, %230 : vector<2x1xf32>
      %232 = math.sqrt %231 : vector<2x1xf32>
      %cst_83 = arith.constant 1.000000e+06 : f32
      %233 = vector.broadcast %cst_83 : f32 to vector<2x1xf32>
      %234 = arith.minimumf %232, %233 : vector<2x1xf32>
      %cst_84 = arith.constant 1.000000e+00 : f32
      %235 = vector.broadcast %cst_84 : f32 to vector<2x1xf32>
      %236 = arith.divf %234, %235 : vector<2x1xf32>
      %cst_85 = arith.constant 1.000000e-15 : f32
      %237 = vector.broadcast %cst_85 : f32 to vector<2x1xf32>
      %238 = arith.maximumf %236, %237 : vector<2x1xf32>
      %cst_86 = arith.constant -8.500000e+01 : f32
      %cst_87 = arith.constant 8.500000e+01 : f32
      %239 = vector.broadcast %cst_86 : f32 to vector<2x1xf32>
      %240 = arith.maximumf %239, %238 : vector<2x1xf32>
      %241 = vector.broadcast %cst_87 : f32 to vector<2x1xf32>
      %242 = arith.minimumf %241, %240 : vector<2x1xf32>
      %243 = math.exp %242 : vector<2x1xf32>
      %cst_88 = arith.constant 1.000000e+00 : f32
      %244 = vector.broadcast %cst_88 : f32 to vector<2x1xf32>
      %245 = arith.divf %244, %243 : vector<2x1xf32>
      %246 = arith.addf %243, %245 : vector<2x1xf32>
      %cst_89 = arith.constant 5.000000e-01 : f32
      %247 = vector.broadcast %cst_89 : f32 to vector<2x1xf32>
      %248 = arith.mulf %247, %246 : vector<2x1xf32>
      %249 = arith.subf %243, %245 : vector<2x1xf32>
      %cst_90 = arith.constant 5.000000e-01 : f32
      %250 = vector.broadcast %cst_90 : f32 to vector<2x1xf32>
      %251 = arith.mulf %250, %249 : vector<2x1xf32>
      %252 = vector.broadcast %248 : vector<2x1xf32> to vector<2x32xf32>
      %253 = arith.mulf %252, %163 : vector<2x32xf32>
      %254 = arith.divf %251, %238 : vector<2x1xf32>
      %255 = vector.broadcast %254 : vector<2x1xf32> to vector<2x32xf32>
      %256 = arith.mulf %255, %218 : vector<2x32xf32>
      %257 = arith.addf %253, %256 : vector<2x32xf32>
      %258 = arith.mulf %257, %257 : vector<2x32xf32>
      %cst_91 = arith.constant dense<0.000000e+00> : vector<2xf32>
      %259 = vector.multi_reduction <add>, %258, %cst_91 [1] : vector<2x32xf32> to vector<2xf32>
      %260 = vector.shape_cast %259 : vector<2xf32> to vector<2x1xf32>
      %cst_92 = arith.constant 1.000000e+00 : f32
      %261 = vector.broadcast %cst_92 : f32 to vector<2x1xf32>
      %262 = arith.addf %261, %260 : vector<2x1xf32>
      %cst_93 = arith.constant 1.000000e-07 : f32
      %263 = vector.broadcast %cst_93 : f32 to vector<2x1xf32>
      %264 = arith.maximumf %262, %263 : vector<2x1xf32>
      %265 = math.sqrt %264 : vector<2x1xf32>
      %266 = arith.mulf %257, %257 : vector<2x32xf32>
      %cst_94 = arith.constant dense<0.000000e+00> : vector<2xf32>
      %267 = vector.multi_reduction <add>, %266, %cst_94 [1] : vector<2x32xf32> to vector<2xf32>
      %268 = vector.shape_cast %267 : vector<2xf32> to vector<2x1xf32>
      %269 = math.sqrt %268 : vector<2x1xf32>
      %cst_95 = arith.constant 1.000000e-15 : f32
      %270 = vector.broadcast %cst_95 : f32 to vector<2x1xf32>
      %271 = arith.maximumf %269, %270 : vector<2x1xf32>
      %cst_96 = arith.constant 1.000000e+00 : f32
      %272 = vector.broadcast %cst_96 : f32 to vector<2x1xf32>
      %273 = arith.divf %265, %272 : vector<2x1xf32>
      %cst_97 = arith.constant 1.00000012 : f32
      %274 = vector.broadcast %cst_97 : f32 to vector<2x1xf32>
      %275 = arith.maximumf %273, %274 : vector<2x1xf32>
      %cst_98 = arith.constant 1.00000012 : f32
      %276 = vector.broadcast %cst_98 : f32 to vector<2x1xf32>
      %277 = arith.maximumf %275, %276 : vector<2x1xf32>
      %278 = arith.mulf %277, %277 : vector<2x1xf32>
      %cst_99 = arith.constant 1.000000e+00 : f32
      %279 = vector.broadcast %cst_99 : f32 to vector<2x1xf32>
      %280 = arith.subf %278, %279 : vector<2x1xf32>
      %281 = math.sqrt %280 : vector<2x1xf32>
      %282 = arith.addf %277, %281 : vector<2x1xf32>
      %283 = math.log %282 : vector<2x1xf32>
      %cst_100 = arith.constant 1.000000e+00 : f32
      %284 = vector.broadcast %cst_100 : f32 to vector<2x1xf32>
      %285 = arith.mulf %284, %283 : vector<2x1xf32>
      %286 = vector.broadcast %285 : vector<2x1xf32> to vector<2x32xf32>
      %287 = arith.mulf %286, %257 : vector<2x32xf32>
      %288 = vector.broadcast %271 : vector<2x1xf32> to vector<2x32xf32>
      %289 = arith.divf %287, %288 : vector<2x32xf32>
      %cst_101 = arith.constant 5.000000e-01 : f32
      %290 = vector.broadcast %cst_101 : f32 to vector<2x32xf32>
      %291 = arith.mulf %290, %289 : vector<2x32xf32>
      %292 = math.tanh %291 : vector<2x32xf32>
      %cst_102 = arith.constant 1.000000e+00 : f32
      %293 = vector.broadcast %cst_102 : f32 to vector<2x32xf32>
      %294 = arith.addf %292, %293 : vector<2x32xf32>
      %cst_103 = arith.constant 5.000000e-01 : f32
      %295 = vector.broadcast %cst_103 : f32 to vector<2x32xf32>
      %296 = arith.mulf %295, %294 : vector<2x32xf32>
      %297 = arith.mulf %45, %45 : vector<2x32xf32>
      %cst_104 = arith.constant dense<0.000000e+00> : vector<2xf32>
      %298 = vector.multi_reduction <add>, %297, %cst_104 [1] : vector<2x32xf32> to vector<2xf32>
      %299 = vector.shape_cast %298 : vector<2xf32> to vector<2x1xf32>
      %300 = math.sqrt %299 : vector<2x1xf32>
      %cst_105 = arith.constant 1.000000e-15 : f32
      %301 = vector.broadcast %cst_105 : f32 to vector<2x1xf32>
      %302 = arith.maximumf %300, %301 : vector<2x1xf32>
      %cst_106 = arith.constant 1.000000e+00 : f32
      %303 = vector.broadcast %cst_106 : f32 to vector<2x1xf32>
      %304 = arith.divf %302, %303 : vector<2x1xf32>
      %cst_107 = arith.constant -8.500000e+01 : f32
      %cst_108 = arith.constant 8.500000e+01 : f32
      %305 = vector.broadcast %cst_107 : f32 to vector<2x1xf32>
      %306 = arith.maximumf %305, %304 : vector<2x1xf32>
      %307 = vector.broadcast %cst_108 : f32 to vector<2x1xf32>
      %308 = arith.minimumf %307, %306 : vector<2x1xf32>
      %309 = math.exp %308 : vector<2x1xf32>
      %cst_109 = arith.constant 1.000000e+00 : f32
      %310 = vector.broadcast %cst_109 : f32 to vector<2x1xf32>
      %311 = arith.divf %310, %309 : vector<2x1xf32>
      %312 = arith.subf %309, %311 : vector<2x1xf32>
      %cst_110 = arith.constant 5.000000e-01 : f32
      %313 = vector.broadcast %cst_110 : f32 to vector<2x1xf32>
      %314 = arith.mulf %313, %312 : vector<2x1xf32>
      %cst_111 = arith.constant 1.000000e+00 : f32
      %315 = vector.broadcast %cst_111 : f32 to vector<2x1xf32>
      %316 = arith.mulf %315, %314 : vector<2x1xf32>
      %317 = vector.broadcast %316 : vector<2x1xf32> to vector<2x32xf32>
      %318 = arith.mulf %317, %45 : vector<2x32xf32>
      %319 = vector.broadcast %302 : vector<2x1xf32> to vector<2x32xf32>
      %320 = arith.divf %318, %319 : vector<2x32xf32>
      %321 = arith.mulf %320, %320 : vector<2x32xf32>
      %cst_112 = arith.constant dense<0.000000e+00> : vector<2xf32>
      %322 = vector.multi_reduction <add>, %321, %cst_112 [1] : vector<2x32xf32> to vector<2xf32>
      %323 = vector.shape_cast %322 : vector<2xf32> to vector<2x1xf32>
      %cst_113 = arith.constant 1.000000e+00 : f32
      %324 = vector.broadcast %cst_113 : f32 to vector<2x1xf32>
      %325 = arith.addf %324, %323 : vector<2x1xf32>
      %cst_114 = arith.constant 1.000000e-07 : f32
      %326 = vector.broadcast %cst_114 : f32 to vector<2x1xf32>
      %327 = arith.maximumf %325, %326 : vector<2x1xf32>
      %328 = math.sqrt %327 : vector<2x1xf32>
      %329 = vector.extract_strided_slice %15 {offsets = [0, 0], sizes = [1, 1], strides = [1, 1]} : vector<3x1xf32> to vector<1x1xf32>
      %330 = vector.extract_strided_slice %18 {offsets = [0, 0], sizes = [1, 32], strides = [1, 1]} : vector<3x32xf32> to vector<1x32xf32>
      %331 = arith.mulf %330, %330 : vector<1x32xf32>
      %cst_115 = arith.constant dense<0.000000e+00> : vector<1xf32>
      %332 = vector.multi_reduction <add>, %331, %cst_115 [1] : vector<1x32xf32> to vector<1xf32>
      %333 = vector.shape_cast %332 : vector<1xf32> to vector<1x1xf32>
      %334 = math.sqrt %333 : vector<1x1xf32>
      %cst_116 = arith.constant 1.000000e-15 : f32
      %335 = vector.broadcast %cst_116 : f32 to vector<1x1xf32>
      %336 = arith.maximumf %334, %335 : vector<1x1xf32>
      %cst_117 = arith.constant 1.000000e+00 : f32
      %337 = vector.broadcast %cst_117 : f32 to vector<1x1xf32>
      %338 = arith.divf %329, %337 : vector<1x1xf32>
      %cst_118 = arith.constant 1.00000012 : f32
      %339 = vector.broadcast %cst_118 : f32 to vector<1x1xf32>
      %340 = arith.maximumf %338, %339 : vector<1x1xf32>
      %cst_119 = arith.constant 1.00000012 : f32
      %341 = vector.broadcast %cst_119 : f32 to vector<1x1xf32>
      %342 = arith.maximumf %340, %341 : vector<1x1xf32>
      %343 = arith.mulf %342, %342 : vector<1x1xf32>
      %cst_120 = arith.constant 1.000000e+00 : f32
      %344 = vector.broadcast %cst_120 : f32 to vector<1x1xf32>
      %345 = arith.subf %343, %344 : vector<1x1xf32>
      %346 = math.sqrt %345 : vector<1x1xf32>
      %347 = arith.addf %342, %346 : vector<1x1xf32>
      %348 = math.log %347 : vector<1x1xf32>
      %cst_121 = arith.constant 1.000000e+00 : f32
      %349 = vector.broadcast %cst_121 : f32 to vector<1x1xf32>
      %350 = arith.mulf %349, %348 : vector<1x1xf32>
      %351 = vector.broadcast %350 : vector<1x1xf32> to vector<1x32xf32>
      %352 = arith.mulf %351, %330 : vector<1x32xf32>
      %353 = vector.broadcast %336 : vector<1x1xf32> to vector<1x32xf32>
      %354 = arith.divf %352, %353 : vector<1x32xf32>
      %355 = arith.mulf %320, %320 : vector<2x32xf32>
      %cst_122 = arith.constant dense<0.000000e+00> : vector<2xf32>
      %356 = vector.multi_reduction <add>, %355, %cst_122 [1] : vector<2x32xf32> to vector<2xf32>
      %357 = vector.shape_cast %356 : vector<2xf32> to vector<2x1xf32>
      %358 = math.sqrt %357 : vector<2x1xf32>
      %cst_123 = arith.constant 1.000000e-15 : f32
      %359 = vector.broadcast %cst_123 : f32 to vector<2x1xf32>
      %360 = arith.maximumf %358, %359 : vector<2x1xf32>
      %361 = vector.broadcast %360 : vector<2x1xf32> to vector<2x32xf32>
      %362 = arith.divf %320, %361 : vector<2x32xf32>
      %363 = vector.broadcast %354 : vector<1x32xf32> to vector<2x32xf32>
      %364 = arith.mulf %362, %363 : vector<2x32xf32>
      %cst_124 = arith.constant dense<0.000000e+00> : vector<2xf32>
      %365 = vector.multi_reduction <add>, %364, %cst_124 [1] : vector<2x32xf32> to vector<2xf32>
      %366 = vector.shape_cast %365 : vector<2xf32> to vector<2x1xf32>
      %cst_125 = arith.constant 1.000000e+00 : f32
      %367 = vector.broadcast %cst_125 : f32 to vector<2x1xf32>
      %368 = arith.divf %366, %367 : vector<2x1xf32>
      %cst_126 = arith.constant 1.000000e+00 : f32
      %369 = vector.broadcast %cst_126 : f32 to vector<2x1xf32>
      %370 = arith.subf %369, %328 : vector<2x1xf32>
      %371 = arith.mulf %368, %370 : vector<2x1xf32>
      %372 = vector.broadcast %371 : vector<2x1xf32> to vector<2x32xf32>
      %373 = arith.mulf %372, %362 : vector<2x32xf32>
      %374 = vector.broadcast %354 : vector<1x32xf32> to vector<2x32xf32>
      %375 = arith.subf %374, %373 : vector<2x32xf32>
      %376 = arith.mulf %320, %375 : vector<2x32xf32>
      %cst_127 = arith.constant dense<0.000000e+00> : vector<2xf32>
      %377 = vector.multi_reduction <add>, %376, %cst_127 [1] : vector<2x32xf32> to vector<2xf32>
      %378 = vector.shape_cast %377 : vector<2xf32> to vector<2x1xf32>
      %cst_128 = arith.constant 1.000000e-07 : f32
      %379 = vector.broadcast %cst_128 : f32 to vector<2x1xf32>
      %380 = arith.maximumf %328, %379 : vector<2x1xf32>
      %381 = arith.divf %378, %380 : vector<2x1xf32>
      %382 = arith.mulf %375, %375 : vector<2x32xf32>
      %cst_129 = arith.constant dense<0.000000e+00> : vector<2xf32>
      %383 = vector.multi_reduction <add>, %382, %cst_129 [1] : vector<2x32xf32> to vector<2xf32>
      %384 = vector.shape_cast %383 : vector<2xf32> to vector<2x1xf32>
      %385 = arith.mulf %381, %381 : vector<2x1xf32>
      %386 = arith.subf %384, %385 : vector<2x1xf32>
      %cst_130 = arith.constant 1.000000e-07 : f32
      %387 = vector.broadcast %cst_130 : f32 to vector<2x1xf32>
      %388 = arith.maximumf %386, %387 : vector<2x1xf32>
      %389 = math.sqrt %388 : vector<2x1xf32>
      %cst_131 = arith.constant 1.000000e+06 : f32
      %390 = vector.broadcast %cst_131 : f32 to vector<2x1xf32>
      %391 = arith.minimumf %389, %390 : vector<2x1xf32>
      %cst_132 = arith.constant 1.000000e+00 : f32
      %392 = vector.broadcast %cst_132 : f32 to vector<2x1xf32>
      %393 = arith.divf %391, %392 : vector<2x1xf32>
      %cst_133 = arith.constant 1.000000e-15 : f32
      %394 = vector.broadcast %cst_133 : f32 to vector<2x1xf32>
      %395 = arith.maximumf %393, %394 : vector<2x1xf32>
      %cst_134 = arith.constant -8.500000e+01 : f32
      %cst_135 = arith.constant 8.500000e+01 : f32
      %396 = vector.broadcast %cst_134 : f32 to vector<2x1xf32>
      %397 = arith.maximumf %396, %395 : vector<2x1xf32>
      %398 = vector.broadcast %cst_135 : f32 to vector<2x1xf32>
      %399 = arith.minimumf %398, %397 : vector<2x1xf32>
      %400 = math.exp %399 : vector<2x1xf32>
      %cst_136 = arith.constant 1.000000e+00 : f32
      %401 = vector.broadcast %cst_136 : f32 to vector<2x1xf32>
      %402 = arith.divf %401, %400 : vector<2x1xf32>
      %403 = arith.addf %400, %402 : vector<2x1xf32>
      %cst_137 = arith.constant 5.000000e-01 : f32
      %404 = vector.broadcast %cst_137 : f32 to vector<2x1xf32>
      %405 = arith.mulf %404, %403 : vector<2x1xf32>
      %406 = arith.subf %400, %402 : vector<2x1xf32>
      %cst_138 = arith.constant 5.000000e-01 : f32
      %407 = vector.broadcast %cst_138 : f32 to vector<2x1xf32>
      %408 = arith.mulf %407, %406 : vector<2x1xf32>
      %409 = vector.broadcast %405 : vector<2x1xf32> to vector<2x32xf32>
      %410 = arith.mulf %409, %320 : vector<2x32xf32>
      %411 = arith.divf %408, %395 : vector<2x1xf32>
      %412 = vector.broadcast %411 : vector<2x1xf32> to vector<2x32xf32>
      %413 = arith.mulf %412, %375 : vector<2x32xf32>
      %414 = arith.addf %410, %413 : vector<2x32xf32>
      %415 = arith.mulf %414, %414 : vector<2x32xf32>
      %cst_139 = arith.constant dense<0.000000e+00> : vector<2xf32>
      %416 = vector.multi_reduction <add>, %415, %cst_139 [1] : vector<2x32xf32> to vector<2xf32>
      %417 = vector.shape_cast %416 : vector<2xf32> to vector<2x1xf32>
      %cst_140 = arith.constant 1.000000e+00 : f32
      %418 = vector.broadcast %cst_140 : f32 to vector<2x1xf32>
      %419 = arith.addf %418, %417 : vector<2x1xf32>
      %cst_141 = arith.constant 1.000000e-07 : f32
      %420 = vector.broadcast %cst_141 : f32 to vector<2x1xf32>
      %421 = arith.maximumf %419, %420 : vector<2x1xf32>
      %422 = math.sqrt %421 : vector<2x1xf32>
      %423 = vector.extract_strided_slice %5 {offsets = [0, 0], sizes = [1, 1], strides = [1, 1]} : vector<3x1xf32> to vector<1x1xf32>
      %424 = vector.extract_strided_slice %6 {offsets = [0, 0], sizes = [1, 32], strides = [1, 1]} : vector<3x32xf32> to vector<1x32xf32>
      %425 = arith.mulf %424, %424 : vector<1x32xf32>
      %cst_142 = arith.constant dense<0.000000e+00> : vector<1xf32>
      %426 = vector.multi_reduction <add>, %425, %cst_142 [1] : vector<1x32xf32> to vector<1xf32>
      %427 = vector.shape_cast %426 : vector<1xf32> to vector<1x1xf32>
      %428 = math.sqrt %427 : vector<1x1xf32>
      %cst_143 = arith.constant 1.000000e-15 : f32
      %429 = vector.broadcast %cst_143 : f32 to vector<1x1xf32>
      %430 = arith.maximumf %428, %429 : vector<1x1xf32>
      %cst_144 = arith.constant 1.000000e+00 : f32
      %431 = vector.broadcast %cst_144 : f32 to vector<1x1xf32>
      %432 = arith.divf %423, %431 : vector<1x1xf32>
      %cst_145 = arith.constant 1.00000012 : f32
      %433 = vector.broadcast %cst_145 : f32 to vector<1x1xf32>
      %434 = arith.maximumf %432, %433 : vector<1x1xf32>
      %cst_146 = arith.constant 1.00000012 : f32
      %435 = vector.broadcast %cst_146 : f32 to vector<1x1xf32>
      %436 = arith.maximumf %434, %435 : vector<1x1xf32>
      %437 = arith.mulf %436, %436 : vector<1x1xf32>
      %cst_147 = arith.constant 1.000000e+00 : f32
      %438 = vector.broadcast %cst_147 : f32 to vector<1x1xf32>
      %439 = arith.subf %437, %438 : vector<1x1xf32>
      %440 = math.sqrt %439 : vector<1x1xf32>
      %441 = arith.addf %436, %440 : vector<1x1xf32>
      %442 = math.log %441 : vector<1x1xf32>
      %cst_148 = arith.constant 1.000000e+00 : f32
      %443 = vector.broadcast %cst_148 : f32 to vector<1x1xf32>
      %444 = arith.mulf %443, %442 : vector<1x1xf32>
      %445 = vector.broadcast %444 : vector<1x1xf32> to vector<1x32xf32>
      %446 = arith.mulf %445, %424 : vector<1x32xf32>
      %447 = vector.broadcast %430 : vector<1x1xf32> to vector<1x32xf32>
      %448 = arith.divf %446, %447 : vector<1x32xf32>
      %449 = arith.mulf %414, %414 : vector<2x32xf32>
      %cst_149 = arith.constant dense<0.000000e+00> : vector<2xf32>
      %450 = vector.multi_reduction <add>, %449, %cst_149 [1] : vector<2x32xf32> to vector<2xf32>
      %451 = vector.shape_cast %450 : vector<2xf32> to vector<2x1xf32>
      %452 = math.sqrt %451 : vector<2x1xf32>
      %cst_150 = arith.constant 1.000000e-15 : f32
      %453 = vector.broadcast %cst_150 : f32 to vector<2x1xf32>
      %454 = arith.maximumf %452, %453 : vector<2x1xf32>
      %455 = vector.broadcast %454 : vector<2x1xf32> to vector<2x32xf32>
      %456 = arith.divf %414, %455 : vector<2x32xf32>
      %457 = vector.broadcast %448 : vector<1x32xf32> to vector<2x32xf32>
      %458 = arith.mulf %456, %457 : vector<2x32xf32>
      %cst_151 = arith.constant dense<0.000000e+00> : vector<2xf32>
      %459 = vector.multi_reduction <add>, %458, %cst_151 [1] : vector<2x32xf32> to vector<2xf32>
      %460 = vector.shape_cast %459 : vector<2xf32> to vector<2x1xf32>
      %cst_152 = arith.constant 1.000000e+00 : f32
      %461 = vector.broadcast %cst_152 : f32 to vector<2x1xf32>
      %462 = arith.divf %460, %461 : vector<2x1xf32>
      %cst_153 = arith.constant 1.000000e+00 : f32
      %463 = vector.broadcast %cst_153 : f32 to vector<2x1xf32>
      %464 = arith.subf %463, %422 : vector<2x1xf32>
      %465 = arith.mulf %462, %464 : vector<2x1xf32>
      %466 = vector.broadcast %465 : vector<2x1xf32> to vector<2x32xf32>
      %467 = arith.mulf %466, %456 : vector<2x32xf32>
      %468 = vector.broadcast %448 : vector<1x32xf32> to vector<2x32xf32>
      %469 = arith.subf %468, %467 : vector<2x32xf32>
      %470 = arith.mulf %414, %469 : vector<2x32xf32>
      %cst_154 = arith.constant dense<0.000000e+00> : vector<2xf32>
      %471 = vector.multi_reduction <add>, %470, %cst_154 [1] : vector<2x32xf32> to vector<2xf32>
      %472 = vector.shape_cast %471 : vector<2xf32> to vector<2x1xf32>
      %cst_155 = arith.constant 1.000000e-07 : f32
      %473 = vector.broadcast %cst_155 : f32 to vector<2x1xf32>
      %474 = arith.maximumf %422, %473 : vector<2x1xf32>
      %475 = arith.divf %472, %474 : vector<2x1xf32>
      %476 = arith.mulf %469, %469 : vector<2x32xf32>
      %cst_156 = arith.constant dense<0.000000e+00> : vector<2xf32>
      %477 = vector.multi_reduction <add>, %476, %cst_156 [1] : vector<2x32xf32> to vector<2xf32>
      %478 = vector.shape_cast %477 : vector<2xf32> to vector<2x1xf32>
      %479 = arith.mulf %475, %475 : vector<2x1xf32>
      %480 = arith.subf %478, %479 : vector<2x1xf32>
      %cst_157 = arith.constant 1.000000e-07 : f32
      %481 = vector.broadcast %cst_157 : f32 to vector<2x1xf32>
      %482 = arith.maximumf %480, %481 : vector<2x1xf32>
      %483 = math.sqrt %482 : vector<2x1xf32>
      %cst_158 = arith.constant 1.000000e+06 : f32
      %484 = vector.broadcast %cst_158 : f32 to vector<2x1xf32>
      %485 = arith.minimumf %483, %484 : vector<2x1xf32>
      %cst_159 = arith.constant 1.000000e+00 : f32
      %486 = vector.broadcast %cst_159 : f32 to vector<2x1xf32>
      %487 = arith.divf %485, %486 : vector<2x1xf32>
      %cst_160 = arith.constant 1.000000e-15 : f32
      %488 = vector.broadcast %cst_160 : f32 to vector<2x1xf32>
      %489 = arith.maximumf %487, %488 : vector<2x1xf32>
      %cst_161 = arith.constant -8.500000e+01 : f32
      %cst_162 = arith.constant 8.500000e+01 : f32
      %490 = vector.broadcast %cst_161 : f32 to vector<2x1xf32>
      %491 = arith.maximumf %490, %489 : vector<2x1xf32>
      %492 = vector.broadcast %cst_162 : f32 to vector<2x1xf32>
      %493 = arith.minimumf %492, %491 : vector<2x1xf32>
      %494 = math.exp %493 : vector<2x1xf32>
      %cst_163 = arith.constant 1.000000e+00 : f32
      %495 = vector.broadcast %cst_163 : f32 to vector<2x1xf32>
      %496 = arith.divf %495, %494 : vector<2x1xf32>
      %497 = arith.addf %494, %496 : vector<2x1xf32>
      %cst_164 = arith.constant 5.000000e-01 : f32
      %498 = vector.broadcast %cst_164 : f32 to vector<2x1xf32>
      %499 = arith.mulf %498, %497 : vector<2x1xf32>
      %500 = arith.subf %494, %496 : vector<2x1xf32>
      %cst_165 = arith.constant 5.000000e-01 : f32
      %501 = vector.broadcast %cst_165 : f32 to vector<2x1xf32>
      %502 = arith.mulf %501, %500 : vector<2x1xf32>
      %503 = vector.broadcast %499 : vector<2x1xf32> to vector<2x32xf32>
      %504 = arith.mulf %503, %414 : vector<2x32xf32>
      %505 = arith.divf %502, %489 : vector<2x1xf32>
      %506 = vector.broadcast %505 : vector<2x1xf32> to vector<2x32xf32>
      %507 = arith.mulf %506, %469 : vector<2x32xf32>
      %508 = arith.addf %504, %507 : vector<2x32xf32>
      %509 = arith.mulf %508, %508 : vector<2x32xf32>
      %cst_166 = arith.constant dense<0.000000e+00> : vector<2xf32>
      %510 = vector.multi_reduction <add>, %509, %cst_166 [1] : vector<2x32xf32> to vector<2xf32>
      %511 = vector.shape_cast %510 : vector<2xf32> to vector<2x1xf32>
      %cst_167 = arith.constant 1.000000e+00 : f32
      %512 = vector.broadcast %cst_167 : f32 to vector<2x1xf32>
      %513 = arith.addf %512, %511 : vector<2x1xf32>
      %cst_168 = arith.constant 1.000000e-07 : f32
      %514 = vector.broadcast %cst_168 : f32 to vector<2x1xf32>
      %515 = arith.maximumf %513, %514 : vector<2x1xf32>
      %516 = math.sqrt %515 : vector<2x1xf32>
      %517 = arith.mulf %508, %508 : vector<2x32xf32>
      %cst_169 = arith.constant dense<0.000000e+00> : vector<2xf32>
      %518 = vector.multi_reduction <add>, %517, %cst_169 [1] : vector<2x32xf32> to vector<2xf32>
      %519 = vector.shape_cast %518 : vector<2xf32> to vector<2x1xf32>
      %520 = math.sqrt %519 : vector<2x1xf32>
      %cst_170 = arith.constant 1.000000e-15 : f32
      %521 = vector.broadcast %cst_170 : f32 to vector<2x1xf32>
      %522 = arith.maximumf %520, %521 : vector<2x1xf32>
      %cst_171 = arith.constant 1.000000e+00 : f32
      %523 = vector.broadcast %cst_171 : f32 to vector<2x1xf32>
      %524 = arith.divf %516, %523 : vector<2x1xf32>
      %cst_172 = arith.constant 1.00000012 : f32
      %525 = vector.broadcast %cst_172 : f32 to vector<2x1xf32>
      %526 = arith.maximumf %524, %525 : vector<2x1xf32>
      %cst_173 = arith.constant 1.00000012 : f32
      %527 = vector.broadcast %cst_173 : f32 to vector<2x1xf32>
      %528 = arith.maximumf %526, %527 : vector<2x1xf32>
      %529 = arith.mulf %528, %528 : vector<2x1xf32>
      %cst_174 = arith.constant 1.000000e+00 : f32
      %530 = vector.broadcast %cst_174 : f32 to vector<2x1xf32>
      %531 = arith.subf %529, %530 : vector<2x1xf32>
      %532 = math.sqrt %531 : vector<2x1xf32>
      %533 = arith.addf %528, %532 : vector<2x1xf32>
      %534 = math.log %533 : vector<2x1xf32>
      %cst_175 = arith.constant 1.000000e+00 : f32
      %535 = vector.broadcast %cst_175 : f32 to vector<2x1xf32>
      %536 = arith.mulf %535, %534 : vector<2x1xf32>
      %537 = vector.broadcast %536 : vector<2x1xf32> to vector<2x32xf32>
      %538 = arith.mulf %537, %508 : vector<2x32xf32>
      %539 = vector.broadcast %522 : vector<2x1xf32> to vector<2x32xf32>
      %540 = arith.divf %538, %539 : vector<2x32xf32>
      %cst_176 = arith.constant 5.000000e-01 : f32
      %541 = vector.broadcast %cst_176 : f32 to vector<2x32xf32>
      %542 = arith.mulf %541, %540 : vector<2x32xf32>
      %543 = math.tanh %542 : vector<2x32xf32>
      %cst_177 = arith.constant 1.000000e+00 : f32
      %544 = vector.broadcast %cst_177 : f32 to vector<2x32xf32>
      %545 = arith.addf %543, %544 : vector<2x32xf32>
      %cst_178 = arith.constant 5.000000e-01 : f32
      %546 = vector.broadcast %cst_178 : f32 to vector<2x32xf32>
      %547 = arith.mulf %546, %545 : vector<2x32xf32>
      %548 = arith.mulf %547, %42 : vector<2x32xf32>
      %cst_179 = arith.constant dense<0.000000e+00> : vector<2x32xf32>
      %549 = tpu.matmul %548, %4, %cst_179 {dimension_numbers = #tpu.dot_dimension_numbers<[1], [0], [0], [1], [0, 0, 1, 1], [], []>, precision = #tpu.contract_precision<fp32>} : vector<2x32xf32>, vector<32x32xf32>, vector<2x32xf32> -> vector<2x32xf32>
      %550 = arith.mulf %549, %549 : vector<2x32xf32>
      %cst_180 = arith.constant dense<0.000000e+00> : vector<2xf32>
      %551 = vector.multi_reduction <add>, %550, %cst_180 [1] : vector<2x32xf32> to vector<2xf32>
      %552 = vector.shape_cast %551 : vector<2xf32> to vector<2x1xf32>
      %553 = math.sqrt %552 : vector<2x1xf32>
      %cst_181 = arith.constant 1.000000e-15 : f32
      %554 = vector.broadcast %cst_181 : f32 to vector<2x1xf32>
      %555 = arith.maximumf %553, %554 : vector<2x1xf32>
      %cst_182 = arith.constant 1.000000e+00 : f32
      %556 = vector.broadcast %cst_182 : f32 to vector<2x1xf32>
      %557 = arith.divf %555, %556 : vector<2x1xf32>
      %cst_183 = arith.constant -8.500000e+01 : f32
      %cst_184 = arith.constant 8.500000e+01 : f32
      %558 = vector.broadcast %cst_183 : f32 to vector<2x1xf32>
      %559 = arith.maximumf %558, %557 : vector<2x1xf32>
      %560 = vector.broadcast %cst_184 : f32 to vector<2x1xf32>
      %561 = arith.minimumf %560, %559 : vector<2x1xf32>
      %562 = math.exp %561 : vector<2x1xf32>
      %cst_185 = arith.constant 1.000000e+00 : f32
      %563 = vector.broadcast %cst_185 : f32 to vector<2x1xf32>
      %564 = arith.divf %563, %562 : vector<2x1xf32>
      %565 = arith.subf %562, %564 : vector<2x1xf32>
      %cst_186 = arith.constant 5.000000e-01 : f32
      %566 = vector.broadcast %cst_186 : f32 to vector<2x1xf32>
      %567 = arith.mulf %566, %565 : vector<2x1xf32>
      %cst_187 = arith.constant 1.000000e+00 : f32
      %568 = vector.broadcast %cst_187 : f32 to vector<2x1xf32>
      %569 = arith.mulf %568, %567 : vector<2x1xf32>
      %570 = vector.broadcast %569 : vector<2x1xf32> to vector<2x32xf32>
      %571 = arith.mulf %570, %549 : vector<2x32xf32>
      %572 = vector.broadcast %555 : vector<2x1xf32> to vector<2x32xf32>
      %573 = arith.divf %571, %572 : vector<2x32xf32>
      %574 = arith.mulf %573, %573 : vector<2x32xf32>
      %cst_188 = arith.constant dense<0.000000e+00> : vector<2xf32>
      %575 = vector.multi_reduction <add>, %574, %cst_188 [1] : vector<2x32xf32> to vector<2xf32>
      %576 = vector.shape_cast %575 : vector<2xf32> to vector<2x1xf32>
      %cst_189 = arith.constant 1.000000e+00 : f32
      %577 = vector.broadcast %cst_189 : f32 to vector<2x1xf32>
      %578 = arith.addf %577, %576 : vector<2x1xf32>
      %cst_190 = arith.constant 1.000000e-07 : f32
      %579 = vector.broadcast %cst_190 : f32 to vector<2x1xf32>
      %580 = arith.maximumf %578, %579 : vector<2x1xf32>
      %581 = math.sqrt %580 : vector<2x1xf32>
      %582 = vector.extract_strided_slice %15 {offsets = [1, 0], sizes = [1, 1], strides = [1, 1]} : vector<3x1xf32> to vector<1x1xf32>
      %583 = vector.extract_strided_slice %18 {offsets = [1, 0], sizes = [1, 32], strides = [1, 1]} : vector<3x32xf32> to vector<1x32xf32>
      %584 = arith.mulf %583, %583 : vector<1x32xf32>
      %cst_191 = arith.constant dense<0.000000e+00> : vector<1xf32>
      %585 = vector.multi_reduction <add>, %584, %cst_191 [1] : vector<1x32xf32> to vector<1xf32>
      %586 = vector.shape_cast %585 : vector<1xf32> to vector<1x1xf32>
      %587 = math.sqrt %586 : vector<1x1xf32>
      %cst_192 = arith.constant 1.000000e-15 : f32
      %588 = vector.broadcast %cst_192 : f32 to vector<1x1xf32>
      %589 = arith.maximumf %587, %588 : vector<1x1xf32>
      %cst_193 = arith.constant 1.000000e+00 : f32
      %590 = vector.broadcast %cst_193 : f32 to vector<1x1xf32>
      %591 = arith.divf %582, %590 : vector<1x1xf32>
      %cst_194 = arith.constant 1.00000012 : f32
      %592 = vector.broadcast %cst_194 : f32 to vector<1x1xf32>
      %593 = arith.maximumf %591, %592 : vector<1x1xf32>
      %cst_195 = arith.constant 1.00000012 : f32
      %594 = vector.broadcast %cst_195 : f32 to vector<1x1xf32>
      %595 = arith.maximumf %593, %594 : vector<1x1xf32>
      %596 = arith.mulf %595, %595 : vector<1x1xf32>
      %cst_196 = arith.constant 1.000000e+00 : f32
      %597 = vector.broadcast %cst_196 : f32 to vector<1x1xf32>
      %598 = arith.subf %596, %597 : vector<1x1xf32>
      %599 = math.sqrt %598 : vector<1x1xf32>
      %600 = arith.addf %595, %599 : vector<1x1xf32>
      %601 = math.log %600 : vector<1x1xf32>
      %cst_197 = arith.constant 1.000000e+00 : f32
      %602 = vector.broadcast %cst_197 : f32 to vector<1x1xf32>
      %603 = arith.mulf %602, %601 : vector<1x1xf32>
      %604 = vector.broadcast %603 : vector<1x1xf32> to vector<1x32xf32>
      %605 = arith.mulf %604, %583 : vector<1x32xf32>
      %606 = vector.broadcast %589 : vector<1x1xf32> to vector<1x32xf32>
      %607 = arith.divf %605, %606 : vector<1x32xf32>
      %608 = arith.mulf %573, %573 : vector<2x32xf32>
      %cst_198 = arith.constant dense<0.000000e+00> : vector<2xf32>
      %609 = vector.multi_reduction <add>, %608, %cst_198 [1] : vector<2x32xf32> to vector<2xf32>
      %610 = vector.shape_cast %609 : vector<2xf32> to vector<2x1xf32>
      %611 = math.sqrt %610 : vector<2x1xf32>
      %cst_199 = arith.constant 1.000000e-15 : f32
      %612 = vector.broadcast %cst_199 : f32 to vector<2x1xf32>
      %613 = arith.maximumf %611, %612 : vector<2x1xf32>
      %614 = vector.broadcast %613 : vector<2x1xf32> to vector<2x32xf32>
      %615 = arith.divf %573, %614 : vector<2x32xf32>
      %616 = vector.broadcast %607 : vector<1x32xf32> to vector<2x32xf32>
      %617 = arith.mulf %615, %616 : vector<2x32xf32>
      %cst_200 = arith.constant dense<0.000000e+00> : vector<2xf32>
      %618 = vector.multi_reduction <add>, %617, %cst_200 [1] : vector<2x32xf32> to vector<2xf32>
      %619 = vector.shape_cast %618 : vector<2xf32> to vector<2x1xf32>
      %cst_201 = arith.constant 1.000000e+00 : f32
      %620 = vector.broadcast %cst_201 : f32 to vector<2x1xf32>
      %621 = arith.divf %619, %620 : vector<2x1xf32>
      %cst_202 = arith.constant 1.000000e+00 : f32
      %622 = vector.broadcast %cst_202 : f32 to vector<2x1xf32>
      %623 = arith.subf %622, %581 : vector<2x1xf32>
      %624 = arith.mulf %621, %623 : vector<2x1xf32>
      %625 = vector.broadcast %624 : vector<2x1xf32> to vector<2x32xf32>
      %626 = arith.mulf %625, %615 : vector<2x32xf32>
      %627 = vector.broadcast %607 : vector<1x32xf32> to vector<2x32xf32>
      %628 = arith.subf %627, %626 : vector<2x32xf32>
      %629 = arith.mulf %573, %628 : vector<2x32xf32>
      %cst_203 = arith.constant dense<0.000000e+00> : vector<2xf32>
      %630 = vector.multi_reduction <add>, %629, %cst_203 [1] : vector<2x32xf32> to vector<2xf32>
      %631 = vector.shape_cast %630 : vector<2xf32> to vector<2x1xf32>
      %cst_204 = arith.constant 1.000000e-07 : f32
      %632 = vector.broadcast %cst_204 : f32 to vector<2x1xf32>
      %633 = arith.maximumf %581, %632 : vector<2x1xf32>
      %634 = arith.divf %631, %633 : vector<2x1xf32>
      %635 = arith.mulf %628, %628 : vector<2x32xf32>
      %cst_205 = arith.constant dense<0.000000e+00> : vector<2xf32>
      %636 = vector.multi_reduction <add>, %635, %cst_205 [1] : vector<2x32xf32> to vector<2xf32>
      %637 = vector.shape_cast %636 : vector<2xf32> to vector<2x1xf32>
      %638 = arith.mulf %634, %634 : vector<2x1xf32>
      %639 = arith.subf %637, %638 : vector<2x1xf32>
      %cst_206 = arith.constant 1.000000e-07 : f32
      %640 = vector.broadcast %cst_206 : f32 to vector<2x1xf32>
      %641 = arith.maximumf %639, %640 : vector<2x1xf32>
      %642 = math.sqrt %641 : vector<2x1xf32>
      %cst_207 = arith.constant 1.000000e+06 : f32
      %643 = vector.broadcast %cst_207 : f32 to vector<2x1xf32>
      %644 = arith.minimumf %642, %643 : vector<2x1xf32>
      %cst_208 = arith.constant 1.000000e+00 : f32
      %645 = vector.broadcast %cst_208 : f32 to vector<2x1xf32>
      %646 = arith.divf %644, %645 : vector<2x1xf32>
      %cst_209 = arith.constant 1.000000e-15 : f32
      %647 = vector.broadcast %cst_209 : f32 to vector<2x1xf32>
      %648 = arith.maximumf %646, %647 : vector<2x1xf32>
      %cst_210 = arith.constant -8.500000e+01 : f32
      %cst_211 = arith.constant 8.500000e+01 : f32
      %649 = vector.broadcast %cst_210 : f32 to vector<2x1xf32>
      %650 = arith.maximumf %649, %648 : vector<2x1xf32>
      %651 = vector.broadcast %cst_211 : f32 to vector<2x1xf32>
      %652 = arith.minimumf %651, %650 : vector<2x1xf32>
      %653 = math.exp %652 : vector<2x1xf32>
      %cst_212 = arith.constant 1.000000e+00 : f32
      %654 = vector.broadcast %cst_212 : f32 to vector<2x1xf32>
      %655 = arith.divf %654, %653 : vector<2x1xf32>
      %656 = arith.addf %653, %655 : vector<2x1xf32>
      %cst_213 = arith.constant 5.000000e-01 : f32
      %657 = vector.broadcast %cst_213 : f32 to vector<2x1xf32>
      %658 = arith.mulf %657, %656 : vector<2x1xf32>
      %659 = arith.subf %653, %655 : vector<2x1xf32>
      %cst_214 = arith.constant 5.000000e-01 : f32
      %660 = vector.broadcast %cst_214 : f32 to vector<2x1xf32>
      %661 = arith.mulf %660, %659 : vector<2x1xf32>
      %662 = vector.broadcast %658 : vector<2x1xf32> to vector<2x32xf32>
      %663 = arith.mulf %662, %573 : vector<2x32xf32>
      %664 = arith.divf %661, %648 : vector<2x1xf32>
      %665 = vector.broadcast %664 : vector<2x1xf32> to vector<2x32xf32>
      %666 = arith.mulf %665, %628 : vector<2x32xf32>
      %667 = arith.addf %663, %666 : vector<2x32xf32>
      %668 = arith.mulf %667, %667 : vector<2x32xf32>
      %cst_215 = arith.constant dense<0.000000e+00> : vector<2xf32>
      %669 = vector.multi_reduction <add>, %668, %cst_215 [1] : vector<2x32xf32> to vector<2xf32>
      %670 = vector.shape_cast %669 : vector<2xf32> to vector<2x1xf32>
      %cst_216 = arith.constant 1.000000e+00 : f32
      %671 = vector.broadcast %cst_216 : f32 to vector<2x1xf32>
      %672 = arith.addf %671, %670 : vector<2x1xf32>
      %cst_217 = arith.constant 1.000000e-07 : f32
      %673 = vector.broadcast %cst_217 : f32 to vector<2x1xf32>
      %674 = arith.maximumf %672, %673 : vector<2x1xf32>
      %675 = math.sqrt %674 : vector<2x1xf32>
      %676 = vector.extract_strided_slice %5 {offsets = [1, 0], sizes = [1, 1], strides = [1, 1]} : vector<3x1xf32> to vector<1x1xf32>
      %677 = vector.extract_strided_slice %6 {offsets = [1, 0], sizes = [1, 32], strides = [1, 1]} : vector<3x32xf32> to vector<1x32xf32>
      %678 = arith.mulf %677, %677 : vector<1x32xf32>
      %cst_218 = arith.constant dense<0.000000e+00> : vector<1xf32>
      %679 = vector.multi_reduction <add>, %678, %cst_218 [1] : vector<1x32xf32> to vector<1xf32>
      %680 = vector.shape_cast %679 : vector<1xf32> to vector<1x1xf32>
      %681 = math.sqrt %680 : vector<1x1xf32>
      %cst_219 = arith.constant 1.000000e-15 : f32
      %682 = vector.broadcast %cst_219 : f32 to vector<1x1xf32>
      %683 = arith.maximumf %681, %682 : vector<1x1xf32>
      %cst_220 = arith.constant 1.000000e+00 : f32
      %684 = vector.broadcast %cst_220 : f32 to vector<1x1xf32>
      %685 = arith.divf %676, %684 : vector<1x1xf32>
      %cst_221 = arith.constant 1.00000012 : f32
      %686 = vector.broadcast %cst_221 : f32 to vector<1x1xf32>
      %687 = arith.maximumf %685, %686 : vector<1x1xf32>
      %cst_222 = arith.constant 1.00000012 : f32
      %688 = vector.broadcast %cst_222 : f32 to vector<1x1xf32>
      %689 = arith.maximumf %687, %688 : vector<1x1xf32>
      %690 = arith.mulf %689, %689 : vector<1x1xf32>
      %cst_223 = arith.constant 1.000000e+00 : f32
      %691 = vector.broadcast %cst_223 : f32 to vector<1x1xf32>
      %692 = arith.subf %690, %691 : vector<1x1xf32>
      %693 = math.sqrt %692 : vector<1x1xf32>
      %694 = arith.addf %689, %693 : vector<1x1xf32>
      %695 = math.log %694 : vector<1x1xf32>
      %cst_224 = arith.constant 1.000000e+00 : f32
      %696 = vector.broadcast %cst_224 : f32 to vector<1x1xf32>
      %697 = arith.mulf %696, %695 : vector<1x1xf32>
      %698 = vector.broadcast %697 : vector<1x1xf32> to vector<1x32xf32>
      %699 = arith.mulf %698, %677 : vector<1x32xf32>
      %700 = vector.broadcast %683 : vector<1x1xf32> to vector<1x32xf32>
      %701 = arith.divf %699, %700 : vector<1x32xf32>
      %702 = arith.mulf %667, %667 : vector<2x32xf32>
      %cst_225 = arith.constant dense<0.000000e+00> : vector<2xf32>
      %703 = vector.multi_reduction <add>, %702, %cst_225 [1] : vector<2x32xf32> to vector<2xf32>
      %704 = vector.shape_cast %703 : vector<2xf32> to vector<2x1xf32>
      %705 = math.sqrt %704 : vector<2x1xf32>
      %cst_226 = arith.constant 1.000000e-15 : f32
      %706 = vector.broadcast %cst_226 : f32 to vector<2x1xf32>
      %707 = arith.maximumf %705, %706 : vector<2x1xf32>
      %708 = vector.broadcast %707 : vector<2x1xf32> to vector<2x32xf32>
      %709 = arith.divf %667, %708 : vector<2x32xf32>
      %710 = vector.broadcast %701 : vector<1x32xf32> to vector<2x32xf32>
      %711 = arith.mulf %709, %710 : vector<2x32xf32>
      %cst_227 = arith.constant dense<0.000000e+00> : vector<2xf32>
      %712 = vector.multi_reduction <add>, %711, %cst_227 [1] : vector<2x32xf32> to vector<2xf32>
      %713 = vector.shape_cast %712 : vector<2xf32> to vector<2x1xf32>
      %cst_228 = arith.constant 1.000000e+00 : f32
      %714 = vector.broadcast %cst_228 : f32 to vector<2x1xf32>
      %715 = arith.divf %713, %714 : vector<2x1xf32>
      %cst_229 = arith.constant 1.000000e+00 : f32
      %716 = vector.broadcast %cst_229 : f32 to vector<2x1xf32>
      %717 = arith.subf %716, %675 : vector<2x1xf32>
      %718 = arith.mulf %715, %717 : vector<2x1xf32>
      %719 = vector.broadcast %718 : vector<2x1xf32> to vector<2x32xf32>
      %720 = arith.mulf %719, %709 : vector<2x32xf32>
      %721 = vector.broadcast %701 : vector<1x32xf32> to vector<2x32xf32>
      %722 = arith.subf %721, %720 : vector<2x32xf32>
      %723 = arith.mulf %667, %722 : vector<2x32xf32>
      %cst_230 = arith.constant dense<0.000000e+00> : vector<2xf32>
      %724 = vector.multi_reduction <add>, %723, %cst_230 [1] : vector<2x32xf32> to vector<2xf32>
      %725 = vector.shape_cast %724 : vector<2xf32> to vector<2x1xf32>
      %cst_231 = arith.constant 1.000000e-07 : f32
      %726 = vector.broadcast %cst_231 : f32 to vector<2x1xf32>
      %727 = arith.maximumf %675, %726 : vector<2x1xf32>
      %728 = arith.divf %725, %727 : vector<2x1xf32>
      %729 = arith.mulf %722, %722 : vector<2x32xf32>
      %cst_232 = arith.constant dense<0.000000e+00> : vector<2xf32>
      %730 = vector.multi_reduction <add>, %729, %cst_232 [1] : vector<2x32xf32> to vector<2xf32>
      %731 = vector.shape_cast %730 : vector<2xf32> to vector<2x1xf32>
      %732 = arith.mulf %728, %728 : vector<2x1xf32>
      %733 = arith.subf %731, %732 : vector<2x1xf32>
      %cst_233 = arith.constant 1.000000e-07 : f32
      %734 = vector.broadcast %cst_233 : f32 to vector<2x1xf32>
      %735 = arith.maximumf %733, %734 : vector<2x1xf32>
      %736 = math.sqrt %735 : vector<2x1xf32>
      %cst_234 = arith.constant 1.000000e+06 : f32
      %737 = vector.broadcast %cst_234 : f32 to vector<2x1xf32>
      %738 = arith.minimumf %736, %737 : vector<2x1xf32>
      %cst_235 = arith.constant 1.000000e+00 : f32
      %739 = vector.broadcast %cst_235 : f32 to vector<2x1xf32>
      %740 = arith.divf %738, %739 : vector<2x1xf32>
      %cst_236 = arith.constant 1.000000e-15 : f32
      %741 = vector.broadcast %cst_236 : f32 to vector<2x1xf32>
      %742 = arith.maximumf %740, %741 : vector<2x1xf32>
      %cst_237 = arith.constant -8.500000e+01 : f32
      %cst_238 = arith.constant 8.500000e+01 : f32
      %743 = vector.broadcast %cst_237 : f32 to vector<2x1xf32>
      %744 = arith.maximumf %743, %742 : vector<2x1xf32>
      %745 = vector.broadcast %cst_238 : f32 to vector<2x1xf32>
      %746 = arith.minimumf %745, %744 : vector<2x1xf32>
      %747 = math.exp %746 : vector<2x1xf32>
      %cst_239 = arith.constant 1.000000e+00 : f32
      %748 = vector.broadcast %cst_239 : f32 to vector<2x1xf32>
      %749 = arith.divf %748, %747 : vector<2x1xf32>
      %750 = arith.addf %747, %749 : vector<2x1xf32>
      %cst_240 = arith.constant 5.000000e-01 : f32
      %751 = vector.broadcast %cst_240 : f32 to vector<2x1xf32>
      %752 = arith.mulf %751, %750 : vector<2x1xf32>
      %753 = arith.subf %747, %749 : vector<2x1xf32>
      %cst_241 = arith.constant 5.000000e-01 : f32
      %754 = vector.broadcast %cst_241 : f32 to vector<2x1xf32>
      %755 = arith.mulf %754, %753 : vector<2x1xf32>
      %756 = vector.broadcast %752 : vector<2x1xf32> to vector<2x32xf32>
      %757 = arith.mulf %756, %667 : vector<2x32xf32>
      %758 = arith.divf %755, %742 : vector<2x1xf32>
      %759 = vector.broadcast %758 : vector<2x1xf32> to vector<2x32xf32>
      %760 = arith.mulf %759, %722 : vector<2x32xf32>
      %761 = arith.addf %757, %760 : vector<2x32xf32>
      %762 = arith.mulf %761, %761 : vector<2x32xf32>
      %cst_242 = arith.constant dense<0.000000e+00> : vector<2xf32>
      %763 = vector.multi_reduction <add>, %762, %cst_242 [1] : vector<2x32xf32> to vector<2xf32>
      %764 = vector.shape_cast %763 : vector<2xf32> to vector<2x1xf32>
      %cst_243 = arith.constant 1.000000e+00 : f32
      %765 = vector.broadcast %cst_243 : f32 to vector<2x1xf32>
      %766 = arith.addf %765, %764 : vector<2x1xf32>
      %cst_244 = arith.constant 1.000000e-07 : f32
      %767 = vector.broadcast %cst_244 : f32 to vector<2x1xf32>
      %768 = arith.maximumf %766, %767 : vector<2x1xf32>
      %769 = math.sqrt %768 : vector<2x1xf32>
      %cst_245 = arith.constant 0.000000e+00 : f32
      %770 = vector.broadcast %cst_245 : f32 to vector<2x32xf32>
      %771 = arith.subf %770, %arg15 : vector<2x32xf32>
      %772 = arith.mulf %771, %771 : vector<2x32xf32>
      %cst_246 = arith.constant dense<0.000000e+00> : vector<2xf32>
      %773 = vector.multi_reduction <add>, %772, %cst_246 [1] : vector<2x32xf32> to vector<2xf32>
      %774 = vector.shape_cast %773 : vector<2xf32> to vector<2x1xf32>
      %cst_247 = arith.constant 1.000000e+00 : f32
      %775 = vector.broadcast %cst_247 : f32 to vector<2x1xf32>
      %776 = arith.addf %775, %774 : vector<2x1xf32>
      %cst_248 = arith.constant 1.000000e-07 : f32
      %777 = vector.broadcast %cst_248 : f32 to vector<2x1xf32>
      %778 = arith.maximumf %776, %777 : vector<2x1xf32>
      %779 = math.sqrt %778 : vector<2x1xf32>
      %780 = arith.mulf %761, %761 : vector<2x32xf32>
      %cst_249 = arith.constant dense<0.000000e+00> : vector<2xf32>
      %781 = vector.multi_reduction <add>, %780, %cst_249 [1] : vector<2x32xf32> to vector<2xf32>
      %782 = vector.shape_cast %781 : vector<2xf32> to vector<2x1xf32>
      %783 = math.sqrt %782 : vector<2x1xf32>
      %cst_250 = arith.constant 1.000000e-15 : f32
      %784 = vector.broadcast %cst_250 : f32 to vector<2x1xf32>
      %785 = arith.maximumf %783, %784 : vector<2x1xf32>
      %cst_251 = arith.constant 1.000000e+00 : f32
      %786 = vector.broadcast %cst_251 : f32 to vector<2x1xf32>
      %787 = arith.divf %769, %786 : vector<2x1xf32>
      %cst_252 = arith.constant 1.00000012 : f32
      %788 = vector.broadcast %cst_252 : f32 to vector<2x1xf32>
      %789 = arith.maximumf %787, %788 : vector<2x1xf32>
      %cst_253 = arith.constant 1.00000012 : f32
      %790 = vector.broadcast %cst_253 : f32 to vector<2x1xf32>
      %791 = arith.maximumf %789, %790 : vector<2x1xf32>
      %792 = arith.mulf %791, %791 : vector<2x1xf32>
      %cst_254 = arith.constant 1.000000e+00 : f32
      %793 = vector.broadcast %cst_254 : f32 to vector<2x1xf32>
      %794 = arith.subf %792, %793 : vector<2x1xf32>
      %795 = math.sqrt %794 : vector<2x1xf32>
      %796 = arith.addf %791, %795 : vector<2x1xf32>
      %797 = math.log %796 : vector<2x1xf32>
      %cst_255 = arith.constant 1.000000e+00 : f32
      %798 = vector.broadcast %cst_255 : f32 to vector<2x1xf32>
      %799 = arith.mulf %798, %797 : vector<2x1xf32>
      %800 = vector.broadcast %799 : vector<2x1xf32> to vector<2x32xf32>
      %801 = arith.mulf %800, %761 : vector<2x32xf32>
      %802 = vector.broadcast %785 : vector<2x1xf32> to vector<2x32xf32>
      %803 = arith.divf %801, %802 : vector<2x32xf32>
      %804 = arith.mulf %771, %771 : vector<2x32xf32>
      %cst_256 = arith.constant dense<0.000000e+00> : vector<2xf32>
      %805 = vector.multi_reduction <add>, %804, %cst_256 [1] : vector<2x32xf32> to vector<2xf32>
      %806 = vector.shape_cast %805 : vector<2xf32> to vector<2x1xf32>
      %807 = math.sqrt %806 : vector<2x1xf32>
      %cst_257 = arith.constant 1.000000e-15 : f32
      %808 = vector.broadcast %cst_257 : f32 to vector<2x1xf32>
      %809 = arith.maximumf %807, %808 : vector<2x1xf32>
      %810 = vector.broadcast %809 : vector<2x1xf32> to vector<2x32xf32>
      %811 = arith.divf %771, %810 : vector<2x32xf32>
      %812 = arith.mulf %811, %803 : vector<2x32xf32>
      %cst_258 = arith.constant dense<0.000000e+00> : vector<2xf32>
      %813 = vector.multi_reduction <add>, %812, %cst_258 [1] : vector<2x32xf32> to vector<2xf32>
      %814 = vector.shape_cast %813 : vector<2xf32> to vector<2x1xf32>
      %cst_259 = arith.constant 1.000000e+00 : f32
      %815 = vector.broadcast %cst_259 : f32 to vector<2x1xf32>
      %816 = arith.divf %814, %815 : vector<2x1xf32>
      %cst_260 = arith.constant 1.000000e+00 : f32
      %817 = vector.broadcast %cst_260 : f32 to vector<2x1xf32>
      %818 = arith.subf %817, %779 : vector<2x1xf32>
      %819 = arith.mulf %816, %818 : vector<2x1xf32>
      %820 = vector.broadcast %819 : vector<2x1xf32> to vector<2x32xf32>
      %821 = arith.mulf %820, %811 : vector<2x32xf32>
      %822 = arith.subf %803, %821 : vector<2x32xf32>
      %823 = arith.mulf %771, %822 : vector<2x32xf32>
      %cst_261 = arith.constant dense<0.000000e+00> : vector<2xf32>
      %824 = vector.multi_reduction <add>, %823, %cst_261 [1] : vector<2x32xf32> to vector<2xf32>
      %825 = vector.shape_cast %824 : vector<2xf32> to vector<2x1xf32>
      %cst_262 = arith.constant 1.000000e-07 : f32
      %826 = vector.broadcast %cst_262 : f32 to vector<2x1xf32>
      %827 = arith.maximumf %779, %826 : vector<2x1xf32>
      %828 = arith.divf %825, %827 : vector<2x1xf32>
      %829 = arith.mulf %822, %822 : vector<2x32xf32>
      %cst_263 = arith.constant dense<0.000000e+00> : vector<2xf32>
      %830 = vector.multi_reduction <add>, %829, %cst_263 [1] : vector<2x32xf32> to vector<2xf32>
      %831 = vector.shape_cast %830 : vector<2xf32> to vector<2x1xf32>
      %832 = arith.mulf %828, %828 : vector<2x1xf32>
      %833 = arith.subf %831, %832 : vector<2x1xf32>
      %cst_264 = arith.constant 1.000000e-07 : f32
      %834 = vector.broadcast %cst_264 : f32 to vector<2x1xf32>
      %835 = arith.maximumf %833, %834 : vector<2x1xf32>
      %836 = math.sqrt %835 : vector<2x1xf32>
      %cst_265 = arith.constant 1.000000e+06 : f32
      %837 = vector.broadcast %cst_265 : f32 to vector<2x1xf32>
      %838 = arith.minimumf %836, %837 : vector<2x1xf32>
      %cst_266 = arith.constant 1.000000e+00 : f32
      %839 = vector.broadcast %cst_266 : f32 to vector<2x1xf32>
      %840 = arith.divf %838, %839 : vector<2x1xf32>
      %cst_267 = arith.constant 1.000000e-15 : f32
      %841 = vector.broadcast %cst_267 : f32 to vector<2x1xf32>
      %842 = arith.maximumf %840, %841 : vector<2x1xf32>
      %cst_268 = arith.constant -8.500000e+01 : f32
      %cst_269 = arith.constant 8.500000e+01 : f32
      %843 = vector.broadcast %cst_268 : f32 to vector<2x1xf32>
      %844 = arith.maximumf %843, %842 : vector<2x1xf32>
      %845 = vector.broadcast %cst_269 : f32 to vector<2x1xf32>
      %846 = arith.minimumf %845, %844 : vector<2x1xf32>
      %847 = math.exp %846 : vector<2x1xf32>
      %cst_270 = arith.constant 1.000000e+00 : f32
      %848 = vector.broadcast %cst_270 : f32 to vector<2x1xf32>
      %849 = arith.divf %848, %847 : vector<2x1xf32>
      %850 = arith.addf %847, %849 : vector<2x1xf32>
      %cst_271 = arith.constant 5.000000e-01 : f32
      %851 = vector.broadcast %cst_271 : f32 to vector<2x1xf32>
      %852 = arith.mulf %851, %850 : vector<2x1xf32>
      %853 = arith.subf %847, %849 : vector<2x1xf32>
      %cst_272 = arith.constant 5.000000e-01 : f32
      %854 = vector.broadcast %cst_272 : f32 to vector<2x1xf32>
      %855 = arith.mulf %854, %853 : vector<2x1xf32>
      %856 = vector.broadcast %852 : vector<2x1xf32> to vector<2x32xf32>
      %857 = arith.mulf %856, %771 : vector<2x32xf32>
      %858 = arith.divf %855, %842 : vector<2x1xf32>
      %859 = vector.broadcast %858 : vector<2x1xf32> to vector<2x32xf32>
      %860 = arith.mulf %859, %822 : vector<2x32xf32>
      %861 = arith.addf %857, %860 : vector<2x32xf32>
      %862 = arith.mulf %861, %861 : vector<2x32xf32>
      %cst_273 = arith.constant dense<0.000000e+00> : vector<2xf32>
      %863 = vector.multi_reduction <add>, %862, %cst_273 [1] : vector<2x32xf32> to vector<2xf32>
      %864 = vector.shape_cast %863 : vector<2xf32> to vector<2x1xf32>
      %cst_274 = arith.constant 1.000000e+00 : f32
      %865 = vector.broadcast %cst_274 : f32 to vector<2x1xf32>
      %866 = arith.addf %865, %864 : vector<2x1xf32>
      %cst_275 = arith.constant 1.000000e-07 : f32
      %867 = vector.broadcast %cst_275 : f32 to vector<2x1xf32>
      %868 = arith.maximumf %866, %867 : vector<2x1xf32>
      %869 = math.sqrt %868 : vector<2x1xf32>
      %870 = arith.mulf %861, %861 : vector<2x32xf32>
      %cst_276 = arith.constant dense<0.000000e+00> : vector<2xf32>
      %871 = vector.multi_reduction <add>, %870, %cst_276 [1] : vector<2x32xf32> to vector<2xf32>
      %872 = vector.shape_cast %871 : vector<2xf32> to vector<2x1xf32>
      %873 = math.sqrt %872 : vector<2x1xf32>
      %cst_277 = arith.constant 1.000000e-15 : f32
      %874 = vector.broadcast %cst_277 : f32 to vector<2x1xf32>
      %875 = arith.maximumf %873, %874 : vector<2x1xf32>
      %cst_278 = arith.constant 1.000000e+00 : f32
      %876 = vector.broadcast %cst_278 : f32 to vector<2x1xf32>
      %877 = arith.divf %869, %876 : vector<2x1xf32>
      %cst_279 = arith.constant 1.00000012 : f32
      %878 = vector.broadcast %cst_279 : f32 to vector<2x1xf32>
      %879 = arith.maximumf %877, %878 : vector<2x1xf32>
      %cst_280 = arith.constant 1.00000012 : f32
      %880 = vector.broadcast %cst_280 : f32 to vector<2x1xf32>
      %881 = arith.maximumf %879, %880 : vector<2x1xf32>
      %882 = arith.mulf %881, %881 : vector<2x1xf32>
      %cst_281 = arith.constant 1.000000e+00 : f32
      %883 = vector.broadcast %cst_281 : f32 to vector<2x1xf32>
      %884 = arith.subf %882, %883 : vector<2x1xf32>
      %885 = math.sqrt %884 : vector<2x1xf32>
      %886 = arith.addf %881, %885 : vector<2x1xf32>
      %887 = math.log %886 : vector<2x1xf32>
      %cst_282 = arith.constant 1.000000e+00 : f32
      %888 = vector.broadcast %cst_282 : f32 to vector<2x1xf32>
      %889 = arith.mulf %888, %887 : vector<2x1xf32>
      %890 = vector.broadcast %889 : vector<2x1xf32> to vector<2x32xf32>
      %891 = arith.mulf %890, %861 : vector<2x32xf32>
      %892 = vector.broadcast %875 : vector<2x1xf32> to vector<2x32xf32>
      %893 = arith.divf %891, %892 : vector<2x32xf32>
      %894 = arith.mulf %296, %893 : vector<2x32xf32>
      %895 = arith.mulf %arg15, %arg15 : vector<2x32xf32>
      %cst_283 = arith.constant dense<0.000000e+00> : vector<2xf32>
      %896 = vector.multi_reduction <add>, %895, %cst_283 [1] : vector<2x32xf32> to vector<2xf32>
      %897 = vector.shape_cast %896 : vector<2xf32> to vector<2x1xf32>
      %898 = math.sqrt %897 : vector<2x1xf32>
      %cst_284 = arith.constant 1.000000e-15 : f32
      %899 = vector.broadcast %cst_284 : f32 to vector<2x1xf32>
      %900 = arith.maximumf %898, %899 : vector<2x1xf32>
      %901 = vector.broadcast %900 : vector<2x1xf32> to vector<2x32xf32>
      %902 = arith.divf %arg15, %901 : vector<2x32xf32>
      %903 = arith.mulf %902, %894 : vector<2x32xf32>
      %cst_285 = arith.constant dense<0.000000e+00> : vector<2xf32>
      %904 = vector.multi_reduction <add>, %903, %cst_285 [1] : vector<2x32xf32> to vector<2xf32>
      %905 = vector.shape_cast %904 : vector<2xf32> to vector<2x1xf32>
      %cst_286 = arith.constant 1.000000e+00 : f32
      %906 = vector.broadcast %cst_286 : f32 to vector<2x1xf32>
      %907 = arith.divf %905, %906 : vector<2x1xf32>
      %cst_287 = arith.constant 1.000000e+00 : f32
      %908 = vector.broadcast %cst_287 : f32 to vector<2x1xf32>
      %909 = arith.subf %908, %arg14 : vector<2x1xf32>
      %910 = arith.mulf %907, %909 : vector<2x1xf32>
      %911 = vector.broadcast %910 : vector<2x1xf32> to vector<2x32xf32>
      %912 = arith.mulf %911, %902 : vector<2x32xf32>
      %913 = arith.subf %894, %912 : vector<2x32xf32>
      %914 = arith.mulf %arg15, %913 : vector<2x32xf32>
      %cst_288 = arith.constant dense<0.000000e+00> : vector<2xf32>
      %915 = vector.multi_reduction <add>, %914, %cst_288 [1] : vector<2x32xf32> to vector<2xf32>
      %916 = vector.shape_cast %915 : vector<2xf32> to vector<2x1xf32>
      %cst_289 = arith.constant 1.000000e-07 : f32
      %917 = vector.broadcast %cst_289 : f32 to vector<2x1xf32>
      %918 = arith.maximumf %arg14, %917 : vector<2x1xf32>
      %919 = arith.divf %916, %918 : vector<2x1xf32>
      %920 = arith.mulf %913, %913 : vector<2x32xf32>
      %cst_290 = arith.constant dense<0.000000e+00> : vector<2xf32>
      %921 = vector.multi_reduction <add>, %920, %cst_290 [1] : vector<2x32xf32> to vector<2xf32>
      %922 = vector.shape_cast %921 : vector<2xf32> to vector<2x1xf32>
      %923 = arith.mulf %919, %919 : vector<2x1xf32>
      %924 = arith.subf %922, %923 : vector<2x1xf32>
      %cst_291 = arith.constant 1.000000e-07 : f32
      %925 = vector.broadcast %cst_291 : f32 to vector<2x1xf32>
      %926 = arith.maximumf %924, %925 : vector<2x1xf32>
      %927 = math.sqrt %926 : vector<2x1xf32>
      %cst_292 = arith.constant 1.000000e+06 : f32
      %928 = vector.broadcast %cst_292 : f32 to vector<2x1xf32>
      %929 = arith.minimumf %927, %928 : vector<2x1xf32>
      %cst_293 = arith.constant 1.000000e+00 : f32
      %930 = vector.broadcast %cst_293 : f32 to vector<2x1xf32>
      %931 = arith.divf %929, %930 : vector<2x1xf32>
      %cst_294 = arith.constant 1.000000e-15 : f32
      %932 = vector.broadcast %cst_294 : f32 to vector<2x1xf32>
      %933 = arith.maximumf %931, %932 : vector<2x1xf32>
      %cst_295 = arith.constant -8.500000e+01 : f32
      %cst_296 = arith.constant 8.500000e+01 : f32
      %934 = vector.broadcast %cst_295 : f32 to vector<2x1xf32>
      %935 = arith.maximumf %934, %933 : vector<2x1xf32>
      %936 = vector.broadcast %cst_296 : f32 to vector<2x1xf32>
      %937 = arith.minimumf %936, %935 : vector<2x1xf32>
      %938 = math.exp %937 : vector<2x1xf32>
      %cst_297 = arith.constant 1.000000e+00 : f32
      %939 = vector.broadcast %cst_297 : f32 to vector<2x1xf32>
      %940 = arith.divf %939, %938 : vector<2x1xf32>
      %941 = arith.addf %938, %940 : vector<2x1xf32>
      %cst_298 = arith.constant 5.000000e-01 : f32
      %942 = vector.broadcast %cst_298 : f32 to vector<2x1xf32>
      %943 = arith.mulf %942, %941 : vector<2x1xf32>
      %944 = arith.subf %938, %940 : vector<2x1xf32>
      %cst_299 = arith.constant 5.000000e-01 : f32
      %945 = vector.broadcast %cst_299 : f32 to vector<2x1xf32>
      %946 = arith.mulf %945, %944 : vector<2x1xf32>
      %947 = vector.broadcast %943 : vector<2x1xf32> to vector<2x32xf32>
      %948 = arith.mulf %947, %arg15 : vector<2x32xf32>
      %949 = arith.divf %946, %933 : vector<2x1xf32>
      %950 = vector.broadcast %949 : vector<2x1xf32> to vector<2x32xf32>
      %951 = arith.mulf %950, %913 : vector<2x32xf32>
      %952 = arith.addf %948, %951 : vector<2x32xf32>
      %953 = arith.mulf %952, %952 : vector<2x32xf32>
      %cst_300 = arith.constant dense<0.000000e+00> : vector<2xf32>
      %954 = vector.multi_reduction <add>, %953, %cst_300 [1] : vector<2x32xf32> to vector<2xf32>
      %955 = vector.shape_cast %954 : vector<2xf32> to vector<2x1xf32>
      %cst_301 = arith.constant 1.000000e+00 : f32
      %956 = vector.broadcast %cst_301 : f32 to vector<2x1xf32>
      %957 = arith.addf %956, %955 : vector<2x1xf32>
      %cst_302 = arith.constant 1.000000e-07 : f32
      %958 = vector.broadcast %cst_302 : f32 to vector<2x1xf32>
      %959 = arith.maximumf %957, %958 : vector<2x1xf32>
      %960 = math.sqrt %959 : vector<2x1xf32>
      %961 = arith.index_cast %arg13 : i32 to index
      %c0_303 = arith.constant 0 : index
      %c0_304 = arith.constant 0 : index
      %962 = vector.load %arg9[%961, %c0_303, %c0_304] : memref<16x2x1xf32, #tpu.memory_space<vmem>>, vector<1x2x1xf32>
      %963 = vector.shape_cast %962 : vector<1x2x1xf32> to vector<2x1xf32>
      %964 = vector.shape_cast %960 : vector<2x1xf32> to vector<1x2x1xf32>
      tpu.vector_store %arg9[%961, %c0_303, %c0_304], %964 {strides = array<i32>} : memref<16x2x1xf32, #tpu.memory_space<vmem>>, vector<1x2x1xf32>,
      %965 = arith.index_cast %arg13 : i32 to index
      %c0_305 = arith.constant 0 : index
      %c0_306 = arith.constant 0 : index
      %966 = vector.load %arg10[%965, %c0_305, %c0_306] : memref<16x2x32xf32, #tpu.memory_space<vmem>>, vector<1x2x32xf32>
      %967 = vector.shape_cast %966 : vector<1x2x32xf32> to vector<2x32xf32>
      %968 = vector.shape_cast %952 : vector<2x32xf32> to vector<1x2x32xf32>
      tpu.vector_store %arg10[%965, %c0_305, %c0_306], %968 {strides = array<i32>} : memref<16x2x32xf32, #tpu.memory_space<vmem>>, vector<1x2x32xf32>,
      scf.yield %960, %952 : vector<2x1xf32>, vector<2x32xf32>
    }
    %c16_i32_13 = arith.constant 16 : i32
    %c0_14 = arith.constant 0 : index
    %c0_15 = arith.constant 0 : index
    %11 = vector.load %arg11[%c0_14, %c0_15] : memref<2x1xf32, #tpu.memory_space<vmem>>, vector<2x1xf32>
    tpu.vector_store %arg11[%c0_14, %c0_15], %10#0 {strides = array<i32>} : memref<2x1xf32, #tpu.memory_space<vmem>>, vector<2x1xf32>,
    %c0_16 = arith.constant 0 : index
    %c0_17 = arith.constant 0 : index
    %12 = vector.load %arg12[%c0_16, %c0_17] : memref<2x32xf32, #tpu.memory_space<vmem>>, vector<2x32xf32>
    tpu.vector_store %arg12[%c0_16, %c0_17], %10#1 {strides = array<i32>} : memref<2x32xf32, #tpu.memory_space<vmem>>, vector<2x32xf32>,
    return
  }
  func.func @transform_0(%arg0: i32) -> (i32, i32, i32) {
    %c0_i32 = arith.constant 0 : i32
    %c0_i32_0 = arith.constant 0 : i32
    %c0_i32_1 = arith.constant 0 : i32
    return %arg0, %c0_i32, %c0_i32_0 : i32, i32, i32
  }
  func.func @transform_1(%arg0: i32) -> (i32, i32, i32) {
    %c0_i32 = arith.constant 0 : i32
    %c0_i32_0 = arith.constant 0 : i32
    %c0_i32_1 = arith.constant 0 : i32
    return %arg0, %c0_i32, %c0_i32_0 : i32, i32, i32
  }
  func.func @transform_2(%arg0: i32) -> (i32, i32) {
    %c0_i32 = arith.constant 0 : i32
    %c0_i32_0 = arith.constant 0 : i32
    %c0_i32_1 = arith.constant 0 : i32
    return %c0_i32, %c0_i32_0 : i32, i32
  }
  func.func @transform_3(%arg0: i32) -> (i32, i32) {
    %c0_i32 = arith.constant 0 : i32
    %c0_i32_0 = arith.constant 0 : i32
    %c0_i32_1 = arith.constant 0 : i32
    return %c0_i32, %c0_i32_0 : i32, i32
  }
  func.func @transform_4(%arg0: i32) -> (i32, i32) {
    %c0_i32 = arith.constant 0 : i32
    %c0_i32_0 = arith.constant 0 : i32
    %c0_i32_1 = arith.constant 0 : i32
    return %c0_i32, %c0_i32_0 : i32, i32
  }
  func.func @transform_5(%arg0: i32) -> (i32, i32) {
    %c0_i32 = arith.constant 0 : i32
    %c0_i32_0 = arith.constant 0 : i32
    %c0_i32_1 = arith.constant 0 : i32
    return %c0_i32, %c0_i32_0 : i32, i32
  }
  func.func @transform_6(%arg0: i32) -> (i32, i32) {
    %c0_i32 = arith.constant 0 : i32
    %c0_i32_0 = arith.constant 0 : i32
    %c0_i32_1 = arith.constant 0 : i32
    return %c0_i32, %c0_i32_0 : i32, i32
  }
  func.func @transform_7(%arg0: i32) -> (i32, i32) {
    %c0_i32 = arith.constant 0 : i32
    %c0_i32_0 = arith.constant 0 : i32
    %c0_i32_1 = arith.constant 0 : i32
    return %c0_i32, %c0_i32_0 : i32, i32
  }
  func.func @transform_8(%arg0: i32) -> (i32, i32, i32) {
    %c0_i32 = arith.constant 0 : i32
    %c0_i32_0 = arith.constant 0 : i32
    %c0_i32_1 = arith.constant 0 : i32
    return %arg0, %c0_i32, %c0_i32_0 : i32, i32, i32
  }
  func.func @transform_9(%arg0: i32) -> (i32, i32, i32) {
    %c0_i32 = arith.constant 0 : i32
    %c0_i32_0 = arith.constant 0 : i32
    %c0_i32_1 = arith.constant 0 : i32
    return %arg0, %c0_i32, %c0_i32_0 : i32, i32, i32
  }
}

</mosaic_0001>

<llo_original>
// kernel: _lambda_.1
$region0: #{_lambda_.1}
  #allocation0 [shape = 'u32[]', space=smem, size = 0x4, offset = 0x4, fixed_abs, tag = 'smem constant byte address 0x4 - core index']
  #allocation1 [shape = 'u32[144,128]{1,0:T(1,128)}', space=vmem, size = 0x12000, scoped, tag = 'internal scratch']
  #allocation2 [shape = 'f32[2,1]{1,0:T(2,128)}', space=vmem, size = 0x400, scoped, tag = 'scratch operand']
  #allocation3 [shape = 'f32[2,32]{1,0:T(2,128)}', space=vmem, size = 0x400, scoped, tag = 'scratch operand']
  %s0 = inlined_call_operand.vmem [shape: f32[16,3,1], index: 0, kind: input, shape index: {}]
  %s1 = inlined_call_operand.vmem [shape: f32[16,3,32], index: 1, kind: input, shape index: {}]
  %s2 = inlined_call_operand.vmem [shape: f32[32,64], index: 2, kind: input, shape index: {}]
  %s3 = inlined_call_operand.vmem [shape: f32[32,32], index: 3, kind: input, shape index: {}]
  %s4 = inlined_call_operand.vmem [shape: f32[3,1], index: 4, kind: input, shape index: {}]
  %s5 = inlined_call_operand.vmem [shape: f32[3,32], index: 5, kind: input, shape index: {}]
  %s6 = inlined_call_operand.vmem [shape: f32[2,1], index: 6, kind: input, shape index: {}]
  %s7 = inlined_call_operand.vmem [shape: f32[2,32], index: 7, kind: input, shape index: {}]
  %s8 = inlined_call_operand.vmem [shape: f32[16,2,1], index: 8, kind: output, shape index: {0}]
  %s9 = inlined_call_operand.vmem [shape: f32[16,2,32], index: 9, kind: output, shape index: {1}]
  %10 = xla_tuple %s8, %s9
  %s11 = sld [smem:[#allocation0]]
  $region61: #{_lambda_.1} parent=0
    _
  %s13 = ssub.s32 1, %s11
  %s14 = scalar_select 0, %s13, %s11
  // Predicated region
  $region2: #{_lambda_.1} parent=0 // pred_check
    _
  $region3: #{_lambda_.1} parent=0 // pred_check_branch
    %16 = sbr.rel (0) target = $region5
  $region4: #{_lambda_.1} parent=0 // pred_region
    _
  $region5: #{_lambda_.1} parent=0 // pred_fallthru
    _
  // Predicated region
  $region6: #{_lambda_.1} parent=0 // pred_check
    _
  $region7: #{_lambda_.1} parent=0 // pred_check_branch
    %18 = sbr.rel (0) target = $region9
  $region8: #{_lambda_.1} parent=0 // pred_region
    _
  $region9: #{_lambda_.1} parent=0 // pred_fallthru
    _
  // Predicated region
  $region10: #{_lambda_.1} parent=0 // pred_check
    _
  $region11: #{_lambda_.1} parent=0 // pred_check_branch
    %20 = sbr.rel (0) target = $region13
  $region12: #{_lambda_.1} parent=0 // pred_region
    _
  $region13: #{_lambda_.1} parent=0 // pred_fallthru
    _
  // Predicated region
  $region14: #{_lambda_.1} parent=0 // pred_check
    _
  $region15: #{_lambda_.1} parent=0 // pred_check_branch
    %22 = sbr.rel (0) target = $region17
  $region16: #{_lambda_.1} parent=0 // pred_region
    _
  $region17: #{_lambda_.1} parent=0 // pred_fallthru
    _
  // Predicated region
  $region18: #{_lambda_.1} parent=0 // pred_check
    _
  $region19: #{_lambda_.1} parent=0 // pred_check_branch
    %24 = sbr.rel (0) target = $region21
  $region20: #{_lambda_.1} parent=0 // pred_region
    _
  $region21: #{_lambda_.1} parent=0 // pred_fallthru
    _
  // Predicated region
  $region22: #{_lambda_.1} parent=0 // pred_check
    _
  $region23: #{_lambda_.1} parent=0 // pred_check_branch
    %26 = sbr.rel (0) target = $region25
  $region24: #{_lambda_.1} parent=0 // pred_region
    _
  $region25: #{_lambda_.1} parent=0 // pred_fallthru
    _
  // Predicated region
  $region26: #{_lambda_.1} parent=0 // pred_check
    _
  $region27: #{_lambda_.1} parent=0 // pred_check_branch
    %28 = sbr.rel (0) target = $region29
  $region28: #{_lambda_.1} parent=0 // pred_region
    _
  $region29: #{_lambda_.1} parent=0 // pred_fallthru
    _
  // Predicated region
  $region30: #{_lambda_.1} parent=0 // pred_check
    _
  $region31: #{_lambda_.1} parent=0 // pred_check_branch
    %30 = sbr.rel (0) target = $region33
  $region32: #{_lambda_.1} parent=0 // pred_region
    _
  $region33: #{_lambda_.1} parent=0 // pred_fallthru
    _
  %p31 = scmp.eq.s32.totalorder 0, 0
  // Predicated region
  $region34: #{_lambda_.1} parent=0 // pred_check
    %p32 = pneg %p31
  $region35: #{_lambda_.1} parent=0 // pred_check_branch
    %34 = sbr.rel (%p32) target = $region37
  $region36: #{_lambda_.1} parent=0 // pred_region
    %v35 = vld [vmem:[%s6] sm:$0x3]
    %vm36 = vcmask 1024
    %37 = vst.msk [vmem:[#allocation2] sm:$0x3] %vm36, %v35
    %v38 = vld [vmem:[%s7] sm:$0x3]
    %vm39 = vcmask 254976
    %40 = vst.msk [vmem:[#allocation3] sm:$0x3] %vm39, %v38
  $region37: #{_lambda_.1} parent=0 // pred_fallthru
    _
  %v41 = vld [vmem:[%s2] sm:$0xff]
  %v42 = vld [vmem:[%s2 + $0x8] sm:$0xff]
  %v43 = vld [vmem:[%s2 + $0x10] sm:$0xff]
  %v44 = vld [vmem:[%s2 + $0x18] sm:$0xff]
  %v45 = vld [vmem:[%s3] sm:$0xff]
  %v46 = vld [vmem:[%s3 + $0x8] sm:$0xff]
  %v47 = vld [vmem:[%s3 + $0x10] sm:$0xff]
  %v48 = vld [vmem:[%s3 + $0x18] sm:$0xff]
  %v49 = vld [vmem:[%s4] sm:$0x7]
  %v50 = vld [vmem:[%s5] sm:$0x7]
  %v51 = vld [vmem:[#allocation2] sm:$0x3]
  %v52 = vld [vmem:[#allocation3] sm:$0x3]
  loop: start=0, step=1, limit=16
  $region38: #{_lambda_.1} parent=0 // loop_pre_header
    _
  $region39: #{_lambda_.1} parent=0 // loop_header
    %s54 = sphi 0, %s58
    %p55 = scmp.ge.s32.totalorder %s54, 16
    %v59 = vphi %v51, %v2082
    %v60 = vphi %v52, %v2069
  $region40: #{_lambda_.1} parent=0 // loop_header_branch
    %57 = sbr.rel (%p55) target = $region44
  $region41: #{_lambda_.1} parent=0 // loop_body
    %s61 = smul.u32 %s54, 4
    %s62 = scalar_lea.vmem %s0, %s61
    %v63 = vld [vmem:[%s62] sm:$0x7]
    %s64 = scalar_lea.vmem %s1, %s61
    %v65 = vld [vmem:[%s64] sm:$0x7]
    %v66 = vmul.f32 %v60, %v60
    %vm67 = vcmask 254976
    %v68 = vsel %vm67, %v66, 0.0
    %69 = vadd.xlane.f32.xlu0 %v68
    %v70 = vpop.xlane.xlu0 %69
    %v71 = vrsqrt.pop %v70
    %v72 = vmul.f32 %v70, %v71
    %vm73 = vcmp.eq.f32.partialorder %v70, inf
    %v74 = vsel %vm73, %v70, %v72
    %vm75 = vcmp.eq.f32.partialorder %v70, 0.0
    %v76 = vand.u32 %v70, 2147483648
    %v77 = vsel %vm75, %v76, %v74
    %v78 = vmax.f32 %v77, 1e-15
    %v79 = vmax.f32 %v59, 1.0000001
    %v80 = vmax.f32 %v79, 1.0000001
    %v81 = vmul.f32 %v80, %v80
    %v82 = vsub.f32 %v81, 1.0
    %v83 = vrsqrt.pop %v82
    %v84 = vmul.f32 %v82, %v83
    %vm85 = vcmp.eq.f32.partialorder %v82, inf
    %v86 = vsel %vm85, %v82, %v84
    %vm87 = vcmp.eq.f32.partialorder %v82, 0.0
    %v88 = vand.u32 %v82, 2147483648
    %v89 = vsel %vm87, %v88, %v86
    %v90 = vadd.f32 %v80, %v89
    %v91 = vlog2.pop %v90
    %v92 = vmul.f32 %v91, 0.6931472
    %94 = vset.pattern.permute.xlu0 0
    %95 = vperm.xlu0 %94, %v92
    %v96 = vpop.permute.xlu0 %95
    %v98 = vmul.f32 %v96, %v60
    %v99 = vrcp.pop %v78
    %v100 = vmul.f32 %v98, %v99
    %vm101 = vcmask 261120
    %v103 = vsel %vm101, %v100, 0
    %105 = vmatprep.subr.mxu0 0.0
    %v106 = vand.u32 %v41, 4294901760
    %107 = vmatpush1.msra.mxu0 %v106
    %108 = vmatprep.subr.mxu0 0.0
    %v109 = vand.u32 %v42, 4294901760
    %110 = vmatpush1.msra.mxu0 %v109
    %111 = vmatprep.subr.mxu0 0.0
    %v112 = vand.u32 %v43, 4294901760
    %113 = vmatpush1.msra.mxu0 %v112
    %114 = vmatprep.subr.mxu0 0.0
    %v115 = vand.u32 %v44, 4294901760
    %116 = vmatpush1.msra.mxu0 %v115
    %117 = vmatprep.subr.mxu0 0.0
    %118 = vmatpush1.msra.mxu0 0.0
    %119 = vmatprep.subr.mxu0 0.0
    %120 = vmatpush1.msra.mxu0 0.0
    %121 = vmatprep.subr.mxu0 0.0
    %122 = vmatpush1.msra.mxu0 0.0
    %123 = vmatprep.subr.mxu0 0.0
    %124 = vmatpush1.msra.mxu0 0.0
    %125 = vmatprep.subr.mxu0 0.0
    %126 = vmatpush1.msra.mxu0 0.0
    %127 = vmatprep.subr.mxu0 0.0
    %128 = vmatpush1.msra.mxu0 0.0
    %129 = vmatprep.subr.mxu0 0.0
    %130 = vmatpush1.msra.mxu0 0.0
    %131 = vmatprep.subr.mxu0 0.0
    %132 = vmatpush1.msra.mxu0 0.0
    %133 = vmatprep.subr.mxu0 0.0
    %134 = vmatpush1.msra.mxu0 0.0
    %135 = vmatprep.subr.mxu0 0.0
    %136 = vmatpush1.msra.mxu0 0.0
    %137 = vmatprep.subr.mxu0 0.0
    %138 = vmatpush1.msra.mxu0 0.0
    %139 = vmatprep.subr.mxu0 0.0
    %140 = vmatpush1.msra.mxu0 0.0
    %141 = vmatprep.subr.mxu0 0.0
    %142 = vmatpush1.msra.mxu0 0.0
    %143 = vmatprep.subr.mxu0 0.0
    %144 = vmatpush1.msra.mxu0 0.0
    %145 = vmatprep.subr.mxu0 0.0
    %146 = vmatpush1.msra.mxu0 0.0
    %147 = vmatprep.subr.mxu0 0.0
    %148 = vmatpush1.msra.mxu0 0.0
    %149 = vmatprep.subr.mxu0 0.0
    %150 = vmatpush1.msra.mxu0 0.0
    %151 = vmatprep.subr.mxu0 0.0
    %152 = vmatpush1.msra.mxu0 0.0
    %153 = vmatprep.subr.mxu0 0.0
    %154 = vmatpush1.msra.mxu0 0.0
    %155 = vmatprep.subr.mxu0 0.0
    %156 = vmatpush1.msra.mxu0 0.0
    %157 = vmatprep.subr.mxu0 0.0
    %158 = vmatpush1.msra.mxu0 0.0
    %159 = vmatprep.subr.mxu0 0.0
    %160 = vmatpush1.msra.mxu0 0.0
    %161 = vmatprep.subr.mxu0 0.0
    %162 = vmatpush1.msra.mxu0 0.0
    %163 = vmatprep.subr.mxu0 0.0
    %164 = vmatpush1.msra.mxu0 0.0
    %165 = vmatprep.subr.mxu0 0.0
    %166 = vmatpush1.msra.mxu0 0.0
    %167 = vmatprep.subr.mxu0 0.0
    %168 = vmatpush1.msra.mxu0 0.0
    %169 = vmatprep.subr.mxu0 0.0
    %170 = vmatpush1.msra.mxu0 0.0
    %171 = vmatprep.subr.mxu0 0.0
    %172 = vmatpush1.msra.mxu0 0.0
    %173 = vmatprep.mubr.f32.mxu0 0.0
    %v174 = vand.u32 %v103, 4294901760
    %v175 = vsub.f32 %v103, %v174
    %v176 = vand.u32 %v175, 4294901760
    %v177 = vsub.f32 %v175, %v176
    %v178 = vand.u32 %v177, 4294901760
    %179 = vmatmul.mubr.f32.gmra.mrb[0].mxu0 %v178
    %v180 = vpop.f32.mrb[0].mxu0
    %v181 = vadd.f32 0.0, %v180
    %v182 = vpop.f32.mrb[0].mxu0
    %183 = vdwg.mxu0
    %184 = vmatprep.subr.mxu0 0.0
    %v185 = vand.u32 %v41, 4294901760
    %v186 = vsub.f32 %v41, %v185
    %v187 = vand.u32 %v186, 4294901760
    %v188 = vsub.f32 %v186, %v187
    %v189 = vand.u32 %v188, 4294901760
    %190 = vmatpush1.msra.mxu0 %v189
    %191 = vmatprep.subr.mxu0 0.0
    %v192 = vand.u32 %v42, 4294901760
    %v193 = vsub.f32 %v42, %v192
    %v194 = vand.u32 %v193, 4294901760
    %v195 = vsub.f32 %v193, %v194
    %v196 = vand.u32 %v195, 4294901760
    %197 = vmatpush1.msra.mxu0 %v196
    %198 = vmatprep.subr.mxu0 0.0
    %v199 = vand.u32 %v43, 4294901760
    %v200 = vsub.f32 %v43, %v199
    %v201 = vand.u32 %v200, 4294901760
    %v202 = vsub.f32 %v200, %v201
    %v203 = vand.u32 %v202, 4294901760
    %204 = vmatpush1.msra.mxu0 %v203
    %205 = vmatprep.subr.mxu0 0.0
    %v206 = vand.u32 %v44, 4294901760
    %v207 = vsub.f32 %v44, %v206
    %v208 = vand.u32 %v207, 4294901760
    %v209 = vsub.f32 %v207, %v208
    %v210 = vand.u32 %v209, 4294901760
    %211 = vmatpush1.msra.mxu0 %v210
    %212 = vmatprep.subr.mxu0 0.0
    %213 = vmatpush1.msra.mxu0 0.0
    %214 = vmatprep.subr.mxu0 0.0
    %215 = vmatpush1.msra.mxu0 0.0
    %216 = vmatprep.subr.mxu0 0.0
    %217 = vmatpush1.msra.mxu0 0.0
    %218 = vmatprep.subr.mxu0 0.0
    %219 = vmatpush1.msra.mxu0 0.0
    %220 = vmatprep.subr.mxu0 0.0
    %221 = vmatpush1.msra.mxu0 0.0
    %222 = vmatprep.subr.mxu0 0.0
    %223 = vmatpush1.msra.mxu0 0.0
    %224 = vmatprep.subr.mxu0 0.0
    %225 = vmatpush1.msra.mxu0 0.0
    %226 = vmatprep.subr.mxu0 0.0
    %227 = vmatpush1.msra.mxu0 0.0
    %228 = vmatprep.subr.mxu0 0.0
    %229 = vmatpush1.msra.mxu0 0.0
    %230 = vmatprep.subr.mxu0 0.0
    %231 = vmatpush1.msra.mxu0 0.0
    %232 = vmatprep.subr.mxu0 0.0
    %233 = vmatpush1.msra.mxu0 0.0
    %234 = vmatprep.subr.mxu0 0.0
    %235 = vmatpush1.msra.mxu0 0.0
    %236 = vmatprep.subr.mxu0 0.0
    %237 = vmatpush1.msra.mxu0 0.0
    %238 = vmatprep.subr.mxu0 0.0
    %239 = vmatpush1.msra.mxu0 0.0
    %240 = vmatprep.subr.mxu0 0.0
    %241 = vmatpush1.msra.mxu0 0.0
    %242 = vmatprep.subr.mxu0 0.0
    %243 = vmatpush1.msra.mxu0 0.0
    %244 = vmatprep.subr.mxu0 0.0
    %245 = vmatpush1.msra.mxu0 0.0
    %246 = vmatprep.subr.mxu0 0.0
    %247 = vmatpush1.msra.mxu0 0.0
    %248 = vmatprep.subr.mxu0 0.0
    %249 = vmatpush1.msra.mxu0 0.0
    %250 = vmatprep.subr.mxu0 0.0
    %251 = vmatpush1.msra.mxu0 0.0
    %252 = vmatprep.subr.mxu0 0.0
    %253 = vmatpush1.msra.mxu0 0.0
    %254 = vmatprep.subr.mxu0 0.0
    %255 = vmatpush1.msra.mxu0 0.0
    %256 = vmatprep.subr.mxu0 0.0
    %257 = vmatpush1.msra.mxu0 0.0
    %258 = vmatprep.subr.mxu0 0.0
    %259 = vmatpush1.msra.mxu0 0.0
    %260 = vmatprep.subr.mxu0 0.0
    %261 = vmatpush1.msra.mxu0 0.0
    %262 = vmatprep.subr.mxu0 0.0
    %263 = vmatpush1.msra.mxu0 0.0
    %264 = vmatprep.subr.mxu0 0.0
    %265 = vmatpush1.msra.mxu0 0.0
    %266 = vmatprep.subr.mxu0 0.0
    %267 = vmatpush1.msra.mxu0 0.0
    %268 = vmatprep.mubr.f32.mxu0 0.0
    %v269 = vand.u32 %v103, 4294901760
    %270 = vmatmul.mubr.f32.gmra.mrb[0].mxu0 %v269
    %v271 = vpop.f32.mrb[0].mxu0
    %v272 = vadd.f32 %v181, %v271
    %v273 = vpop.f32.mrb[0].mxu0
    %274 = vdwg.mxu0
    %275 = vmatprep.subr.mxu0 0.0
    %v276 = vand.u32 %v41, 4294901760
    %v277 = vsub.f32 %v41, %v276
    %278 = vmatpush1.msra.mxu0 %v277
    %279 = vmatprep.subr.mxu0 0.0
    %v280 = vand.u32 %v42, 4294901760
    %v281 = vsub.f32 %v42, %v280
    %282 = vmatpush1.msra.mxu0 %v281
    %283 = vmatprep.subr.mxu0 0.0
    %v284 = vand.u32 %v43, 4294901760
    %v285 = vsub.f32 %v43, %v284
    %286 = vmatpush1.msra.mxu0 %v285
    %287 = vmatprep.subr.mxu0 0.0
    %v288 = vand.u32 %v44, 4294901760
    %v289 = vsub.f32 %v44, %v288
    %290 = vmatpush1.msra.mxu0 %v289
    %291 = vmatprep.subr.mxu0 0.0
    %292 = vmatpush1.msra.mxu0 0.0
    %293 = vmatprep.subr.mxu0 0.0
    %294 = vmatpush1.msra.mxu0 0.0
    %295 = vmatprep.subr.mxu0 0.0
    %296 = vmatpush1.msra.mxu0 0.0
    %297 = vmatprep.subr.mxu0 0.0
    %298 = vmatpush1.msra.mxu0 0.0
    %299 = vmatprep.subr.mxu0 0.0
    %300 = vmatpush1.msra.mxu0 0.0
    %301 = vmatprep.subr.mxu0 0.0
    %302 = vmatpush1.msra.mxu0 0.0
    %303 = vmatprep.subr.mxu0 0.0
    %304 = vmatpush1.msra.mxu0 0.0
    %305 = vmatprep.subr.mxu0 0.0
    %306 = vmatpush1.msra.mxu0 0.0
    %307 = vmatprep.subr.mxu0 0.0
    %308 = vmatpush1.msra.mxu0 0.0
    %309 = vmatprep.subr.mxu0 0.0
    %310 = vmatpush1.msra.mxu0 0.0
    %311 = vmatprep.subr.mxu0 0.0
    %312 = vmatpush1.msra.mxu0 0.0
    %313 = vmatprep.subr.mxu0 0.0
    %314 = vmatpush1.msra.mxu0 0.0
    %315 = vmatprep.subr.mxu0 0.0
    %316 = vmatpush1.msra.mxu0 0.0
    %317 = vmatprep.subr.mxu0 0.0
    %318 = vmatpush1.msra.mxu0 0.0
    %319 = vmatprep.subr.mxu0 0.0
    %320 = vmatpush1.msra.mxu0 0.0
    %321 = vmatprep.subr.mxu0 0.0
    %322 = vmatpush1.msra.mxu0 0.0
    %323 = vmatprep.subr.mxu0 0.0
    %324 = vmatpush1.msra.mxu0 0.0
    %325 = vmatprep.subr.mxu0 0.0
    %326 = vmatpush1.msra.mxu0 0.0
    %327 = vmatprep.subr.mxu0 0.0
    %328 = vmatpush1.msra.mxu0 0.0
    %329 = vmatprep.subr.mxu0 0.0
    %330 = vmatpush1.msra.mxu0 0.0
    %331 = vmatprep.subr.mxu0 0.0
    %332 = vmatpush1.msra.mxu0 0.0
    %333 = vmatprep.subr.mxu0 0.0
    %334 = vmatpush1.msra.mxu0 0.0
    %335 = vmatprep.subr.mxu0 0.0
    %336 = vmatpush1.msra.mxu0 0.0
    %337 = vmatprep.subr.mxu0 0.0
    %338 = vmatpush1.msra.mxu0 0.0
    %339 = vmatprep.subr.mxu0 0.0
    %340 = vmatpush1.msra.mxu0 0.0
    %341 = vmatprep.subr.mxu0 0.0
    %342 = vmatpush1.msra.mxu0 0.0
    %343 = vmatprep.subr.mxu0 0.0
    %344 = vmatpush1.msra.mxu0 0.0
    %345 = vmatprep.subr.mxu0 0.0
    %346 = vmatpush1.msra.mxu0 0.0
    %347 = vmatprep.mubr.f32.mxu0 0.0
    %v348 = vand.u32 %v103, 4294901760
    %v349 = vsub.f32 %v103, %v348
    %350 = vmatmul.mubr.f32.gmra.mrb[0].mxu0 %v349
    %v351 = vpop.f32.mrb[0].mxu0
    %v352 = vadd.f32 %v272, %v351
    %v353 = vpop.f32.mrb[0].mxu0
    %354 = vdwg.mxu0
    %355 = vmatprep.subr.mxu0 0.0
    %v356 = vand.u32 %v41, 4294901760
    %357 = vmatpush1.msra.mxu0 %v356
    %358 = vmatprep.subr.mxu0 0.0
    %v359 = vand.u32 %v42, 4294901760
    %360 = vmatpush1.msra.mxu0 %v359
    %361 = vmatprep.subr.mxu0 0.0
    %v362 = vand.u32 %v43, 4294901760
    %363 = vmatpush1.msra.mxu0 %v362
    %364 = vmatprep.subr.mxu0 0.0
    %v365 = vand.u32 %v44, 4294901760
    %366 = vmatpush1.msra.mxu0 %v365
    %367 = vmatprep.subr.mxu0 0.0
    %368 = vmatpush1.msra.mxu0 0.0
    %369 = vmatprep.subr.mxu0 0.0
    %370 = vmatpush1.msra.mxu0 0.0
    %371 = vmatprep.subr.mxu0 0.0
    %372 = vmatpush1.msra.mxu0 0.0
    %373 = vmatprep.subr.mxu0 0.0
    %374 = vmatpush1.msra.mxu0 0.0
    %375 = vmatprep.subr.mxu0 0.0
    %376 = vmatpush1.msra.mxu0 0.0
    %377 = vmatprep.subr.mxu0 0.0
    %378 = vmatpush1.msra.mxu0 0.0
    %379 = vmatprep.subr.mxu0 0.0
    %380 = vmatpush1.msra.mxu0 0.0
    %381 = vmatprep.subr.mxu0 0.0
    %382 = vmatpush1.msra.mxu0 0.0
    %383 = vmatprep.subr.mxu0 0.0
    %384 = vmatpush1.msra.mxu0 0.0
    %385 = vmatprep.subr.mxu0 0.0
    %386 = vmatpush1.msra.mxu0 0.0
    %387 = vmatprep.subr.mxu0 0.0
    %388 = vmatpush1.msra.mxu0 0.0
    %389 = vmatprep.subr.mxu0 0.0
    %390 = vmatpush1.msra.mxu0 0.0
    %391 = vmatprep.subr.mxu0 0.0
    %392 = vmatpush1.msra.mxu0 0.0
    %393 = vmatprep.subr.mxu0 0.0
    %394 = vmatpush1.msra.mxu0 0.0
    %395 = vmatprep.subr.mxu0 0.0
    %396 = vmatpush1.msra.mxu0 0.0
    %397 = vmatprep.subr.mxu0 0.0
    %398 = vmatpush1.msra.mxu0 0.0
    %399 = vmatprep.subr.mxu0 0.0
    %400 = vmatpush1.msra.mxu0 0.0
    %401 = vmatprep.subr.mxu0 0.0
    %402 = vmatpush1.msra.mxu0 0.0
    %403 = vmatprep.subr.mxu0 0.0
    %404 = vmatpush1.msra.mxu0 0.0
    %405 = vmatprep.subr.mxu0 0.0
    %406 = vmatpush1.msra.mxu0 0.0
    %407 = vmatprep.subr.mxu0 0.0
    %408 = vmatpush1.msra.mxu0 0.0
    %409 = vmatprep.subr.mxu0 0.0
    %410 = vmatpush1.msra.mxu0 0.0
    %411 = vmatprep.subr.mxu0 0.0
    %412 = vmatpush1.msra.mxu0 0.0
    %413 = vmatprep.subr.mxu0 0.0
    %414 = vmatpush1.msra.mxu0 0.0
    %415 = vmatprep.subr.mxu0 0.0
    %416 = vmatpush1.msra.mxu0 0.0
    %417 = vmatprep.subr.mxu0 0.0
    %418 = vmatpush1.msra.mxu0 0.0
    %419 = vmatprep.subr.mxu0 0.0
    %420 = vmatpush1.msra.mxu0 0.0
    %421 = vmatprep.subr.mxu0 0.0
    %422 = vmatpush1.msra.mxu0 0.0
    %423 = vmatprep.mubr.f32.mxu0 0.0
    %v424 = vand.u32 %v103, 4294901760
    %v425 = vsub.f32 %v103, %v424
    %v426 = vand.u32 %v425, 4294901760
    %427 = vmatmul.mubr.f32.gmra.mrb[0].mxu0 %v426
    %v428 = vpop.f32.mrb[0].mxu0
    %v429 = vadd.f32 %v352, %v428
    %v430 = vpop.f32.mrb[0].mxu0
    %431 = vdwg.mxu0
    %432 = vmatprep.subr.mxu0 0.0
    %v433 = vand.u32 %v41, 4294901760
    %v434 = vsub.f32 %v41, %v433
    %v435 = vand.u32 %v434, 4294901760
    %436 = vmatpush1.msra.mxu0 %v435
    %437 = vmatprep.subr.mxu0 0.0
    %v438 = vand.u32 %v42, 4294901760
    %v439 = vsub.f32 %v42, %v438
    %v440 = vand.u32 %v439, 4294901760
    %441 = vmatpush1.msra.mxu0 %v440
    %442 = vmatprep.subr.mxu0 0.0
    %v443 = vand.u32 %v43, 4294901760
    %v444 = vsub.f32 %v43, %v443
    %v445 = vand.u32 %v444, 4294901760
    %446 = vmatpush1.msra.mxu0 %v445
    %447 = vmatprep.subr.mxu0 0.0
    %v448 = vand.u32 %v44, 4294901760
    %v449 = vsub.f32 %v44, %v448
    %v450 = vand.u32 %v449, 4294901760
    %451 = vmatpush1.msra.mxu0 %v450
    %452 = vmatprep.subr.mxu0 0.0
    %453 = vmatpush1.msra.mxu0 0.0
    %454 = vmatprep.subr.mxu0 0.0
    %455 = vmatpush1.msra.mxu0 0.0
    %456 = vmatprep.subr.mxu0 0.0
    %457 = vmatpush1.msra.mxu0 0.0
    %458 = vmatprep.subr.mxu0 0.0
    %459 = vmatpush1.msra.mxu0 0.0
    %460 = vmatprep.subr.mxu0 0.0
    %461 = vmatpush1.msra.mxu0 0.0
    %462 = vmatprep.subr.mxu0 0.0
    %463 = vmatpush1.msra.mxu0 0.0
    %464 = vmatprep.subr.mxu0 0.0
    %465 = vmatpush1.msra.mxu0 0.0
    %466 = vmatprep.subr.mxu0 0.0
    %467 = vmatpush1.msra.mxu0 0.0
    %468 = vmatprep.subr.mxu0 0.0
    %469 = vmatpush1.msra.mxu0 0.0
    %470 = vmatprep.subr.mxu0 0.0
    %471 = vmatpush1.msra.mxu0 0.0
    %472 = vmatprep.subr.mxu0 0.0
    %473 = vmatpush1.msra.mxu0 0.0
    %474 = vmatprep.subr.mxu0 0.0
    %475 = vmatpush1.msra.mxu0 0.0
    %476 = vmatprep.subr.mxu0 0.0
    %477 = vmatpush1.msra.mxu0 0.0
    %478 = vmatprep.subr.mxu0 0.0
    %479 = vmatpush1.msra.mxu0 0.0
    %480 = vmatprep.subr.mxu0 0.0
    %481 = vmatpush1.msra.mxu0 0.0
    %482 = vmatprep.subr.mxu0 0.0
    %483 = vmatpush1.msra.mxu0 0.0
    %484 = vmatprep.subr.mxu0 0.0
    %485 = vmatpush1.msra.mxu0 0.0
    %486 = vmatprep.subr.mxu0 0.0
    %487 = vmatpush1.msra.mxu0 0.0
    %488 = vmatprep.subr.mxu0 0.0
    %489 = vmatpush1.msra.mxu0 0.0
    %490 = vmatprep.subr.mxu0 0.0
    %491 = vmatpush1.msra.mxu0 0.0
    %492 = vmatprep.subr.mxu0 0.0
    %493 = vmatpush1.msra.mxu0 0.0
    %494 = vmatprep.subr.mxu0 0.0
    %495 = vmatpush1.msra.mxu0 0.0
    %496 = vmatprep.subr.mxu0 0.0
    %497 = vmatpush1.msra.mxu0 0.0
    %498 = vmatprep.subr.mxu0 0.0
    %499 = vmatpush1.msra.mxu0 0.0
    %500 = vmatprep.subr.mxu0 0.0
    %501 = vmatpush1.msra.mxu0 0.0
    %502 = vmatprep.subr.mxu0 0.0
    %503 = vmatpush1.msra.mxu0 0.0
    %504 = vmatprep.subr.mxu0 0.0
    %505 = vmatpush1.msra.mxu0 0.0
    %506 = vmatprep.subr.mxu0 0.0
    %507 = vmatpush1.msra.mxu0 0.0
    %508 = vmatprep.mubr.f32.mxu0 0.0
    %v509 = vand.u32 %v103, 4294901760
    %510 = vmatmul.mubr.f32.gmra.mrb[0].mxu0 %v509
    %v511 = vpop.f32.mrb[0].mxu0
    %v512 = vadd.f32 %v429, %v511
    %v513 = vpop.f32.mrb[0].mxu0
    %514 = vdwg.mxu0
    %515 = vmatprep.subr.mxu0 0.0
    %v516 = vand.u32 %v41, 4294901760
    %517 = vmatpush1.msra.mxu0 %v516
    %518 = vmatprep.subr.mxu0 0.0
    %v519 = vand.u32 %v42, 4294901760
    %520 = vmatpush1.msra.mxu0 %v519
    %521 = vmatprep.subr.mxu0 0.0
    %v522 = vand.u32 %v43, 4294901760
    %523 = vmatpush1.msra.mxu0 %v522
    %524 = vmatprep.subr.mxu0 0.0
    %v525 = vand.u32 %v44, 4294901760
    %526 = vmatpush1.msra.mxu0 %v525
    %527 = vmatprep.subr.mxu0 0.0
    %528 = vmatpush1.msra.mxu0 0.0
    %529 = vmatprep.subr.mxu0 0.0
    %530 = vmatpush1.msra.mxu0 0.0
    %531 = vmatprep.subr.mxu0 0.0
    %532 = vmatpush1.msra.mxu0 0.0
    %533 = vmatprep.subr.mxu0 0.0
    %534 = vmatpush1.msra.mxu0 0.0
    %535 = vmatprep.subr.mxu0 0.0
    %536 = vmatpush1.msra.mxu0 0.0
    %537 = vmatprep.subr.mxu0 0.0
    %538 = vmatpush1.msra.mxu0 0.0
    %539 = vmatprep.subr.mxu0 0.0
    %540 = vmatpush1.msra.mxu0 0.0
    %541 = vmatprep.subr.mxu0 0.0
    %542 = vmatpush1.msra.mxu0 0.0
    %543 = vmatprep.subr.mxu0 0.0
    %544 = vmatpush1.msra.mxu0 0.0
    %545 = vmatprep.subr.mxu0 0.0
    %546 = vmatpush1.msra.mxu0 0.0
    %547 = vmatprep.subr.mxu0 0.0
    %548 = vmatpush1.msra.mxu0 0.0
    %549 = vmatprep.subr.mxu0 0.0
    %550 = vmatpush1.msra.mxu0 0.0
    %551 = vmatprep.subr.mxu0 0.0
    %552 = vmatpush1.msra.mxu0 0.0
    %553 = vmatprep.subr.mxu0 0.0
    %554 = vmatpush1.msra.mxu0 0.0
    %555 = vmatprep.subr.mxu0 0.0
    %556 = vmatpush1.msra.mxu0 0.0
    %557 = vmatprep.subr.mxu0 0.0
    %558 = vmatpush1.msra.mxu0 0.0
    %559 = vmatprep.subr.mxu0 0.0
    %560 = vmatpush1.msra.mxu0 0.0
    %561 = vmatprep.subr.mxu0 0.0
    %562 = vmatpush1.msra.mxu0 0.0
    %563 = vmatprep.subr.mxu0 0.0
    %564 = vmatpush1.msra.mxu0 0.0
    %565 = vmatprep.subr.mxu0 0.0
    %566 = vmatpush1.msra.mxu0 0.0
    %567 = vmatprep.subr.mxu0 0.0
    %568 = vmatpush1.msra.mxu0 0.0
    %569 = vmatprep.subr.mxu0 0.0
    %570 = vmatpush1.msra.mxu0 0.0
    %571 = vmatprep.subr.mxu0 0.0
    %572 = vmatpush1.msra.mxu0 0.0
    %573 = vmatprep.subr.mxu0 0.0
    %574 = vmatpush1.msra.mxu0 0.0
    %575 = vmatprep.subr.mxu0 0.0
    %576 = vmatpush1.msra.mxu0 0.0
    %577 = vmatprep.subr.mxu0 0.0
    %578 = vmatpush1.msra.mxu0 0.0
    %579 = vmatprep.subr.mxu0 0.0
    %580 = vmatpush1.msra.mxu0 0.0
    %581 = vmatprep.subr.mxu0 0.0
    %582 = vmatpush1.msra.mxu0 0.0
    %583 = vmatprep.mubr.f32.mxu0 0.0
    %v584 = vand.u32 %v103, 4294901760
    %585 = vmatmul.mubr.f32.gmra.mrb[0].mxu0 %v584
    %v586 = vpop.f32.mrb[0].mxu0
    %v587 = vadd.f32 %v512, %v586
    %v588 = vpop.f32.mrb[0].mxu0
    %589 = vdwg.mxu0
    %v590 = vmul.f32 %v587, %v587
    %v591 = vsel %vm67, %v590, 0.0
    %592 = vadd.xlane.f32.xlu0 %v591
    %v593 = vpop.xlane.xlu0 %592
    %v594 = vrsqrt.pop %v593
    %v595 = vmul.f32 %v593, %v594
    %vm596 = vcmp.eq.f32.partialorder %v593, inf
    %v597 = vsel %vm596, %v593, %v595
    %vm598 = vcmp.eq.f32.partialorder %v593, 0.0
    %v599 = vand.u32 %v593, 2147483648
    %v600 = vsel %vm598, %v599, %v597
    %v601 = vmax.f32 %v600, 1e-15
    %v602 = vmax.f32 %v601, -85.0
    %v603 = vmin.f32 %v602, 85.0
    %v604 = vmul.f32 %v603, 1.442695
    %v605 = vpow.pop %v604
    %v606 = vrcp.pop %v605
    %v607 = vmul.f32 1.0, %v606
    %v608 = vsub.f32 %v605, %v607
    %v609 = vmul.f32 %v608, 0.5
    %v610 = vmul.f32 %v609, %v587
    %v611 = vrcp.pop %v601
    %v612 = vmul.f32 %v610, %v611
    %v613 = vmul.f32 %v612, %v612
    %v614 = vsel %vm67, %v613, 0.0
    %615 = vadd.xlane.f32.xlu0 %v614
    %v616 = vpop.xlane.xlu0 %615
    %v617 = vadd.f32 %v616, 1.0
    %v618 = vmax.f32 %v617, 1e-07
    %v619 = vrsqrt.pop %v618
    %v620 = vmul.f32 %v618, %v619
    %vm621 = vcmp.eq.f32.partialorder %v618, inf
    %v622 = vsel %vm621, %v618, %v620
    %vm623 = vcmp.eq.f32.partialorder %v618, 0.0
    %v624 = vand.u32 %v618, 2147483648
    %v625 = vsel %vm623, %v624, %v622
    %v626 = vmul.f32 %v65, %v65
    %vm627 = vcmask 256002
    %v628 = vsel %vm627, %v626, 0.0
    %629 = vadd.xlane.f32.xlu0 %v628
    %v630 = vpop.xlane.xlu0 %629
    %v631 = vrsqrt.pop %v630
    %v632 = vmul.f32 %v630, %v631
    %vm633 = vcmp.eq.f32.partialorder %v630, inf
    %v634 = vsel %vm633, %v630, %v632
    %vm635 = vcmp.eq.f32.partialorder %v630, 0.0
    %v636 = vand.u32 %v630, 2147483648
    %v637 = vsel %vm635, %v636, %v634
    %v638 = vmax.f32 %v637, 1e-15
    %v639 = vmax.f32 %v63, 1.0000001
    %v640 = vmax.f32 %v639, 1.0000001
    %v641 = vmul.f32 %v640, %v640
    %v642 = vsub.f32 %v641, 1.0
    %v643 = vrsqrt.pop %v642
    %v644 = vmul.f32 %v642, %v643
    %vm645 = vcmp.eq.f32.partialorder %v642, inf
    %v646 = vsel %vm645, %v642, %v644
    %vm647 = vcmp.eq.f32.partialorder %v642, 0.0
    %v648 = vand.u32 %v642, 2147483648
    %v649 = vsel %vm647, %v648, %v646
    %v650 = vadd.f32 %v640, %v649
    %v651 = vlog2.pop %v650
    %v652 = vmul.f32 %v651, 0.6931472
    %654 = vset.pattern.permute.xlu0 0
    %655 = vperm.xlu0 %654, %v652
    %v656 = vpop.permute.xlu0 %655
    %v658 = vmul.f32 %v656, %v65
    %v659 = vrcp.pop %v638
    %v660 = vmul.f32 %v658, %v659
    %v661 = vrsqrt.pop %v616
    %v662 = vmul.f32 %v616, %v661
    %vm663 = vcmp.eq.f32.partialorder %v616, inf
    %v664 = vsel %vm663, %v616, %v662
    %vm665 = vcmp.eq.f32.partialorder %v616, 0.0
    %v666 = vand.u32 %v616, 2147483648
    %v667 = vsel %vm665, %v666, %v664
    %v668 = vmax.f32 %v667, 1e-15
    %v669 = vrcp.pop %v668
    %v670 = vmul.f32 %v612, %v669
    %v671 = vlaneseq
    %v672 = vshrl.u32 %v671, 7
    %v673 = vsub.s32 2, %v672
    %v674 = vrot.slane %v660, %v673
    %v675 = vmul.f32 %v670, %v674
    %v676 = vsel %vm67, %v675, 0.0
    %677 = vadd.xlane.f32.xlu0 %v676
    %v678 = vpop.xlane.xlu0 %677
    %v679 = vsub.f32 1.0, %v625
    %v680 = vmul.f32 %v678, %v679
    %v681 = vmul.f32 %v680, %v670
    %v682 = vsub.f32 %v674, %v681
    %v683 = vmul.f32 %v612, %v682
    %v684 = vsel %vm67, %v683, 0.0
    %685 = vadd.xlane.f32.xlu0 %v684
    %v686 = vpop.xlane.xlu0 %685
    %v687 = vmax.f32 %v625, 1e-07
    %v688 = vrcp.pop %v687
    %v689 = vmul.f32 %v686, %v688
    %v690 = vmul.f32 %v682, %v682
    %v691 = vsel %vm67, %v690, 0.0
    %692 = vadd.xlane.f32.xlu0 %v691
    %v693 = vpop.xlane.xlu0 %692
    %v694 = vmul.f32 %v689, %v689
    %v695 = vsub.f32 %v693, %v694
    %v696 = vmax.f32 %v695, 1e-07
    %v697 = vrsqrt.pop %v696
    %v698 = vmul.f32 %v696, %v697
    %vm699 = vcmp.eq.f32.partialorder %v696, inf
    %v700 = vsel %vm699, %v696, %v698
    %vm701 = vcmp.eq.f32.partialorder %v696, 0.0
    %v702 = vand.u32 %v696, 2147483648
    %v703 = vsel %vm701, %v702, %v700
    %v704 = vmin.f32 %v703, 1000000.0
    %v705 = vmax.f32 %v704, 1e-15
    %v706 = vmax.f32 %v705, -85.0
    %v707 = vmin.f32 %v706, 85.0
    %v708 = vmul.f32 %v707, 1.442695
    %v709 = vpow.pop %v708
    %v710 = vrcp.pop %v709
    %v711 = vmul.f32 1.0, %v710
    %v712 = vadd.f32 %v709, %v711
    %v713 = vmul.f32 %v712, 0.5
    %v714 = vsub.f32 %v709, %v711
    %v715 = vmul.f32 %v714, 0.5
    %v716 = vmul.f32 %v713, %v612
    %v717 = vrcp.pop %v705
    %v718 = vmul.f32 %v715, %v717
    %v719 = vmul.f32 %v718, %v682
    %v720 = vadd.f32 %v716, %v719
    %v721 = vmul.f32 %v720, %v720
    %v722 = vsel %vm67, %v721, 0.0
    %723 = vadd.xlane.f32.xlu0 %v722
    %v724 = vpop.xlane.xlu0 %723
    %v725 = vadd.f32 %v724, 1.0
    %v726 = vmax.f32 %v725, 1e-07
    %v727 = vrsqrt.pop %v726
    %v728 = vmul.f32 %v726, %v727
    %vm729 = vcmp.eq.f32.partialorder %v726, inf
    %v730 = vsel %vm729, %v726, %v728
    %vm731 = vcmp.eq.f32.partialorder %v726, 0.0
    %v732 = vand.u32 %v726, 2147483648
    %v733 = vsel %vm731, %v732, %v730
    %v734 = vmul.f32 %v50, %v50
    %v735 = vsel %vm627, %v734, 0.0
    %736 = vadd.xlane.f32.xlu0 %v735
    %v737 = vpop.xlane.xlu0 %736
    %v738 = vrsqrt.pop %v737
    %v739 = vmul.f32 %v737, %v738
    %vm740 = vcmp.eq.f32.partialorder %v737, inf
    %v741 = vsel %vm740, %v737, %v739
    %vm742 = vcmp.eq.f32.partialorder %v737, 0.0
    %v743 = vand.u32 %v737, 2147483648
    %v744 = vsel %vm742, %v743, %v741
    %v745 = vmax.f32 %v744, 1e-15
    %v746 = vmax.f32 %v49, 1.0000001
    %v747 = vmax.f32 %v746, 1.0000001
    %v748 = vmul.f32 %v747, %v747
    %v749 = vsub.f32 %v748, 1.0
    %v750 = vrsqrt.pop %v749
    %v751 = vmul.f32 %v749, %v750
    %vm752 = vcmp.eq.f32.partialorder %v749, inf
    %v753 = vsel %vm752, %v749, %v751
    %vm754 = vcmp.eq.f32.partialorder %v749, 0.0
    %v755 = vand.u32 %v749, 2147483648
    %v756 = vsel %vm754, %v755, %v753
    %v757 = vadd.f32 %v747, %v756
    %v758 = vlog2.pop %v757
    %v759 = vmul.f32 %v758, 0.6931472
    %761 = vset.pattern.permute.xlu0 0
    %762 = vperm.xlu0 %761, %v759
    %v763 = vpop.permute.xlu0 %762
    %v765 = vmul.f32 %v763, %v50
    %v766 = vrcp.pop %v745
    %v767 = vmul.f32 %v765, %v766
    %v768 = vrsqrt.pop %v724
    %v769 = vmul.f32 %v724, %v768
    %vm770 = vcmp.eq.f32.partialorder %v724, inf
    %v771 = vsel %vm770, %v724, %v769
    %vm772 = vcmp.eq.f32.partialorder %v724, 0.0
    %v773 = vand.u32 %v724, 2147483648
    %v774 = vsel %vm772, %v773, %v771
    %v775 = vmax.f32 %v774, 1e-15
    %v776 = vrcp.pop %v775
    %v777 = vmul.f32 %v720, %v776
    %v778 = vlaneseq
    %v779 = vshrl.u32 %v778, 7
    %v780 = vsub.s32 2, %v779
    %v781 = vrot.slane %v767, %v780
    %v782 = vmul.f32 %v777, %v781
    %v783 = vsel %vm67, %v782, 0.0
    %784 = vadd.xlane.f32.xlu0 %v783
    %v785 = vpop.xlane.xlu0 %784
    %v786 = vsub.f32 1.0, %v733
    %v787 = vmul.f32 %v785, %v786
    %v788 = vmul.f32 %v787, %v777
    %v789 = vsub.f32 %v781, %v788
    %v790 = vmul.f32 %v720, %v789
    %v791 = vsel %vm67, %v790, 0.0
    %792 = vadd.xlane.f32.xlu0 %v791
    %v793 = vpop.xlane.xlu0 %792
    %v794 = vmax.f32 %v733, 1e-07
    %v795 = vrcp.pop %v794
    %v796 = vmul.f32 %v793, %v795
    %v797 = vmul.f32 %v789, %v789
    %v798 = vsel %vm67, %v797, 0.0
    %799 = vadd.xlane.f32.xlu0 %v798
    %v800 = vpop.xlane.xlu0 %799
    %v801 = vmul.f32 %v796, %v796
    %v802 = vsub.f32 %v800, %v801
    %v803 = vmax.f32 %v802, 1e-07
    %v804 = vrsqrt.pop %v803
    %v805 = vmul.f32 %v803, %v804
    %vm806 = vcmp.eq.f32.partialorder %v803, inf
    %v807 = vsel %vm806, %v803, %v805
    %vm808 = vcmp.eq.f32.partialorder %v803, 0.0
    %v809 = vand.u32 %v803, 2147483648
    %v810 = vsel %vm808, %v809, %v807
    %v811 = vmin.f32 %v810, 1000000.0
    %v812 = vmax.f32 %v811, 1e-15
    %v813 = vmax.f32 %v812, -85.0
    %v814 = vmin.f32 %v813, 85.0
    %v815 = vmul.f32 %v814, 1.442695
    %v816 = vpow.pop %v815
    %v817 = vrcp.pop %v816
    %v818 = vmul.f32 1.0, %v817
    %v819 = vadd.f32 %v816, %v818
    %v820 = vmul.f32 %v819, 0.5
    %v821 = vsub.f32 %v816, %v818
    %v822 = vmul.f32 %v821, 0.5
    %v823 = vmul.f32 %v820, %v720
    %v824 = vrcp.pop %v812
    %v825 = vmul.f32 %v822, %v824
    %v826 = vmul.f32 %v825, %v789
    %v827 = vadd.f32 %v823, %v826
    %v828 = vmul.f32 %v827, %v827
    %v829 = vsel %vm67, %v828, 0.0
    %830 = vadd.xlane.f32.xlu0 %v829
    %v831 = vpop.xlane.xlu0 %830
    %v832 = vadd.f32 %v831, 1.0
    %v833 = vmax.f32 %v832, 1e-07
    %v834 = vrsqrt.pop %v833
    %v835 = vmul.f32 %v833, %v834
    %vm836 = vcmp.eq.f32.partialorder %v833, inf
    %v837 = vsel %vm836, %v833, %v835
    %vm838 = vcmp.eq.f32.partialorder %v833, 0.0
    %v839 = vand.u32 %v833, 2147483648
    %v840 = vsel %vm838, %v839, %v837
    %v841 = vrsqrt.pop %v831
    %v842 = vmul.f32 %v831, %v841
    %vm843 = vcmp.eq.f32.partialorder %v831, inf
    %v844 = vsel %vm843, %v831, %v842
    %vm845 = vcmp.eq.f32.partialorder %v831, 0.0
    %v846 = vand.u32 %v831, 2147483648
    %v847 = vsel %vm845, %v846, %v844
    %v848 = vmax.f32 %v847, 1e-15
    %v849 = vmax.f32 %v840, 1.0000001
    %v850 = vmax.f32 %v849, 1.0000001
    %v851 = vmul.f32 %v850, %v850
    %v852 = vsub.f32 %v851, 1.0
    %v853 = vrsqrt.pop %v852
    %v854 = vmul.f32 %v852, %v853
    %vm855 = vcmp.eq.f32.partialorder %v852, inf
    %v856 = vsel %vm855, %v852, %v854
    %vm857 = vcmp.eq.f32.partialorder %v852, 0.0
    %v858 = vand.u32 %v852, 2147483648
    %v859 = vsel %vm857, %v858, %v856
    %v860 = vadd.f32 %v850, %v859
    %v861 = vlog2.pop %v860
    %v862 = vmul.f32 %v861, 0.6931472
    %v863 = vmul.f32 %v862, %v827
    %v864 = vrcp.pop %v848
    %v865 = vmul.f32 %v863, %v864
    %v866 = vmul.f32 %v865, 0.5
    %v867 = vtanh.pop %v866
    %v868 = vadd.f32 %v867, 1.0
    %v869 = vmul.f32 %v868, 0.5
    %871 = vrot.lane.b32.xlu0 %v590, 96
    %v872 = vpop.permute.xlu0 %871
    %v874 = vsel %vm67, %v872, 0.0
    %875 = vadd.xlane.f32.xlu0 %v874
    %v876 = vpop.xlane.xlu0 %875
    %v877 = vrsqrt.pop %v876
    %v878 = vmul.f32 %v876, %v877
    %vm879 = vcmp.eq.f32.partialorder %v876, inf
    %v880 = vsel %vm879, %v876, %v878
    %vm881 = vcmp.eq.f32.partialorder %v876, 0.0
    %v882 = vand.u32 %v876, 2147483648
    %v883 = vsel %vm881, %v882, %v880
    %v884 = vmax.f32 %v883, 1e-15
    %v885 = vmax.f32 %v884, -85.0
    %v886 = vmin.f32 %v885, 85.0
    %v887 = vmul.f32 %v886, 1.442695
    %v888 = vpow.pop %v887
    %v889 = vrcp.pop %v888
    %v890 = vmul.f32 1.0, %v889
    %v891 = vsub.f32 %v888, %v890
    %v892 = vmul.f32 %v891, 0.5
    %v893 = vmul.f32 %v892, %v587
    %v894 = vrcp.pop %v884
    %v895 = vmul.f32 %v893, %v894
    %v896 = vmul.f32 %v895, %v895
    %898 = vrot.lane.b32.xlu0 %v896, 96
    %v899 = vpop.permute.xlu0 %898
    %v901 = vsel %vm67, %v899, 0.0
    %902 = vadd.xlane.f32.xlu0 %v901
    %v903 = vpop.xlane.xlu0 %902
    %v904 = vadd.f32 %v903, 1.0
    %v905 = vmax.f32 %v904, 1e-07
    %v906 = vrsqrt.pop %v905
    %v907 = vmul.f32 %v905, %v906
    %vm908 = vcmp.eq.f32.partialorder %v905, inf
    %v909 = vsel %vm908, %v905, %v907
    %vm910 = vcmp.eq.f32.partialorder %v905, 0.0
    %v911 = vand.u32 %v905, 2147483648
    %v912 = vsel %vm910, %v911, %v909
    %vm913 = vcmask 253952
    %v914 = vsel %vm913, %v626, 0.0
    %915 = vadd.xlane.f32.xlu0 %v914
    %v916 = vpop.xlane.xlu0 %915
    %v917 = vrsqrt.pop %v916
    %v918 = vmul.f32 %v916, %v917
    %vm919 = vcmp.eq.f32.partialorder %v916, inf
    %v920 = vsel %vm919, %v916, %v918
    %vm921 = vcmp.eq.f32.partialorder %v916, 0.0
    %v922 = vand.u32 %v916, 2147483648
    %v923 = vsel %vm921, %v922, %v920
    %v924 = vmax.f32 %v923, 1e-15
    %v925 = vrcp.pop %v924
    %v926 = vmul.f32 %v658, %v925
    %v927 = vrsqrt.pop %v903
    %v928 = vmul.f32 %v903, %v927
    %vm929 = vcmp.eq.f32.partialorder %v903, inf
    %v930 = vsel %vm929, %v903, %v928
    %vm931 = vcmp.eq.f32.partialorder %v903, 0.0
    %v932 = vand.u32 %v903, 2147483648
    %v933 = vsel %vm931, %v932, %v930
    %v934 = vmax.f32 %v933, 1e-15
    %v935 = vrcp.pop %v934
    %v936 = vmul.f32 %v895, %v935
    %v937 = vlaneseq
    %v938 = vshrl.u32 %v937, 7
    %v939 = vsub.s32 0, %v938
    %v940 = vrot.slane %v926, %v939
    %942 = vrot.lane.b32.xlu0 %v940, 32
    %v943 = vpop.permute.xlu0 %942
    %v945 = vmul.f32 %v936, %v943
    %947 = vrot.lane.b32.xlu0 %v945, 96
    %v948 = vpop.permute.xlu0 %947
    %v950 = vsel %vm67, %v948, 0.0
    %951 = vadd.xlane.f32.xlu0 %v950
    %v952 = vpop.xlane.xlu0 %951
    %v953 = vsub.f32 1.0, %v912
    %v954 = vmul.f32 %v952, %v953
    %v955 = vmul.f32 %v954, %v936
    %957 = vrot.lane.b32.xlu0 %v955, 96
    %v958 = vpop.permute.xlu0 %957
    %v960 = vsub.f32 %v940, %v958
    %962 = vrot.lane.b32.xlu0 %v960, 32
    %v963 = vpop.permute.xlu0 %962
    %v965 = vmul.f32 %v895, %v963
    %967 = vrot.lane.b32.xlu0 %v965, 96
    %v968 = vpop.permute.xlu0 %967
    %v970 = vsel %vm67, %v968, 0.0
    %971 = vadd.xlane.f32.xlu0 %v970
    %v972 = vpop.xlane.xlu0 %971
    %v973 = vmax.f32 %v912, 1e-07
    %v974 = vrcp.pop %v973
    %v975 = vmul.f32 %v972, %v974
    %v976 = vmul.f32 %v960, %v960
    %v977 = vsel %vm67, %v976, 0.0
    %978 = vadd.xlane.f32.xlu0 %v977
    %v979 = vpop.xlane.xlu0 %978
    %v980 = vmul.f32 %v975, %v975
    %v981 = vsub.f32 %v979, %v980
    %v982 = vmax.f32 %v981, 1e-07
    %v983 = vrsqrt.pop %v982
    %v984 = vmul.f32 %v982, %v983
    %vm985 = vcmp.eq.f32.partialorder %v982, inf
    %v986 = vsel %vm985, %v982, %v984
    %vm987 = vcmp.eq.f32.partialorder %v982, 0.0
    %v988 = vand.u32 %v982, 2147483648
    %v989 = vsel %vm987, %v988, %v986
    %v990 = vmin.f32 %v989, 1000000.0
    %v991 = vmax.f32 %v990, 1e-15
    %v992 = vmax.f32 %v991, -85.0
    %v993 = vmin.f32 %v992, 85.0
    %v994 = vmul.f32 %v993, 1.442695
    %v995 = vpow.pop %v994
    %v996 = vrcp.pop %v995
    %v997 = vmul.f32 1.0, %v996
    %v998 = vadd.f32 %v995, %v997
    %v999 = vmul.f32 %v998, 0.5
    %v1000 = vsub.f32 %v995, %v997
    %v1001 = vmul.f32 %v1000, 0.5
    %v1002 = vmul.f32 %v999, %v895
    %v1003 = vrcp.pop %v991
    %v1004 = vmul.f32 %v1001, %v1003
    %v1005 = vmul.f32 %v1004, %v960
    %1007 = vrot.lane.b32.xlu0 %v1005, 32
    %v1008 = vpop.permute.xlu0 %1007
    %v1010 = vadd.f32 %v1002, %v1008
    %v1011 = vmul.f32 %v1010, %v1010
    %1013 = vrot.lane.b32.xlu0 %v1011, 96
    %v1014 = vpop.permute.xlu0 %1013
    %v1016 = vsel %vm67, %v1014, 0.0
    %1017 = vadd.xlane.f32.xlu0 %v1016
    %v1018 = vpop.xlane.xlu0 %1017
    %v1019 = vadd.f32 %v1018, 1.0
    %v1020 = vmax.f32 %v1019, 1e-07
    %v1021 = vrsqrt.pop %v1020
    %v1022 = vmul.f32 %v1020, %v1021
    %vm1023 = vcmp.eq.f32.partialorder %v1020, inf
    %v1024 = vsel %vm1023, %v1020, %v1022
    %vm1025 = vcmp.eq.f32.partialorder %v1020, 0.0
    %v1026 = vand.u32 %v1020, 2147483648
    %v1027 = vsel %vm1025, %v1026, %v1024
    %v1028 = vsel %vm913, %v734, 0.0
    %1029 = vadd.xlane.f32.xlu0 %v1028
    %v1030 = vpop.xlane.xlu0 %1029
    %v1031 = vrsqrt.pop %v1030
    %v1032 = vmul.f32 %v1030, %v1031
    %vm1033 = vcmp.eq.f32.partialorder %v1030, inf
    %v1034 = vsel %vm1033, %v1030, %v1032
    %vm1035 = vcmp.eq.f32.partialorder %v1030, 0.0
    %v1036 = vand.u32 %v1030, 2147483648
    %v1037 = vsel %vm1035, %v1036, %v1034
    %v1038 = vmax.f32 %v1037, 1e-15
    %v1039 = vrcp.pop %v1038
    %v1040 = vmul.f32 %v765, %v1039
    %v1041 = vrsqrt.pop %v1018
    %v1042 = vmul.f32 %v1018, %v1041
    %vm1043 = vcmp.eq.f32.partialorder %v1018, inf
    %v1044 = vsel %vm1043, %v1018, %v1042
    %vm1045 = vcmp.eq.f32.partialorder %v1018, 0.0
    %v1046 = vand.u32 %v1018, 2147483648
    %v1047 = vsel %vm1045, %v1046, %v1044
    %v1048 = vmax.f32 %v1047, 1e-15
    %v1049 = vrcp.pop %v1048
    %v1050 = vmul.f32 %v1010, %v1049
    %v1051 = vlaneseq
    %v1052 = vshrl.u32 %v1051, 7
    %v1053 = vsub.s32 0, %v1052
    %v1054 = vrot.slane %v1040, %v1053
    %1056 = vrot.lane.b32.xlu0 %v1054, 32
    %v1057 = vpop.permute.xlu0 %1056
    %v1059 = vmul.f32 %v1050, %v1057
    %1061 = vrot.lane.b32.xlu0 %v1059, 96
    %v1062 = vpop.permute.xlu0 %1061
    %v1064 = vsel %vm67, %v1062, 0.0
    %1065 = vadd.xlane.f32.xlu0 %v1064
    %v1066 = vpop.xlane.xlu0 %1065
    %v1067 = vsub.f32 1.0, %v1027
    %v1068 = vmul.f32 %v1066, %v1067
    %v1069 = vmul.f32 %v1068, %v1050
    %1071 = vrot.lane.b32.xlu0 %v1069, 96
    %v1072 = vpop.permute.xlu0 %1071
    %v1074 = vsub.f32 %v1054, %v1072
    %1076 = vrot.lane.b32.xlu0 %v1074, 32
    %v1077 = vpop.permute.xlu0 %1076
    %v1079 = vmul.f32 %v1010, %v1077
    %1081 = vrot.lane.b32.xlu0 %v1079, 96
    %v1082 = vpop.permute.xlu0 %1081
    %v1084 = vsel %vm67, %v1082, 0.0
    %1085 = vadd.xlane.f32.xlu0 %v1084
    %v1086 = vpop.xlane.xlu0 %1085
    %v1087 = vmax.f32 %v1027, 1e-07
    %v1088 = vrcp.pop %v1087
    %v1089 = vmul.f32 %v1086, %v1088
    %v1090 = vmul.f32 %v1074, %v1074
    %v1091 = vsel %vm67, %v1090, 0.0
    %1092 = vadd.xlane.f32.xlu0 %v1091
    %v1093 = vpop.xlane.xlu0 %1092
    %v1094 = vmul.f32 %v1089, %v1089
    %v1095 = vsub.f32 %v1093, %v1094
    %v1096 = vmax.f32 %v1095, 1e-07
    %v1097 = vrsqrt.pop %v1096
    %v1098 = vmul.f32 %v1096, %v1097
    %vm1099 = vcmp.eq.f32.partialorder %v1096, inf
    %v1100 = vsel %vm1099, %v1096, %v1098
    %vm1101 = vcmp.eq.f32.partialorder %v1096, 0.0
    %v1102 = vand.u32 %v1096, 2147483648
    %v1103 = vsel %vm1101, %v1102, %v1100
    %v1104 = vmin.f32 %v1103, 1000000.0
    %v1105 = vmax.f32 %v1104, 1e-15
    %v1106 = vmax.f32 %v1105, -85.0
    %v1107 = vmin.f32 %v1106, 85.0
    %v1108 = vmul.f32 %v1107, 1.442695
    %v1109 = vpow.pop %v1108
    %v1110 = vrcp.pop %v1109
    %v1111 = vmul.f32 1.0, %v1110
    %v1112 = vadd.f32 %v1109, %v1111
    %v1113 = vmul.f32 %v1112, 0.5
    %v1114 = vsub.f32 %v1109, %v1111
    %v1115 = vmul.f32 %v1114, 0.5
    %v1116 = vmul.f32 %v1113, %v1010
    %v1117 = vrcp.pop %v1105
    %v1118 = vmul.f32 %v1115, %v1117
    %v1119 = vmul.f32 %v1118, %v1074
    %1121 = vrot.lane.b32.xlu0 %v1119, 32
    %v1122 = vpop.permute.xlu0 %1121
    %v1124 = vadd.f32 %v1116, %v1122
    %v1125 = vmul.f32 %v1124, %v1124
    %1127 = vrot.lane.b32.xlu0 %v1125, 96
    %v1128 = vpop.permute.xlu0 %1127
    %v1130 = vsel %vm67, %v1128, 0.0
    %1131 = vadd.xlane.f32.xlu0 %v1130
    %v1132 = vpop.xlane.xlu0 %1131
    %v1133 = vadd.f32 %v1132, 1.0
    %v1134 = vmax.f32 %v1133, 1e-07
    %v1135 = vrsqrt.pop %v1134
    %v1136 = vmul.f32 %v1134, %v1135
    %vm1137 = vcmp.eq.f32.partialorder %v1134, inf
    %v1138 = vsel %vm1137, %v1134, %v1136
    %vm1139 = vcmp.eq.f32.partialorder %v1134, 0.0
    %v1140 = vand.u32 %v1134, 2147483648
    %v1141 = vsel %vm1139, %v1140, %v1138
    %v1142 = vrsqrt.pop %v1132
    %v1143 = vmul.f32 %v1132, %v1142
    %vm1144 = vcmp.eq.f32.partialorder %v1132, inf
    %v1145 = vsel %vm1144, %v1132, %v1143
    %vm1146 = vcmp.eq.f32.partialorder %v1132, 0.0
    %v1147 = vand.u32 %v1132, 2147483648
    %v1148 = vsel %vm1146, %v1147, %v1145
    %v1149 = vmax.f32 %v1148, 1e-15
    %v1150 = vmax.f32 %v1141, 1.0000001
    %v1151 = vmax.f32 %v1150, 1.0000001
    %v1152 = vmul.f32 %v1151, %v1151
    %v1153 = vsub.f32 %v1152, 1.0
    %v1154 = vrsqrt.pop %v1153
    %v1155 = vmul.f32 %v1153, %v1154
    %vm1156 = vcmp.eq.f32.partialorder %v1153, inf
    %v1157 = vsel %vm1156, %v1153, %v1155
    %vm1158 = vcmp.eq.f32.partialorder %v1153, 0.0
    %v1159 = vand.u32 %v1153, 2147483648
    %v1160 = vsel %vm1158, %v1159, %v1157
    %v1161 = vadd.f32 %v1151, %v1160
    %v1162 = vlog2.pop %v1161
    %v1163 = vmul.f32 %v1162, 0.6931472
    %v1164 = vmul.f32 %v1163, %v1124
    %v1165 = vrcp.pop %v1149
    %v1166 = vmul.f32 %v1164, %v1165
    %v1167 = vmul.f32 %v1166, 0.5
    %v1168 = vtanh.pop %v1167
    %v1169 = vadd.f32 %v1168, 1.0
    %v1170 = vmul.f32 %v1169, 0.5
    %1171 = vrot.lane.b32.xlu0 %v100, 32
    %v1172 = vpop.permute.xlu0 %1171
    %v1174 = vmul.f32 %v1170, %v1172
    %1176 = vrot.lane.b32.xlu0 %v1174, 96
    %v1177 = vpop.permute.xlu0 %1176
    %v1178 = vsel %vm101, %v1177, 0
    %1180 = vmatprep.subr.mxu0 0.0
    %v1181 = vand.u32 %v45, 4294901760
    %1182 = vmatpush1.msra.mxu0 %v1181
    %1183 = vmatprep.subr.mxu0 0.0
    %v1184 = vand.u32 %v46, 4294901760
    %1185 = vmatpush1.msra.mxu0 %v1184
    %1186 = vmatprep.subr.mxu0 0.0
    %v1187 = vand.u32 %v47, 4294901760
    %1188 = vmatpush1.msra.mxu0 %v1187
    %1189 = vmatprep.subr.mxu0 0.0
    %v1190 = vand.u32 %v48, 4294901760
    %1191 = vmatpush1.msra.mxu0 %v1190
    %1192 = vmatprep.subr.mxu0 0.0
    %1193 = vmatpush1.msra.mxu0 0.0
    %1194 = vmatprep.subr.mxu0 0.0
    %1195 = vmatpush1.msra.mxu0 0.0
    %1196 = vmatprep.subr.mxu0 0.0
    %1197 = vmatpush1.msra.mxu0 0.0
    %1198 = vmatprep.subr.mxu0 0.0
    %1199 = vmatpush1.msra.mxu0 0.0
    %1200 = vmatprep.subr.mxu0 0.0
    %1201 = vmatpush1.msra.mxu0 0.0
    %1202 = vmatprep.subr.mxu0 0.0
    %1203 = vmatpush1.msra.mxu0 0.0
    %1204 = vmatprep.subr.mxu0 0.0
    %1205 = vmatpush1.msra.mxu0 0.0
    %1206 = vmatprep.subr.mxu0 0.0
    %1207 = vmatpush1.msra.mxu0 0.0
    %1208 = vmatprep.subr.mxu0 0.0
    %1209 = vmatpush1.msra.mxu0 0.0
    %1210 = vmatprep.subr.mxu0 0.0
    %1211 = vmatpush1.msra.mxu0 0.0
    %1212 = vmatprep.subr.mxu0 0.0
    %1213 = vmatpush1.msra.mxu0 0.0
    %1214 = vmatprep.subr.mxu0 0.0
    %1215 = vmatpush1.msra.mxu0 0.0
    %1216 = vmatprep.subr.mxu0 0.0
    %1217 = vmatpush1.msra.mxu0 0.0
    %1218 = vmatprep.subr.mxu0 0.0
    %1219 = vmatpush1.msra.mxu0 0.0
    %1220 = vmatprep.subr.mxu0 0.0
    %1221 = vmatpush1.msra.mxu0 0.0
    %1222 = vmatprep.subr.mxu0 0.0
    %1223 = vmatpush1.msra.mxu0 0.0
    %1224 = vmatprep.subr.mxu0 0.0
    %1225 = vmatpush1.msra.mxu0 0.0
    %1226 = vmatprep.subr.mxu0 0.0
    %1227 = vmatpush1.msra.mxu0 0.0
    %1228 = vmatprep.subr.mxu0 0.0
    %1229 = vmatpush1.msra.mxu0 0.0
    %1230 = vmatprep.subr.mxu0 0.0
    %1231 = vmatpush1.msra.mxu0 0.0
    %1232 = vmatprep.subr.mxu0 0.0
    %1233 = vmatpush1.msra.mxu0 0.0
    %1234 = vmatprep.subr.mxu0 0.0
    %1235 = vmatpush1.msra.mxu0 0.0
    %1236 = vmatprep.subr.mxu0 0.0
    %1237 = vmatpush1.msra.mxu0 0.0
    %1238 = vmatprep.subr.mxu0 0.0
    %1239 = vmatpush1.msra.mxu0 0.0
    %1240 = vmatprep.subr.mxu0 0.0
    %1241 = vmatpush1.msra.mxu0 0.0
    %1242 = vmatprep.subr.mxu0 0.0
    %1243 = vmatpush1.msra.mxu0 0.0
    %1244 = vmatprep.subr.mxu0 0.0
    %1245 = vmatpush1.msra.mxu0 0.0
    %1246 = vmatprep.subr.mxu0 0.0
    %1247 = vmatpush1.msra.mxu0 0.0
    %1248 = vmatprep.mubr.f32.mxu0 0.0
    %v1249 = vand.u32 %v1178, 4294901760
    %v1250 = vsub.f32 %v1178, %v1249
    %v1251 = vand.u32 %v1250, 4294901760
    %v1252 = vsub.f32 %v1250, %v1251
    %v1253 = vand.u32 %v1252, 4294901760
    %1254 = vmatmul.mubr.f32.gmra.mrb[0].mxu0 %v1253
    %v1255 = vpop.f32.mrb[0].mxu0
    %v1256 = vadd.f32 0.0, %v1255
    %v1257 = vpop.f32.mrb[0].mxu0
    %1258 = vdwg.mxu0
    %1259 = vmatprep.subr.mxu0 0.0
    %v1260 = vand.u32 %v45, 4294901760
    %v1261 = vsub.f32 %v45, %v1260
    %v1262 = vand.u32 %v1261, 4294901760
    %v1263 = vsub.f32 %v1261, %v1262
    %v1264 = vand.u32 %v1263, 4294901760
    %1265 = vmatpush1.msra.mxu0 %v1264
    %1266 = vmatprep.subr.mxu0 0.0
    %v1267 = vand.u32 %v46, 4294901760
    %v1268 = vsub.f32 %v46, %v1267
    %v1269 = vand.u32 %v1268, 4294901760
    %v1270 = vsub.f32 %v1268, %v1269
    %v1271 = vand.u32 %v1270, 4294901760
    %1272 = vmatpush1.msra.mxu0 %v1271
    %1273 = vmatprep.subr.mxu0 0.0
    %v1274 = vand.u32 %v47, 4294901760
    %v1275 = vsub.f32 %v47, %v1274
    %v1276 = vand.u32 %v1275, 4294901760
    %v1277 = vsub.f32 %v1275, %v1276
    %v1278 = vand.u32 %v1277, 4294901760
    %1279 = vmatpush1.msra.mxu0 %v1278
    %1280 = vmatprep.subr.mxu0 0.0
    %v1281 = vand.u32 %v48, 4294901760
    %v1282 = vsub.f32 %v48, %v1281
    %v1283 = vand.u32 %v1282, 4294901760
    %v1284 = vsub.f32 %v1282, %v1283
    %v1285 = vand.u32 %v1284, 4294901760
    %1286 = vmatpush1.msra.mxu0 %v1285
    %1287 = vmatprep.subr.mxu0 0.0
    %1288 = vmatpush1.msra.mxu0 0.0
    %1289 = vmatprep.subr.mxu0 0.0
    %1290 = vmatpush1.msra.mxu0 0.0
    %1291 = vmatprep.subr.mxu0 0.0
    %1292 = vmatpush1.msra.mxu0 0.0
    %1293 = vmatprep.subr.mxu0 0.0
    %1294 = vmatpush1.msra.mxu0 0.0
    %1295 = vmatprep.subr.mxu0 0.0
    %1296 = vmatpush1.msra.mxu0 0.0
    %1297 = vmatprep.subr.mxu0 0.0
    %1298 = vmatpush1.msra.mxu0 0.0
    %1299 = vmatprep.subr.mxu0 0.0
    %1300 = vmatpush1.msra.mxu0 0.0
    %1301 = vmatprep.subr.mxu0 0.0
    %1302 = vmatpush1.msra.mxu0 0.0
    %1303 = vmatprep.subr.mxu0 0.0
    %1304 = vmatpush1.msra.mxu0 0.0
    %1305 = vmatprep.subr.mxu0 0.0
    %1306 = vmatpush1.msra.mxu0 0.0
    %1307 = vmatprep.subr.mxu0 0.0
    %1308 = vmatpush1.msra.mxu0 0.0
    %1309 = vmatprep.subr.mxu0 0.0
    %1310 = vmatpush1.msra.mxu0 0.0
    %1311 = vmatprep.subr.mxu0 0.0
    %1312 = vmatpush1.msra.mxu0 0.0
    %1313 = vmatprep.subr.mxu0 0.0
    %1314 = vmatpush1.msra.mxu0 0.0
    %1315 = vmatprep.subr.mxu0 0.0
    %1316 = vmatpush1.msra.mxu0 0.0
    %1317 = vmatprep.subr.mxu0 0.0
    %1318 = vmatpush1.msra.mxu0 0.0
    %1319 = vmatprep.subr.mxu0 0.0
    %1320 = vmatpush1.msra.mxu0 0.0
    %1321 = vmatprep.subr.mxu0 0.0
    %1322 = vmatpush1.msra.mxu0 0.0
    %1323 = vmatprep.subr.mxu0 0.0
    %1324 = vmatpush1.msra.mxu0 0.0
    %1325 = vmatprep.subr.mxu0 0.0
    %1326 = vmatpush1.msra.mxu0 0.0
    %1327 = vmatprep.subr.mxu0 0.0
    %1328 = vmatpush1.msra.mxu0 0.0
    %1329 = vmatprep.subr.mxu0 0.0
    %1330 = vmatpush1.msra.mxu0 0.0
    %1331 = vmatprep.subr.mxu0 0.0
    %1332 = vmatpush1.msra.mxu0 0.0
    %1333 = vmatprep.subr.mxu0 0.0
    %1334 = vmatpush1.msra.mxu0 0.0
    %1335 = vmatprep.subr.mxu0 0.0
    %1336 = vmatpush1.msra.mxu0 0.0
    %1337 = vmatprep.subr.mxu0 0.0
    %1338 = vmatpush1.msra.mxu0 0.0
    %1339 = vmatprep.subr.mxu0 0.0
    %1340 = vmatpush1.msra.mxu0 0.0
    %1341 = vmatprep.subr.mxu0 0.0
    %1342 = vmatpush1.msra.mxu0 0.0
    %1343 = vmatprep.mubr.f32.mxu0 0.0
    %v1344 = vand.u32 %v1178, 4294901760
    %1345 = vmatmul.mubr.f32.gmra.mrb[0].mxu0 %v1344
    %v1346 = vpop.f32.mrb[0].mxu0
    %v1347 = vadd.f32 %v1256, %v1346
    %v1348 = vpop.f32.mrb[0].mxu0
    %1349 = vdwg.mxu0
    %1350 = vmatprep.subr.mxu0 0.0
    %v1351 = vand.u32 %v45, 4294901760
    %v1352 = vsub.f32 %v45, %v1351
    %1353 = vmatpush1.msra.mxu0 %v1352
    %1354 = vmatprep.subr.mxu0 0.0
    %v1355 = vand.u32 %v46, 4294901760
    %v1356 = vsub.f32 %v46, %v1355
    %1357 = vmatpush1.msra.mxu0 %v1356
    %1358 = vmatprep.subr.mxu0 0.0
    %v1359 = vand.u32 %v47, 4294901760
    %v1360 = vsub.f32 %v47, %v1359
    %1361 = vmatpush1.msra.mxu0 %v1360
    %1362 = vmatprep.subr.mxu0 0.0
    %v1363 = vand.u32 %v48, 4294901760
    %v1364 = vsub.f32 %v48, %v1363
    %1365 = vmatpush1.msra.mxu0 %v1364
    %1366 = vmatprep.subr.mxu0 0.0
    %1367 = vmatpush1.msra.mxu0 0.0
    %1368 = vmatprep.subr.mxu0 0.0
    %1369 = vmatpush1.msra.mxu0 0.0
    %1370 = vmatprep.subr.mxu0 0.0
    %1371 = vmatpush1.msra.mxu0 0.0
    %1372 = vmatprep.subr.mxu0 0.0
    %1373 = vmatpush1.msra.mxu0 0.0
    %1374 = vmatprep.subr.mxu0 0.0
    %1375 = vmatpush1.msra.mxu0 0.0
    %1376 = vmatprep.subr.mxu0 0.0
    %1377 = vmatpush1.msra.mxu0 0.0
    %1378 = vmatprep.subr.mxu0 0.0
    %1379 = vmatpush1.msra.mxu0 0.0
    %1380 = vmatprep.subr.mxu0 0.0
    %1381 = vmatpush1.msra.mxu0 0.0
    %1382 = vmatprep.subr.mxu0 0.0
    %1383 = vmatpush1.msra.mxu0 0.0
    %1384 = vmatprep.subr.mxu0 0.0
    %1385 = vmatpush1.msra.mxu0 0.0
    %1386 = vmatprep.subr.mxu0 0.0
    %1387 = vmatpush1.msra.mxu0 0.0
    %1388 = vmatprep.subr.mxu0 0.0
    %1389 = vmatpush1.msra.mxu0 0.0
    %1390 = vmatprep.subr.mxu0 0.0
    %1391 = vmatpush1.msra.mxu0 0.0
    %1392 = vmatprep.subr.mxu0 0.0
    %1393 = vmatpush1.msra.mxu0 0.0
    %1394 = vmatprep.subr.mxu0 0.0
    %1395 = vmatpush1.msra.mxu0 0.0
    %1396 = vmatprep.subr.mxu0 0.0
    %1397 = vmatpush1.msra.mxu0 0.0
    %1398 = vmatprep.subr.mxu0 0.0
    %1399 = vmatpush1.msra.mxu0 0.0
    %1400 = vmatprep.subr.mxu0 0.0
    %1401 = vmatpush1.msra.mxu0 0.0
    %1402 = vmatprep.subr.mxu0 0.0
    %1403 = vmatpush1.msra.mxu0 0.0
    %1404 = vmatprep.subr.mxu0 0.0
    %1405 = vmatpush1.msra.mxu0 0.0
    %1406 = vmatprep.subr.mxu0 0.0
    %1407 = vmatpush1.msra.mxu0 0.0
    %1408 = vmatprep.subr.mxu0 0.0
    %1409 = vmatpush1.msra.mxu0 0.0
    %1410 = vmatprep.subr.mxu0 0.0
    %1411 = vmatpush1.msra.mxu0 0.0
    %1412 = vmatprep.subr.mxu0 0.0
    %1413 = vmatpush1.msra.mxu0 0.0
    %1414 = vmatprep.subr.mxu0 0.0
    %1415 = vmatpush1.msra.mxu0 0.0
    %1416 = vmatprep.subr.mxu0 0.0
    %1417 = vmatpush1.msra.mxu0 0.0
    %1418 = vmatprep.subr.mxu0 0.0
    %1419 = vmatpush1.msra.mxu0 0.0
    %1420 = vmatprep.subr.mxu0 0.0
    %1421 = vmatpush1.msra.mxu0 0.0
    %1422 = vmatprep.mubr.f32.mxu0 0.0
    %v1423 = vand.u32 %v1178, 4294901760
    %v1424 = vsub.f32 %v1178, %v1423
    %1425 = vmatmul.mubr.f32.gmra.mrb[0].mxu0 %v1424
    %v1426 = vpop.f32.mrb[0].mxu0
    %v1427 = vadd.f32 %v1347, %v1426
    %v1428 = vpop.f32.mrb[0].mxu0
    %1429 = vdwg.mxu0
    %1430 = vmatprep.subr.mxu0 0.0
    %v1431 = vand.u32 %v45, 4294901760
    %1432 = vmatpush1.msra.mxu0 %v1431
    %1433 = vmatprep.subr.mxu0 0.0
    %v1434 = vand.u32 %v46, 4294901760
    %1435 = vmatpush1.msra.mxu0 %v1434
    %1436 = vmatprep.subr.mxu0 0.0
    %v1437 = vand.u32 %v47, 4294901760
    %1438 = vmatpush1.msra.mxu0 %v1437
    %1439 = vmatprep.subr.mxu0 0.0
    %v1440 = vand.u32 %v48, 4294901760
    %1441 = vmatpush1.msra.mxu0 %v1440
    %1442 = vmatprep.subr.mxu0 0.0
    %1443 = vmatpush1.msra.mxu0 0.0
    %1444 = vmatprep.subr.mxu0 0.0
    %1445 = vmatpush1.msra.mxu0 0.0
    %1446 = vmatprep.subr.mxu0 0.0
    %1447 = vmatpush1.msra.mxu0 0.0
    %1448 = vmatprep.subr.mxu0 0.0
    %1449 = vmatpush1.msra.mxu0 0.0
    %1450 = vmatprep.subr.mxu0 0.0
    %1451 = vmatpush1.msra.mxu0 0.0
    %1452 = vmatprep.subr.mxu0 0.0
    %1453 = vmatpush1.msra.mxu0 0.0
    %1454 = vmatprep.subr.mxu0 0.0
    %1455 = vmatpush1.msra.mxu0 0.0
    %1456 = vmatprep.subr.mxu0 0.0
    %1457 = vmatpush1.msra.mxu0 0.0
    %1458 = vmatprep.subr.mxu0 0.0
    %1459 = vmatpush1.msra.mxu0 0.0
    %1460 = vmatprep.subr.mxu0 0.0
    %1461 = vmatpush1.msra.mxu0 0.0
    %1462 = vmatprep.subr.mxu0 0.0
    %1463 = vmatpush1.msra.mxu0 0.0
    %1464 = vmatprep.subr.mxu0 0.0
    %1465 = vmatpush1.msra.mxu0 0.0
    %1466 = vmatprep.subr.mxu0 0.0
    %1467 = vmatpush1.msra.mxu0 0.0
    %1468 = vmatprep.subr.mxu0 0.0
    %1469 = vmatpush1.msra.mxu0 0.0
    %1470 = vmatprep.subr.mxu0 0.0
    %1471 = vmatpush1.msra.mxu0 0.0
    %1472 = vmatprep.subr.mxu0 0.0
    %1473 = vmatpush1.msra.mxu0 0.0
    %1474 = vmatprep.subr.mxu0 0.0
    %1475 = vmatpush1.msra.mxu0 0.0
    %1476 = vmatprep.subr.mxu0 0.0
    %1477 = vmatpush1.msra.mxu0 0.0
    %1478 = vmatprep.subr.mxu0 0.0
    %1479 = vmatpush1.msra.mxu0 0.0
    %1480 = vmatprep.subr.mxu0 0.0
    %1481 = vmatpush1.msra.mxu0 0.0
    %1482 = vmatprep.subr.mxu0 0.0
    %1483 = vmatpush1.msra.mxu0 0.0
    %1484 = vmatprep.subr.mxu0 0.0
    %1485 = vmatpush1.msra.mxu0 0.0
    %1486 = vmatprep.subr.mxu0 0.0
    %1487 = vmatpush1.msra.mxu0 0.0
    %1488 = vmatprep.subr.mxu0 0.0
    %1489 = vmatpush1.msra.mxu0 0.0
    %1490 = vmatprep.subr.mxu0 0.0
    %1491 = vmatpush1.msra.mxu0 0.0
    %1492 = vmatprep.subr.mxu0 0.0
    %1493 = vmatpush1.msra.mxu0 0.0
    %1494 = vmatprep.subr.mxu0 0.0
    %1495 = vmatpush1.msra.mxu0 0.0
    %1496 = vmatprep.subr.mxu0 0.0
    %1497 = vmatpush1.msra.mxu0 0.0
    %1498 = vmatprep.mubr.f32.mxu0 0.0
    %v1499 = vand.u32 %v1178, 4294901760
    %v1500 = vsub.f32 %v1178, %v1499
    %v1501 = vand.u32 %v1500, 4294901760
    %1502 = vmatmul.mubr.f32.gmra.mrb[0].mxu0 %v1501
    %v1503 = vpop.f32.mrb[0].mxu0
    %v1504 = vadd.f32 %v1427, %v1503
    %v1505 = vpop.f32.mrb[0].mxu0
    %1506 = vdwg.mxu0
    %1507 = vmatprep.subr.mxu0 0.0
    %v1508 = vand.u32 %v45, 4294901760
    %v1509 = vsub.f32 %v45, %v1508
    %v1510 = vand.u32 %v1509, 4294901760
    %1511 = vmatpush1.msra.mxu0 %v1510
    %1512 = vmatprep.subr.mxu0 0.0
    %v1513 = vand.u32 %v46, 4294901760
    %v1514 = vsub.f32 %v46, %v1513
    %v1515 = vand.u32 %v1514, 4294901760
    %1516 = vmatpush1.msra.mxu0 %v1515
    %1517 = vmatprep.subr.mxu0 0.0
    %v1518 = vand.u32 %v47, 4294901760
    %v1519 = vsub.f32 %v47, %v1518
    %v1520 = vand.u32 %v1519, 4294901760
    %1521 = vmatpush1.msra.mxu0 %v1520
    %1522 = vmatprep.subr.mxu0 0.0
    %v1523 = vand.u32 %v48, 4294901760
    %v1524 = vsub.f32 %v48, %v1523
    %v1525 = vand.u32 %v1524, 4294901760
    %1526 = vmatpush1.msra.mxu0 %v1525
    %1527 = vmatprep.subr.mxu0 0.0
    %1528 = vmatpush1.msra.mxu0 0.0
    %1529 = vmatprep.subr.mxu0 0.0
    %1530 = vmatpush1.msra.mxu0 0.0
    %1531 = vmatprep.subr.mxu0 0.0
    %1532 = vmatpush1.msra.mxu0 0.0
    %1533 = vmatprep.subr.mxu0 0.0
    %1534 = vmatpush1.msra.mxu0 0.0
    %1535 = vmatprep.subr.mxu0 0.0
    %1536 = vmatpush1.msra.mxu0 0.0
    %1537 = vmatprep.subr.mxu0 0.0
    %1538 = vmatpush1.msra.mxu0 0.0
    %1539 = vmatprep.subr.mxu0 0.0
    %1540 = vmatpush1.msra.mxu0 0.0
    %1541 = vmatprep.subr.mxu0 0.0
    %1542 = vmatpush1.msra.mxu0 0.0
    %1543 = vmatprep.subr.mxu0 0.0
    %1544 = vmatpush1.msra.mxu0 0.0
    %1545 = vmatprep.subr.mxu0 0.0
    %1546 = vmatpush1.msra.mxu0 0.0
    %1547 = vmatprep.subr.mxu0 0.0
    %1548 = vmatpush1.msra.mxu0 0.0
    %1549 = vmatprep.subr.mxu0 0.0
    %1550 = vmatpush1.msra.mxu0 0.0
    %1551 = vmatprep.subr.mxu0 0.0
    %1552 = vmatpush1.msra.mxu0 0.0
    %1553 = vmatprep.subr.mxu0 0.0
    %1554 = vmatpush1.msra.mxu0 0.0
    %1555 = vmatprep.subr.mxu0 0.0
    %1556 = vmatpush1.msra.mxu0 0.0
    %1557 = vmatprep.subr.mxu0 0.0
    %1558 = vmatpush1.msra.mxu0 0.0
    %1559 = vmatprep.subr.mxu0 0.0
    %1560 = vmatpush1.msra.mxu0 0.0
    %1561 = vmatprep.subr.mxu0 0.0
    %1562 = vmatpush1.msra.mxu0 0.0
    %1563 = vmatprep.subr.mxu0 0.0
    %1564 = vmatpush1.msra.mxu0 0.0
    %1565 = vmatprep.subr.mxu0 0.0
    %1566 = vmatpush1.msra.mxu0 0.0
    %1567 = vmatprep.subr.mxu0 0.0
    %1568 = vmatpush1.msra.mxu0 0.0
    %1569 = vmatprep.subr.mxu0 0.0
    %1570 = vmatpush1.msra.mxu0 0.0
    %1571 = vmatprep.subr.mxu0 0.0
    %1572 = vmatpush1.msra.mxu0 0.0
    %1573 = vmatprep.subr.mxu0 0.0
    %1574 = vmatpush1.msra.mxu0 0.0
    %1575 = vmatprep.subr.mxu0 0.0
    %1576 = vmatpush1.msra.mxu0 0.0
    %1577 = vmatprep.subr.mxu0 0.0
    %1578 = vmatpush1.msra.mxu0 0.0
    %1579 = vmatprep.subr.mxu0 0.0
    %1580 = vmatpush1.msra.mxu0 0.0
    %1581 = vmatprep.subr.mxu0 0.0
    %1582 = vmatpush1.msra.mxu0 0.0
    %1583 = vmatprep.mubr.f32.mxu0 0.0
    %v1584 = vand.u32 %v1178, 4294901760
    %1585 = vmatmul.mubr.f32.gmra.mrb[0].mxu0 %v1584
    %v1586 = vpop.f32.mrb[0].mxu0
    %v1587 = vadd.f32 %v1504, %v1586
    %v1588 = vpop.f32.mrb[0].mxu0
    %1589 = vdwg.mxu0
    %1590 = vmatprep.subr.mxu0 0.0
    %v1591 = vand.u32 %v45, 4294901760
    %1592 = vmatpush1.msra.mxu0 %v1591
    %1593 = vmatprep.subr.mxu0 0.0
    %v1594 = vand.u32 %v46, 4294901760
    %1595 = vmatpush1.msra.mxu0 %v1594
    %1596 = vmatprep.subr.mxu0 0.0
    %v1597 = vand.u32 %v47, 4294901760
    %1598 = vmatpush1.msra.mxu0 %v1597
    %1599 = vmatprep.subr.mxu0 0.0
    %v1600 = vand.u32 %v48, 4294901760
    %1601 = vmatpush1.msra.mxu0 %v1600
    %1602 = vmatprep.subr.mxu0 0.0
    %1603 = vmatpush1.msra.mxu0 0.0
    %1604 = vmatprep.subr.mxu0 0.0
    %1605 = vmatpush1.msra.mxu0 0.0
    %1606 = vmatprep.subr.mxu0 0.0
    %1607 = vmatpush1.msra.mxu0 0.0
    %1608 = vmatprep.subr.mxu0 0.0
    %1609 = vmatpush1.msra.mxu0 0.0
    %1610 = vmatprep.subr.mxu0 0.0
    %1611 = vmatpush1.msra.mxu0 0.0
    %1612 = vmatprep.subr.mxu0 0.0
    %1613 = vmatpush1.msra.mxu0 0.0
    %1614 = vmatprep.subr.mxu0 0.0
    %1615 = vmatpush1.msra.mxu0 0.0
    %1616 = vmatprep.subr.mxu0 0.0
    %1617 = vmatpush1.msra.mxu0 0.0
    %1618 = vmatprep.subr.mxu0 0.0
    %1619 = vmatpush1.msra.mxu0 0.0
    %1620 = vmatprep.subr.mxu0 0.0
    %1621 = vmatpush1.msra.mxu0 0.0
    %1622 = vmatprep.subr.mxu0 0.0
    %1623 = vmatpush1.msra.mxu0 0.0
    %1624 = vmatprep.subr.mxu0 0.0
    %1625 = vmatpush1.msra.mxu0 0.0
    %1626 = vmatprep.subr.mxu0 0.0
    %1627 = vmatpush1.msra.mxu0 0.0
    %1628 = vmatprep.subr.mxu0 0.0
    %1629 = vmatpush1.msra.mxu0 0.0
    %1630 = vmatprep.subr.mxu0 0.0
    %1631 = vmatpush1.msra.mxu0 0.0
    %1632 = vmatprep.subr.mxu0 0.0
    %1633 = vmatpush1.msra.mxu0 0.0
    %1634 = vmatprep.subr.mxu0 0.0
    %1635 = vmatpush1.msra.mxu0 0.0
    %1636 = vmatprep.subr.mxu0 0.0
    %1637 = vmatpush1.msra.mxu0 0.0
    %1638 = vmatprep.subr.mxu0 0.0
    %1639 = vmatpush1.msra.mxu0 0.0
    %1640 = vmatprep.subr.mxu0 0.0
    %1641 = vmatpush1.msra.mxu0 0.0
    %1642 = vmatprep.subr.mxu0 0.0
    %1643 = vmatpush1.msra.mxu0 0.0
    %1644 = vmatprep.subr.mxu0 0.0
    %1645 = vmatpush1.msra.mxu0 0.0
    %1646 = vmatprep.subr.mxu0 0.0
    %1647 = vmatpush1.msra.mxu0 0.0
    %1648 = vmatprep.subr.mxu0 0.0
    %1649 = vmatpush1.msra.mxu0 0.0
    %1650 = vmatprep.subr.mxu0 0.0
    %1651 = vmatpush1.msra.mxu0 0.0
    %1652 = vmatprep.subr.mxu0 0.0
    %1653 = vmatpush1.msra.mxu0 0.0
    %1654 = vmatprep.subr.mxu0 0.0
    %1655 = vmatpush1.msra.mxu0 0.0
    %1656 = vmatprep.subr.mxu0 0.0
    %1657 = vmatpush1.msra.mxu0 0.0
    %1658 = vmatprep.mubr.f32.mxu0 0.0
    %v1659 = vand.u32 %v1178, 4294901760
    %1660 = vmatmul.mubr.f32.gmra.mrb[0].mxu0 %v1659
    %v1661 = vpop.f32.mrb[0].mxu0
    %v1662 = vadd.f32 %v1587, %v1661
    %v1663 = vpop.f32.mrb[0].mxu0
    %1664 = vdwg.mxu0
    %v1665 = vmul.f32 %v1662, %v1662
    %v1666 = vsel %vm67, %v1665, 0.0
    %1667 = vadd.xlane.f32.xlu0 %v1666
    %v1668 = vpop.xlane.xlu0 %1667
    %v1669 = vrsqrt.pop %v1668
    %v1670 = vmul.f32 %v1668, %v1669
    %vm1671 = vcmp.eq.f32.partialorder %v1668, inf
    %v1672 = vsel %vm1671, %v1668, %v1670
    %vm1673 = vcmp.eq.f32.partialorder %v1668, 0.0
    %v1674 = vand.u32 %v1668, 2147483648
    %v1675 = vsel %vm1673, %v1674, %v1672
    %v1676 = vmax.f32 %v1675, 1e-15
    %v1677 = vmax.f32 %v1676, -85.0
    %v1678 = vmin.f32 %v1677, 85.0
    %v1679 = vmul.f32 %v1678, 1.442695
    %v1680 = vpow.pop %v1679
    %v1681 = vrcp.pop %v1680
    %v1682 = vmul.f32 1.0, %v1681
    %v1683 = vsub.f32 %v1680, %v1682
    %v1684 = vmul.f32 %v1683, 0.5
    %v1685 = vmul.f32 %v1684, %v1662
    %v1686 = vrcp.pop %v1676
    %v1687 = vmul.f32 %v1685, %v1686
    %v1688 = vmul.f32 %v1687, %v1687
    %v1689 = vsel %vm67, %v1688, 0.0
    %1690 = vadd.xlane.f32.xlu0 %v1689
    %v1691 = vpop.xlane.xlu0 %1690
    %v1692 = vadd.f32 %v1691, 1.0
    %v1693 = vmax.f32 %v1692, 1e-07
    %v1694 = vrsqrt.pop %v1693
    %v1695 = vmul.f32 %v1693, %v1694
    %vm1696 = vcmp.eq.f32.partialorder %v1693, inf
    %v1697 = vsel %vm1696, %v1693, %v1695
    %vm1698 = vcmp.eq.f32.partialorder %v1693, 0.0
    %v1699 = vand.u32 %v1693, 2147483648
    %v1700 = vsel %vm1698, %v1699, %v1697
    %vm1701 = vcmask 254977
    %v1702 = vsel %vm1701, %v626, 0.0
    %1703 = vadd.xlane.f32.xlu0 %v1702
    %v1704 = vpop.xlane.xlu0 %1703
    %v1705 = vrsqrt.pop %v1704
    %v1706 = vmul.f32 %v1704, %v1705
    %vm1707 = vcmp.eq.f32.partialorder %v1704, inf
    %v1708 = vsel %vm1707, %v1704, %v1706
    %vm1709 = vcmp.eq.f32.partialorder %v1704, 0.0
    %v1710 = vand.u32 %v1704, 2147483648
    %v1711 = vsel %vm1709, %v1710, %v1708
    %v1712 = vmax.f32 %v1711, 1e-15
    %v1713 = vrcp.pop %v1712
    %v1714 = vmul.f32 %v658, %v1713
    %v1715 = vrsqrt.pop %v1691
    %v1716 = vmul.f32 %v1691, %v1715
    %vm1717 = vcmp.eq.f32.partialorder %v1691, inf
    %v1718 = vsel %vm1717, %v1691, %v1716
    %vm1719 = vcmp.eq.f32.partialorder %v1691, 0.0
    %v1720 = vand.u32 %v1691, 2147483648
    %v1721 = vsel %vm1719, %v1720, %v1718
    %v1722 = vmax.f32 %v1721, 1e-15
    %v1723 = vrcp.pop %v1722
    %v1724 = vmul.f32 %v1687, %v1723
    %v1725 = vlaneseq
    %v1726 = vshrl.u32 %v1725, 7
    %v1727 = vsub.s32 1, %v1726
    %v1728 = vrot.slane %v1714, %v1727
    %v1729 = vmul.f32 %v1724, %v1728
    %v1730 = vsel %vm67, %v1729, 0.0
    %1731 = vadd.xlane.f32.xlu0 %v1730
    %v1732 = vpop.xlane.xlu0 %1731
    %v1733 = vsub.f32 1.0, %v1700
    %v1734 = vmul.f32 %v1732, %v1733
    %v1735 = vmul.f32 %v1734, %v1724
    %v1736 = vsub.f32 %v1728, %v1735
    %v1737 = vmul.f32 %v1687, %v1736
    %v1738 = vsel %vm67, %v1737, 0.0
    %1739 = vadd.xlane.f32.xlu0 %v1738
    %v1740 = vpop.xlane.xlu0 %1739
    %v1741 = vmax.f32 %v1700, 1e-07
    %v1742 = vrcp.pop %v1741
    %v1743 = vmul.f32 %v1740, %v1742
    %v1744 = vmul.f32 %v1736, %v1736
    %v1745 = vsel %vm67, %v1744, 0.0
    %1746 = vadd.xlane.f32.xlu0 %v1745
    %v1747 = vpop.xlane.xlu0 %1746
    %v1748 = vmul.f32 %v1743, %v1743
    %v1749 = vsub.f32 %v1747, %v1748
    %v1750 = vmax.f32 %v1749, 1e-07
    %v1751 = vrsqrt.pop %v1750
    %v1752 = vmul.f32 %v1750, %v1751
    %vm1753 = vcmp.eq.f32.partialorder %v1750, inf
    %v1754 = vsel %vm1753, %v1750, %v1752
    %vm1755 = vcmp.eq.f32.partialorder %v1750, 0.0
    %v1756 = vand.u32 %v1750, 2147483648
    %v1757 = vsel %vm1755, %v1756, %v1754
    %v1758 = vmin.f32 %v1757, 1000000.0
    %v1759 = vmax.f32 %v1758, 1e-15
    %v1760 = vmax.f32 %v1759, -85.0
    %v1761 = vmin.f32 %v1760, 85.0
    %v1762 = vmul.f32 %v1761, 1.442695
    %v1763 = vpow.pop %v1762
    %v1764 = vrcp.pop %v1763
    %v1765 = vmul.f32 1.0, %v1764
    %v1766 = vadd.f32 %v1763, %v1765
    %v1767 = vmul.f32 %v1766, 0.5
    %v1768 = vsub.f32 %v1763, %v1765
    %v1769 = vmul.f32 %v1768, 0.5
    %v1770 = vmul.f32 %v1767, %v1687
    %v1771 = vrcp.pop %v1759
    %v1772 = vmul.f32 %v1769, %v1771
    %v1773 = vmul.f32 %v1772, %v1736
    %v1774 = vadd.f32 %v1770, %v1773
    %v1775 = vmul.f32 %v1774, %v1774
    %v1776 = vsel %vm67, %v1775, 0.0
    %1777 = vadd.xlane.f32.xlu0 %v1776
    %v1778 = vpop.xlane.xlu0 %1777
    %v1779 = vadd.f32 %v1778, 1.0
    %v1780 = vmax.f32 %v1779, 1e-07
    %v1781 = vrsqrt.pop %v1780
    %v1782 = vmul.f32 %v1780, %v1781
    %vm1783 = vcmp.eq.f32.partialorder %v1780, inf
    %v1784 = vsel %vm1783, %v1780, %v1782
    %vm1785 = vcmp.eq.f32.partialorder %v1780, 0.0
    %v1786 = vand.u32 %v1780, 2147483648
    %v1787 = vsel %vm1785, %v1786, %v1784
    %v1788 = vsel %vm1701, %v734, 0.0
    %1789 = vadd.xlane.f32.xlu0 %v1788
    %v1790 = vpop.xlane.xlu0 %1789
    %v1791 = vrsqrt.pop %v1790
    %v1792 = vmul.f32 %v1790, %v1791
    %vm1793 = vcmp.eq.f32.partialorder %v1790, inf
    %v1794 = vsel %vm1793, %v1790, %v1792
    %vm1795 = vcmp.eq.f32.partialorder %v1790, 0.0
    %v1796 = vand.u32 %v1790, 2147483648
    %v1797 = vsel %vm1795, %v1796, %v1794
    %v1798 = vmax.f32 %v1797, 1e-15
    %v1799 = vrcp.pop %v1798
    %v1800 = vmul.f32 %v765, %v1799
    %v1801 = vrsqrt.pop %v1778
    %v1802 = vmul.f32 %v1778, %v1801
    %vm1803 = vcmp.eq.f32.partialorder %v1778, inf
    %v1804 = vsel %vm1803, %v1778, %v1802
    %vm1805 = vcmp.eq.f32.partialorder %v1778, 0.0
    %v1806 = vand.u32 %v1778, 2147483648
    %v1807 = vsel %vm1805, %v1806, %v1804
    %v1808 = vmax.f32 %v1807, 1e-15
    %v1809 = vrcp.pop %v1808
    %v1810 = vmul.f32 %v1774, %v1809
    %v1811 = vlaneseq
    %v1812 = vshrl.u32 %v1811, 7
    %v1813 = vsub.s32 1, %v1812
    %v1814 = vrot.slane %v1800, %v1813
    %v1815 = vmul.f32 %v1810, %v1814
    %v1816 = vsel %vm67, %v1815, 0.0
    %1817 = vadd.xlane.f32.xlu0 %v1816
    %v1818 = vpop.xlane.xlu0 %1817
    %v1819 = vsub.f32 1.0, %v1787
    %v1820 = vmul.f32 %v1818, %v1819
    %v1821 = vmul.f32 %v1820, %v1810
    %v1822 = vsub.f32 %v1814, %v1821
    %v1823 = vmul.f32 %v1774, %v1822
    %v1824 = vsel %vm67, %v1823, 0.0
    %1825 = vadd.xlane.f32.xlu0 %v1824
    %v1826 = vpop.xlane.xlu0 %1825
    %v1827 = vmax.f32 %v1787, 1e-07
    %v1828 = vrcp.pop %v1827
    %v1829 = vmul.f32 %v1826, %v1828
    %v1830 = vmul.f32 %v1822, %v1822
    %v1831 = vsel %vm67, %v1830, 0.0
    %1832 = vadd.xlane.f32.xlu0 %v1831
    %v1833 = vpop.xlane.xlu0 %1832
    %v1834 = vmul.f32 %v1829, %v1829
    %v1835 = vsub.f32 %v1833, %v1834
    %v1836 = vmax.f32 %v1835, 1e-07
    %v1837 = vrsqrt.pop %v1836
    %v1838 = vmul.f32 %v1836, %v1837
    %vm1839 = vcmp.eq.f32.partialorder %v1836, inf
    %v1840 = vsel %vm1839, %v1836, %v1838
    %vm1841 = vcmp.eq.f32.partialorder %v1836, 0.0
    %v1842 = vand.u32 %v1836, 2147483648
    %v1843 = vsel %vm1841, %v1842, %v1840
    %v1844 = vmin.f32 %v1843, 1000000.0
    %v1845 = vmax.f32 %v1844, 1e-15
    %v1846 = vmax.f32 %v1845, -85.0
    %v1847 = vmin.f32 %v1846, 85.0
    %v1848 = vmul.f32 %v1847, 1.442695
    %v1849 = vpow.pop %v1848
    %v1850 = vrcp.pop %v1849
    %v1851 = vmul.f32 1.0, %v1850
    %v1852 = vadd.f32 %v1849, %v1851
    %v1853 = vmul.f32 %v1852, 0.5
    %v1854 = vsub.f32 %v1849, %v1851
    %v1855 = vmul.f32 %v1854, 0.5
    %v1856 = vmul.f32 %v1853, %v1774
    %v1857 = vrcp.pop %v1845
    %v1858 = vmul.f32 %v1855, %v1857
    %v1859 = vmul.f32 %v1858, %v1822
    %v1860 = vadd.f32 %v1856, %v1859
    %v1861 = vmul.f32 %v1860, %v1860
    %v1862 = vsel %vm67, %v1861, 0.0
    %1863 = vadd.xlane.f32.xlu0 %v1862
    %v1864 = vpop.xlane.xlu0 %1863
    %v1865 = vadd.f32 %v1864, 1.0
    %v1866 = vmax.f32 %v1865, 1e-07
    %v1867 = vrsqrt.pop %v1866
    %v1868 = vmul.f32 %v1866, %v1867
    %vm1869 = vcmp.eq.f32.partialorder %v1866, inf
    %v1870 = vsel %vm1869, %v1866, %v1868
    %vm1871 = vcmp.eq.f32.partialorder %v1866, 0.0
    %v1872 = vand.u32 %v1866, 2147483648
    %v1873 = vsel %vm1871, %v1872, %v1870
    %v1874 = vsub.f32 0.0, %v60
    %v1875 = vmul.f32 %v1874, %v1874
    %v1876 = vsel %vm67, %v1875, 0.0
    %1877 = vadd.xlane.f32.xlu0 %v1876
    %v1878 = vpop.xlane.xlu0 %1877
    %v1879 = vadd.f32 %v1878, 1.0
    %v1880 = vmax.f32 %v1879, 1e-07
    %v1881 = vrsqrt.pop %v1880
    %v1882 = vmul.f32 %v1880, %v1881
    %vm1883 = vcmp.eq.f32.partialorder %v1880, inf
    %v1884 = vsel %vm1883, %v1880, %v1882
    %vm1885 = vcmp.eq.f32.partialorder %v1880, 0.0
    %v1886 = vand.u32 %v1880, 2147483648
    %v1887 = vsel %vm1885, %v1886, %v1884
    %v1888 = vrsqrt.pop %v1864
    %v1889 = vmul.f32 %v1864, %v1888
    %vm1890 = vcmp.eq.f32.partialorder %v1864, inf
    %v1891 = vsel %vm1890, %v1864, %v1889
    %vm1892 = vcmp.eq.f32.partialorder %v1864, 0.0
    %v1893 = vand.u32 %v1864, 2147483648
    %v1894 = vsel %vm1892, %v1893, %v1891
    %v1895 = vmax.f32 %v1894, 1e-15
    %v1896 = vmax.f32 %v1873, 1.0000001
    %v1897 = vmax.f32 %v1896, 1.0000001
    %v1898 = vmul.f32 %v1897, %v1897
    %v1899 = vsub.f32 %v1898, 1.0
    %v1900 = vrsqrt.pop %v1899
    %v1901 = vmul.f32 %v1899, %v1900
    %vm1902 = vcmp.eq.f32.partialorder %v1899, inf
    %v1903 = vsel %vm1902, %v1899, %v1901
    %vm1904 = vcmp.eq.f32.partialorder %v1899, 0.0
    %v1905 = vand.u32 %v1899, 2147483648
    %v1906 = vsel %vm1904, %v1905, %v1903
    %v1907 = vadd.f32 %v1897, %v1906
    %v1908 = vlog2.pop %v1907
    %v1909 = vmul.f32 %v1908, 0.6931472
    %v1910 = vmul.f32 %v1909, %v1860
    %v1911 = vrcp.pop %v1895
    %v1912 = vmul.f32 %v1910, %v1911
    %v1913 = vrsqrt.pop %v1878
    %v1914 = vmul.f32 %v1878, %v1913
    %vm1915 = vcmp.eq.f32.partialorder %v1878, inf
    %v1916 = vsel %vm1915, %v1878, %v1914
    %vm1917 = vcmp.eq.f32.partialorder %v1878, 0.0
    %v1918 = vand.u32 %v1878, 2147483648
    %v1919 = vsel %vm1917, %v1918, %v1916
    %v1920 = vmax.f32 %v1919, 1e-15
    %v1921 = vrcp.pop %v1920
    %v1922 = vmul.f32 %v1874, %v1921
    %v1923 = vmul.f32 %v1922, %v1912
    %v1924 = vsel %vm67, %v1923, 0.0
    %1925 = vadd.xlane.f32.xlu0 %v1924
    %v1926 = vpop.xlane.xlu0 %1925
    %v1927 = vsub.f32 1.0, %v1887
    %v1928 = vmul.f32 %v1926, %v1927
    %v1929 = vmul.f32 %v1928, %v1922
    %v1930 = vsub.f32 %v1912, %v1929
    %v1931 = vmul.f32 %v1874, %v1930
    %v1932 = vsel %vm67, %v1931, 0.0
    %1933 = vadd.xlane.f32.xlu0 %v1932
    %v1934 = vpop.xlane.xlu0 %1933
    %v1935 = vmax.f32 %v1887, 1e-07
    %v1936 = vrcp.pop %v1935
    %v1937 = vmul.f32 %v1934, %v1936
    %v1938 = vmul.f32 %v1930, %v1930
    %v1939 = vsel %vm67, %v1938, 0.0
    %1940 = vadd.xlane.f32.xlu0 %v1939
    %v1941 = vpop.xlane.xlu0 %1940
    %v1942 = vmul.f32 %v1937, %v1937
    %v1943 = vsub.f32 %v1941, %v1942
    %v1944 = vmax.f32 %v1943, 1e-07
    %v1945 = vrsqrt.pop %v1944
    %v1946 = vmul.f32 %v1944, %v1945
    %vm1947 = vcmp.eq.f32.partialorder %v1944, inf
    %v1948 = vsel %vm1947, %v1944, %v1946
    %vm1949 = vcmp.eq.f32.partialorder %v1944, 0.0
    %v1950 = vand.u32 %v1944, 2147483648
    %v1951 = vsel %vm1949, %v1950, %v1948
    %v1952 = vmin.f32 %v1951, 1000000.0
    %v1953 = vmax.f32 %v1952, 1e-15
    %v1954 = vmax.f32 %v1953, -85.0
    %v1955 = vmin.f32 %v1954, 85.0
    %v1956 = vmul.f32 %v1955, 1.442695
    %v1957 = vpow.pop %v1956
    %v1958 = vrcp.pop %v1957
    %v1959 = vmul.f32 1.0, %v1958
    %v1960 = vadd.f32 %v1957, %v1959
    %v1961 = vmul.f32 %v1960, 0.5
    %v1962 = vsub.f32 %v1957, %v1959
    %v1963 = vmul.f32 %v1962, 0.5
    %v1964 = vmul.f32 %v1961, %v1874
    %v1965 = vrcp.pop %v1953
    %v1966 = vmul.f32 %v1963, %v1965
    %v1967 = vmul.f32 %v1966, %v1930
    %v1968 = vadd.f32 %v1964, %v1967
    %v1969 = vmul.f32 %v1968, %v1968
    %v1970 = vsel %vm67, %v1969, 0.0
    %1971 = vadd.xlane.f32.xlu0 %v1970
    %v1972 = vpop.xlane.xlu0 %1971
    %v1973 = vadd.f32 %v1972, 1.0
    %v1974 = vmax.f32 %v1973, 1e-07
    %v1975 = vrsqrt.pop %v1974
    %v1976 = vmul.f32 %v1974, %v1975
    %vm1977 = vcmp.eq.f32.partialorder %v1974, inf
    %v1978 = vsel %vm1977, %v1974, %v1976
    %vm1979 = vcmp.eq.f32.partialorder %v1974, 0.0
    %v1980 = vand.u32 %v1974, 2147483648
    %v1981 = vsel %vm1979, %v1980, %v1978
    %v1982 = vrsqrt.pop %v1972
    %v1983 = vmul.f32 %v1972, %v1982
    %vm1984 = vcmp.eq.f32.partialorder %v1972, inf
    %v1985 = vsel %vm1984, %v1972, %v1983
    %vm1986 = vcmp.eq.f32.partialorder %v1972, 0.0
    %v1987 = vand.u32 %v1972, 2147483648
    %v1988 = vsel %vm1986, %v1987, %v1985
    %v1989 = vmax.f32 %v1988, 1e-15
    %v1990 = vmax.f32 %v1981, 1.0000001
    %v1991 = vmax.f32 %v1990, 1.0000001
    %v1992 = vmul.f32 %v1991, %v1991
    %v1993 = vsub.f32 %v1992, 1.0
    %v1994 = vrsqrt.pop %v1993
    %v1995 = vmul.f32 %v1993, %v1994
    %vm1996 = vcmp.eq.f32.partialorder %v1993, inf
    %v1997 = vsel %vm1996, %v1993, %v1995
    %vm1998 = vcmp.eq.f32.partialorder %v1993, 0.0
    %v1999 = vand.u32 %v1993, 2147483648
    %v2000 = vsel %vm1998, %v1999, %v1997
    %v2001 = vadd.f32 %v1991, %v2000
    %v2002 = vlog2.pop %v2001
    %v2003 = vmul.f32 %v2002, 0.6931472
    %v2004 = vmul.f32 %v2003, %v1968
    %v2005 = vrcp.pop %v1989
    %v2006 = vmul.f32 %v2004, %v2005
    %v2007 = vmul.f32 %v869, %v2006
    %v2008 = vmul.f32 %v60, %v99
    %v2009 = vmul.f32 %v2008, %v2007
    %v2010 = vsel %vm67, %v2009, 0.0
    %2011 = vadd.xlane.f32.xlu0 %v2010
    %v2012 = vpop.xlane.xlu0 %2011
    %v2013 = vsub.f32 1.0, %v59
    %v2014 = vmul.f32 %v2012, %v2013
    %2016 = vset.pattern.permute.xlu0 0
    %2017 = vperm.xlu0 %2016, %v2014
    %v2018 = vpop.permute.xlu0 %2017
    %v2020 = vmul.f32 %v2018, %v2008
    %v2021 = vsub.f32 %v2007, %v2020
    %v2022 = vmul.f32 %v60, %v2021
    %v2023 = vsel %vm67, %v2022, 0.0
    %2024 = vadd.xlane.f32.xlu0 %v2023
    %v2025 = vpop.xlane.xlu0 %2024
    %v2026 = vmax.f32 %v59, 1e-07
    %v2027 = vrcp.pop %v2026
    %v2028 = vmul.f32 %v2025, %v2027
    %v2029 = vmul.f32 %v2021, %v2021
    %v2030 = vsel %vm67, %v2029, 0.0
    %2031 = vadd.xlane.f32.xlu0 %v2030
    %v2032 = vpop.xlane.xlu0 %2031
    %v2033 = vmul.f32 %v2028, %v2028
    %v2034 = vsub.f32 %v2032, %v2033
    %v2035 = vmax.f32 %v2034, 1e-07
    %v2036 = vrsqrt.pop %v2035
    %v2037 = vmul.f32 %v2035, %v2036
    %vm2038 = vcmp.eq.f32.partialorder %v2035, inf
    %v2039 = vsel %vm2038, %v2035, %v2037
    %vm2040 = vcmp.eq.f32.partialorder %v2035, 0.0
    %v2041 = vand.u32 %v2035, 2147483648
    %v2042 = vsel %vm2040, %v2041, %v2039
    %v2043 = vmin.f32 %v2042, 1000000.0
    %v2044 = vmax.f32 %v2043, 1e-15
    %v2045 = vmax.f32 %v2044, -85.0
    %v2046 = vmin.f32 %v2045, 85.0
    %v2047 = vmul.f32 %v2046, 1.442695
    %v2048 = vpow.pop %v2047
    %v2049 = vrcp.pop %v2048
    %v2050 = vmul.f32 1.0, %v2049
    %v2051 = vadd.f32 %v2048, %v2050
    %v2052 = vmul.f32 %v2051, 0.5
    %v2053 = vsub.f32 %v2048, %v2050
    %v2054 = vmul.f32 %v2053, 0.5
    %2056 = vset.pattern.permute.xlu0 0
    %2057 = vperm.xlu0 %2056, %v2052
    %v2058 = vpop.permute.xlu0 %2057
    %v2060 = vmul.f32 %v2058, %v60
    %v2061 = vrcp.pop %v2044
    %v2062 = vmul.f32 %v2054, %v2061
    %2064 = vset.pattern.permute.xlu0 0
    %2065 = vperm.xlu0 %2064, %v2062
    %v2066 = vpop.permute.xlu0 %2065
    %v2068 = vmul.f32 %v2066, %v2021
    %v2069 = vadd.f32 %v2060, %v2068
    %v2070 = vmul.f32 %v2069, %v2069
    %v2071 = vsel %vm67, %v2070, 0.0
    %2072 = vadd.xlane.f32.xlu0 %v2071
    %v2073 = vpop.xlane.xlu0 %2072
    %v2074 = vadd.f32 %v2073, 1.0
    %v2075 = vmax.f32 %v2074, 1e-07
    %v2076 = vrsqrt.pop %v2075
    %v2077 = vmul.f32 %v2075, %v2076
    %vm2078 = vcmp.eq.f32.partialorder %v2075, inf
    %v2079 = vsel %vm2078, %v2075, %v2077
    %vm2080 = vcmp.eq.f32.partialorder %v2075, 0.0
    %v2081 = vand.u32 %v2075, 2147483648
    %v2082 = vsel %vm2080, %v2081, %v2079
    %s2083 = smul.u32 %s54, 2
    %s2084 = scalar_lea.vmem %s8, %s2083
    %vm2085 = vcmask 1024
    %2086 = vst.msk [vmem:[%s2084] sm:$0x3] %vm2085, %v2082
    %s2087 = scalar_lea.vmem %s9, %s2083
    %2088 = vst.msk [vmem:[%s2087] sm:$0x3] %vm67, %v2069
  $region42: #{_lambda_.1} parent=0 // loop_footer
    %s58 = sadd.s32 1, %s54
  $region43: #{_lambda_.1} parent=0 // loop_footer_branch
    %53 = sbr.rel target = $region39
  $region44: #{_lambda_.1} parent=0 // loop_exit
    _
  %vm2089 = vcmask 1024
  %2090 = vst.msk [vmem:[#allocation2] sm:$0x3] %vm2089, %v59
  %vm2091 = vcmask 254976
  %2092 = vst.msk [vmem:[#allocation3] sm:$0x3] %vm2091, %v60
  // Predicated region
  $region45: #{_lambda_.1} parent=0 // pred_check
    _
  $region46: #{_lambda_.1} parent=0 // pred_check_branch
    %2094 = sbr.rel (0) target = $region48
  $region47: #{_lambda_.1} parent=0 // pred_region
    _
  $region48: #{_lambda_.1} parent=0 // pred_fallthru
    _
  // Predicated region
  $region49: #{_lambda_.1} parent=0 // pred_check
    _
  $region50: #{_lambda_.1} parent=0 // pred_check_branch
    %2096 = sbr.rel (0) target = $region52
  $region51: #{_lambda_.1} parent=0 // pred_region
    _
  $region52: #{_lambda_.1} parent=0 // pred_fallthru
    _
  // Predicated region
  $region53: #{_lambda_.1} parent=0 // pred_check
    _
  $region54: #{_lambda_.1} parent=0 // pred_check_branch
    %2098 = sbr.rel (0) target = $region56
  $region55: #{_lambda_.1} parent=0 // pred_region
    _
  $region56: #{_lambda_.1} parent=0 // pred_fallthru
    _
  // Predicated region
  $region57: #{_lambda_.1} parent=0 // pred_check
    _
  $region58: #{_lambda_.1} parent=0 // pred_check_branch
    %2100 = sbr.rel (0) target = $region60
  $region59: #{_lambda_.1} parent=0 // pred_region
    _
  $region60: #{_lambda_.1} parent=0 // pred_fallthru
    _

</llo_original>
